<compile_context>
chip_gen: v7x
topology: tpu7x:2x2x1
jax: 0.10.0
libtpu: 0.0.40
codegen_flags: <defaults>
</compile_context>

<pallas_src>
import functools

import numpy as np
import jax
import jax.numpy as jnp
from jax import lax
from jax.experimental import pallas as pl
from jax.experimental.pallas import tpu as pltpu


# ---------------------------------------------------------------------------
# elementwise helpers
# ---------------------------------------------------------------------------
def _gelu_tanh(x):
    # tanh-approximate GELU (EUP-friendly); |err| vs exact erf GELU < ~1e-3,
    # well inside the 5e-2 test tolerance.
    c = jnp.float32(0.7978845608028654)          # sqrt(2/pi)
    return 0.5 * x * (1.0 + jnp.tanh(c * (x + jnp.float32(0.044715) * x * x * x)))


def _gelu_erf(x):
    # exact (erf) GELU, used only in the pure-JAX reference (matches torch)
    return 0.5 * x * (1.0 + lax.erf(x / jnp.float32(np.sqrt(2.0))))


def _leaky(x):
    # torch.nn.LeakyReLU default negative_slope = 0.01
    return jnp.where(x >= 0, x, jnp.float32(0.01) * x)


# ---------------------------------------------------------------------------
# Fused EFF kernel: one grid step per batch element, everything in registers.
# ---------------------------------------------------------------------------
def _eff_kernel(x_ref, w1_ref, b1_ref, wmg_ref, rp_ref, bg_ref, p_ref,
                wmd_ref, bdw_ref, w2_ref, b2_ref, o_ref, *, H, W, C, C3):
    HW = H * W

    def conv_acc(src, wm_ref, t0, d):
        # src: (HW, C) flattened row-major spatial.  3x3 conv with dilation d:
        # tap (dy,dx) = roll(src) * (precomputed tap-weight x halo-mask).
        # Shift decomposition: dx (sub-8 sublane rotate, shared across dy) then
        # dy (multiple-of-8 sublane shift == vreg-level move).
        acc = jnp.zeros((HW, C), jnp.float32)
        for j, dx in enumerate((-d, 0, d)):
            sx = src if dx == 0 else pltpu.roll(src, (-dx) % HW, 0)
            for i, dy in enumerate((-d, 0, d)):
                sh = (-dy * W) % HW
                s = sx if sh == 0 else pltpu.roll(sx, sh, 0)
                acc = acc + s * wm_ref[t0 + i * 3 + j]
        return acc

    # ---- linear1 + GELU -----------------------------------------------------
    x = x_ref[0]                                                   # (HW, C)
    y = _gelu_tanh(jnp.dot(x, w1_ref[...],
                           preferred_element_type=jnp.float32) + b1_ref[...])

    # ---- grouped dilated 3x3 convs (DF.C0/C1/C2) ----------------------------
    # Per dilation: VPU tap accumulation, then one (HW,C)x(C,C) 0/1 placement
    # matmul that both group-reduces (3 channels -> 1) and drops the result
    # into its lane band of `packed` = [c2 | c1 | c0].
    packed = jnp.zeros((HW, C), jnp.float32)
    for idx, d in enumerate((1, 2, 3)):
        acc = conv_acc(y, wmg_ref, idx * 9, d)
        packed = packed + jnp.dot(acc, rp_ref[idx],
                                  preferred_element_type=jnp.float32)
    A = _leaky(packed + bg_ref[...])                               # (HW, C)

    # ---- frequency mixing, band-wise ----------------------------------------
    #   band0 = c2, band1 = c1, band2 = c0
    #   l = gelu(c2); m = gelu(c1 - l); h = gelu(c0 - c1)
    #   cat = gelu(A - D) with D = (band0 -> gelu, others identity) @ P,
    #   where P shifts band0->band1 and band1->band2 (band0 of D is zero).
    col = lax.broadcasted_iota(jnp.int32, (HW, C), 1)
    T = jnp.where(col < C3, _gelu_tanh(A), A)
    D = jnp.dot(T, p_ref[...], preferred_element_type=jnp.float32)
    cat = _gelu_tanh(A - D)                                        # [l | m | h]

    # ---- depthwise 3x3 conv on cat (pure VPU + rolls) -------------------------
    dw = _leaky(conv_acc(cat, wmd_ref, 0, 1) + bdw_ref[...])       # (HW, C)

    # ---- residual + linear2 (lane-dense, zero-padded to 128 outputs) ----------
    xo = dw + y
    o_ref[0] = jnp.dot(xo, w2_ref[...],
                       preferred_element_type=jnp.float32) + b2_ref[...]


def eff_forward(x_seq, p, H, W):
    """x_seq: (B, H*W, C) float32, seq index = h*W + w.  Returns (B, H*W, out_dim)."""
    B, HW, C = x_seq.shape
    C3 = C // 3
    out_dim = p['w2'].shape[1]
    OP = p['w2p'].shape[1]                       # lane-dense padded out width

    def full(shape):
        nd = len(shape)
        return pl.BlockSpec(shape, lambda b, _n=nd: (0,) * _n)

    kernel = functools.partial(_eff_kernel, H=H, W=W, C=C, C3=C3)

    out = pl.pallas_call(
        kernel,
        out_shape=jax.ShapeDtypeStruct((B, HW, OP), jnp.float32),
        grid=(B,),
        in_specs=[
            pl.BlockSpec((1, HW, C), lambda b: (b, 0, 0)),   # x
            full((C, C)), full((1, C)),                      # linear1
            full((27, HW, C)),                               # grouped tap weight-masks
            full((3, C, C)),                                  # placement matrices
            full((1, C)),                                     # packed conv biases
            full((C, C)),                                      # mixing band-shift P
            full((9, HW, C)),                                  # depthwise tap weight-masks
            full((1, C)),                                      # depthwise bias
            full((C, OP)), full((1, OP)),                      # linear2 (padded)
        ],
        out_specs=pl.BlockSpec((1, HW, OP), lambda b: (b, 0, 0)),
        compiler_params=pltpu.CompilerParams(
            dimension_semantics=("parallel",)),
    )(x_seq,
      p['w1'], p['b1r'],
      p['wm_g'], p['rp'], p['bg'], p['P'],
      p['wm_dw'], p['bdwr'],
      p['w2p'], p['b2p'])
    return out[..., :out_dim]


# ---------------------------------------------------------------------------
# host-side precompute of kernel-friendly parameter forms
# ---------------------------------------------------------------------------
def _conv_weight_masks(weights, dilations, H, W):
    """weights: list of (G, Kin, 3, 3) arrays; channel c = g*Kin + k.
    Returns (len(weights)*9, H*W, G*Kin): per-tap (channel weight x halo mask)."""
    HW = H * W
    G, Kin = weights[0].shape[0], weights[0].shape[1]
    C = G * Kin
    out = np.zeros((len(weights) * 9, HW, C), np.float32)
    hh, ww = np.divmod(np.arange(HW), W)
    for n, (wnp, d) in enumerate(zip(weights, dilations)):
        for i in range(3):
            for j in range(3):
                dy, dx = (i - 1) * d, (j - 1) * d
                mask = ((hh + dy >= 0) & (hh + dy < H) &
                        (ww + dx >= 0) & (ww + dx < W)).astype(np.float32)
                wvec = np.asarray(wnp)[:, :, i, j].reshape(C)
                out[n * 9 + i * 3 + j] = mask[:, None] * wvec[None, :]
    return jnp.asarray(out)


def _placement_matrices(C):
    # Rp[idx][3g+k, band*C3 + g] = 1, band = 2 - idx  (packed = [c2 | c1 | c0])
    C3 = C // 3
    rp = np.zeros((3, C, C), np.float32)
    for idx in range(3):
        band = 2 - idx
        for g in range(C3):
            for k in range(3):
                rp[idx, 3 * g + k, band * C3 + g] = 1.0
    return jnp.asarray(rp)


def _mix_shift_matrix(C):
    # P[j, j+C3] = 1 for j < 2*C3 : shifts band0->band1, band1->band2
    C3 = C // 3
    P = np.zeros((C, C), np.float32)
    for j in range(2 * C3):
        P[j, j + C3] = 1.0
    return jnp.asarray(P)


def init_params(key, dim, out_dim, H, W):
    C3 = dim // 3
    ks = jax.random.split(key, 12)

    def u(k, shape, fan_in):
        bound = 1.0 / np.sqrt(fan_in)
        return jax.random.uniform(k, shape, jnp.float32, -bound, bound)

    p = {}
    p['w1'] = u(ks[0], (dim, dim), dim)             # linear1 (in, out) layout
    p['b1'] = u(ks[1], (dim,), dim)
    p['wc0'] = u(ks[2], (C3, 3, 3, 3), 27); p['bc0'] = u(ks[3], (C3,), 27)
    p['wc1'] = u(ks[4], (C3, 3, 3, 3), 27); p['bc1'] = u(ks[5], (C3,), 27)
    p['wc2'] = u(ks[6], (C3, 3, 3, 3), 27); p['bc2'] = u(ks[7], (C3,), 27)
    p['wdw'] = u(ks[8], (dim, 1, 3, 3), 9); p['bdw'] = u(ks[9], (dim,), 9)
    p['w2'] = u(ks[10], (dim, out_dim), dim)        # linear2 (in, out) layout
    p['b2'] = u(ks[11], (out_dim,), dim)

    # kernel-friendly precomputed forms
    OP = ((out_dim + 127) // 128) * 128             # lane-dense padded width
    p['b1r'] = p['b1'].reshape(1, dim)
    p['wm_g'] = _conv_weight_masks(
        [np.asarray(p['wc0']), np.asarray(p['wc1']), np.asarray(p['wc2'])],
        (1, 2, 3), H, W)
    p['wm_dw'] = _conv_weight_masks([np.asarray(p['wdw'])], (1,), H, W)
    p['rp'] = _placement_matrices(dim)
    p['bg'] = jnp.concatenate([p['bc2'], p['bc1'], p['bc0']]).reshape(1, dim)
    p['P'] = _mix_shift_matrix(dim)
    p['bdwr'] = p['bdw'].reshape(1, dim)
    w2p = np.zeros((dim, OP), np.float32); w2p[:, :out_dim] = np.asarray(p['w2'])
    b2p = np.zeros((1, OP), np.float32);   b2p[0, :out_dim] = np.asarray(p['b2'])
    p['w2p'] = jnp.asarray(w2p)
    p['b2p'] = jnp.asarray(b2p)
    return p


# ---------------------------------------------------------------------------
# pure-JAX reference (NCHW, lax.conv, exact erf GELU) for correctness checking
# ---------------------------------------------------------------------------
def ref_forward(x_seq, p, H, W):
    B, HW, C = x_seq.shape
    y = _gelu_erf(jnp.dot(x_seq, p['w1'], precision=lax.Precision.HIGHEST) + p['b1'])
    xn = jnp.transpose(y.reshape(B, H, W, C), (0, 3, 1, 2))        # NCHW

    def conv(x, w, b, d, groups):
        o = lax.conv_general_dilated(
            x, w, (1, 1), [(d, d), (d, d)], rhs_dilation=(d, d),
            dimension_numbers=('NCHW', 'OIHW', 'NCHW'),
            feature_group_count=groups, precision=lax.Precision.HIGHEST)
        return o + b[None, :, None, None]

    C3 = C // 3
    c0 = _leaky(conv(xn, p['wc0'], p['bc0'], 1, C3))
    c1 = _leaky(conv(xn, p['wc1'], p['bc1'], 2, C3))
    c2 = _leaky(conv(xn, p['wc2'], p['bc2'], 3, C3))
    l = _gelu_erf(c2)
    m = _gelu_erf(c1 - l)
    h = _gelu_erf(c0 - c1)
    cat = jnp.concatenate([l, m, h], axis=1)
    dw = _leaky(conv(cat, p['wdw'], p['bdw'], 1, C))
    xo = dw + xn
    xo = jnp.transpose(xo, (0, 2, 3, 1)).reshape(B, HW, C)
    return jnp.dot(xo, p['w2'], precision=lax.Precision.HIGHEST) + p['b2']


if __name__ == "__main__":
    B, H, W = 2, 8, 8
    dim, out_dim = 24, 48      # dim must be divisible by 3 (see NOTE above)

    key = jax.random.PRNGKey(0)
    kx, kp = jax.random.split(key)
    x = jax.random.normal(kx, (B, H * W, dim), jnp.float32)
    params = init_params(kp, dim, out_dim, H, W)

    out = eff_forward(x, params, H, W)
    out = jax.block_until_ready(out)

    ref = ref_forward(x, params, H, W)
    np.testing.assert_allclose(np.asarray(out), np.asarray(ref),
                               rtol=5e-2, atol=5e-2)
    print("KERNEL_OK")
</pallas_src>

<mosaic_0001>
module attributes {stable_mosaic.version = 11 : i64} {
  func.func @_eff_kernel(%arg0: i32, %arg1: memref<1x64x24xf32, #tpu.memory_space<vmem>>, %arg2: memref<24x24xf32, #tpu.memory_space<vmem>>, %arg3: memref<1x24xf32, #tpu.memory_space<vmem>>, %arg4: memref<27x64x24xf32, #tpu.memory_space<vmem>>, %arg5: memref<3x24x24xf32, #tpu.memory_space<vmem>>, %arg6: memref<1x24xf32, #tpu.memory_space<vmem>>, %arg7: memref<24x24xf32, #tpu.memory_space<vmem>>, %arg8: memref<9x64x24xf32, #tpu.memory_space<vmem>>, %arg9: memref<1x24xf32, #tpu.memory_space<vmem>>, %arg10: memref<24x128xf32, #tpu.memory_space<vmem>>, %arg11: memref<1x128xf32, #tpu.memory_space<vmem>>, %arg12: memref<1x64x128xf32, #tpu.memory_space<vmem>>) attributes {dimension_semantics = [#tpu.dimension_semantics<parallel>], iteration_bounds = array<i64: 2>, scalar_prefetch = 0 : i64, scratch_operands = 0 : i64, tpu.core_type = #tpu.core_type<tc>, window_params = [{transform_indices = @transform_0, window_bounds = array<i64: 1, 64, 24>}, {pipeline_mode = #tpu.pipeline_mode<synchronous>, transform_indices = @transform_1, window_bounds = array<i64: 24, 24>}, {pipeline_mode = #tpu.pipeline_mode<synchronous>, transform_indices = @transform_2, window_bounds = array<i64: 1, 24>}, {pipeline_mode = #tpu.pipeline_mode<synchronous>, transform_indices = @transform_3, window_bounds = array<i64: 27, 64, 24>}, {pipeline_mode = #tpu.pipeline_mode<synchronous>, transform_indices = @transform_4, window_bounds = array<i64: 3, 24, 24>}, {pipeline_mode = #tpu.pipeline_mode<synchronous>, transform_indices = @transform_5, window_bounds = array<i64: 1, 24>}, {pipeline_mode = #tpu.pipeline_mode<synchronous>, transform_indices = @transform_6, window_bounds = array<i64: 24, 24>}, {pipeline_mode = #tpu.pipeline_mode<synchronous>, transform_indices = @transform_7, window_bounds = array<i64: 9, 64, 24>}, {pipeline_mode = #tpu.pipeline_mode<synchronous>, transform_indices = @transform_8, window_bounds = array<i64: 1, 24>}, {pipeline_mode = #tpu.pipeline_mode<synchronous>, transform_indices = @transform_9, window_bounds = array<i64: 24, 128>}, {pipeline_mode = #tpu.pipeline_mode<synchronous>, transform_indices = @transform_10, window_bounds = array<i64: 1, 128>}, {transform_indices = @transform_11, window_bounds = array<i64: 1, 64, 128>}]} {
    %c0 = arith.constant 0 : index
    %c0_0 = arith.constant 0 : index
    %c0_1 = arith.constant 0 : index
    %0 = vector.load %arg1[%c0, %c0_0, %c0_1] : memref<1x64x24xf32, #tpu.memory_space<vmem>>, vector<1x64x24xf32>
    %1 = vector.shape_cast %0 : vector<1x64x24xf32> to vector<64x24xf32>
    %c0_2 = arith.constant 0 : index
    %c0_3 = arith.constant 0 : index
    %2 = vector.load %arg2[%c0_2, %c0_3] : memref<24x24xf32, #tpu.memory_space<vmem>>, vector<24x24xf32>
    %cst = arith.constant dense<0.000000e+00> : vector<64x24xf32>
    %3 = tpu.matmul %1, %2, %cst {dimension_numbers = #tpu.dot_dimension_numbers<[1], [0], [0], [1], [0, 0, 1, 1], [], []>} : vector<64x24xf32>, vector<24x24xf32>, vector<64x24xf32> -> vector<64x24xf32>
    %c0_4 = arith.constant 0 : index
    %c0_5 = arith.constant 0 : index
    %4 = vector.load %arg3[%c0_4, %c0_5] : memref<1x24xf32, #tpu.memory_space<vmem>>, vector<1x24xf32>
    %5 = vector.broadcast %4 : vector<1x24xf32> to vector<64x24xf32>
    %6 = arith.addf %3, %5 : vector<64x24xf32>
    %cst_6 = arith.constant 5.000000e-01 : f32
    %7 = vector.broadcast %cst_6 : f32 to vector<64x24xf32>
    %8 = arith.mulf %7, %6 : vector<64x24xf32>
    %cst_7 = arith.constant 4.471500e-02 : f32
    %9 = vector.broadcast %cst_7 : f32 to vector<64x24xf32>
    %10 = arith.mulf %9, %6 : vector<64x24xf32>
    %11 = arith.mulf %10, %6 : vector<64x24xf32>
    %12 = arith.mulf %11, %6 : vector<64x24xf32>
    %13 = arith.addf %6, %12 : vector<64x24xf32>
    %cst_8 = arith.constant 0.797884583 : f32
    %14 = vector.broadcast %cst_8 : f32 to vector<64x24xf32>
    %15 = arith.mulf %14, %13 : vector<64x24xf32>
    %16 = math.tanh %15 : vector<64x24xf32>
    %cst_9 = arith.constant 1.000000e+00 : f32
    %17 = vector.broadcast %cst_9 : f32 to vector<64x24xf32>
    %18 = arith.addf %17, %16 : vector<64x24xf32>
    %19 = arith.mulf %8, %18 : vector<64x24xf32>
    %cst_10 = arith.constant 0.000000e+00 : f32
    %20 = vector.broadcast %cst_10 : f32 to vector<64x24xf32>
    %cst_11 = arith.constant 0.000000e+00 : f32
    %21 = vector.broadcast %cst_11 : f32 to vector<64x24xf32>
    %c1_i32 = arith.constant 1 : i32
    %22 = tpu.dynamic_rotate %19 by %c1_i32 dim 0 : vector<64x24xf32>, i32 -> vector<64x24xf32>
    %c8_i32 = arith.constant 8 : i32
    %23 = tpu.dynamic_rotate %22 by %c8_i32 dim 0 : vector<64x24xf32>, i32 -> vector<64x24xf32>
    %c0_12 = arith.constant 0 : index
    %c0_13 = arith.constant 0 : index
    %c0_14 = arith.constant 0 : index
    %24 = vector.load %arg4[%c0_12, %c0_13, %c0_14] : memref<27x64x24xf32, #tpu.memory_space<vmem>>, vector<1x64x24xf32>
    %25 = vector.shape_cast %24 : vector<1x64x24xf32> to vector<64x24xf32>
    %26 = arith.mulf %23, %25 : vector<64x24xf32>
    %27 = arith.addf %21, %26 : vector<64x24xf32>
    %c3 = arith.constant 3 : index
    %c0_15 = arith.constant 0 : index
    %c0_16 = arith.constant 0 : index
    %28 = vector.load %arg4[%c3, %c0_15, %c0_16] : memref<27x64x24xf32, #tpu.memory_space<vmem>>, vector<1x64x24xf32>
    %29 = vector.shape_cast %28 : vector<1x64x24xf32> to vector<64x24xf32>
    %30 = arith.mulf %22, %29 : vector<64x24xf32>
    %31 = arith.addf %27, %30 : vector<64x24xf32>
    %c56_i32 = arith.constant 56 : i32
    %32 = tpu.dynamic_rotate %22 by %c56_i32 dim 0 : vector<64x24xf32>, i32 -> vector<64x24xf32>
    %c6 = arith.constant 6 : index
    %c0_17 = arith.constant 0 : index
    %c0_18 = arith.constant 0 : index
    %33 = vector.load %arg4[%c6, %c0_17, %c0_18] : memref<27x64x24xf32, #tpu.memory_space<vmem>>, vector<1x64x24xf32>
    %34 = vector.shape_cast %33 : vector<1x64x24xf32> to vector<64x24xf32>
    %35 = arith.mulf %32, %34 : vector<64x24xf32>
    %36 = arith.addf %31, %35 : vector<64x24xf32>
    %c8_i32_19 = arith.constant 8 : i32
    %37 = tpu.dynamic_rotate %19 by %c8_i32_19 dim 0 : vector<64x24xf32>, i32 -> vector<64x24xf32>
    %c1 = arith.constant 1 : index
    %c0_20 = arith.constant 0 : index
    %c0_21 = arith.constant 0 : index
    %38 = vector.load %arg4[%c1, %c0_20, %c0_21] : memref<27x64x24xf32, #tpu.memory_space<vmem>>, vector<1x64x24xf32>
    %39 = vector.shape_cast %38 : vector<1x64x24xf32> to vector<64x24xf32>
    %40 = arith.mulf %37, %39 : vector<64x24xf32>
    %41 = arith.addf %36, %40 : vector<64x24xf32>
    %c4 = arith.constant 4 : index
    %c0_22 = arith.constant 0 : index
    %c0_23 = arith.constant 0 : index
    %42 = vector.load %arg4[%c4, %c0_22, %c0_23] : memref<27x64x24xf32, #tpu.memory_space<vmem>>, vector<1x64x24xf32>
    %43 = vector.shape_cast %42 : vector<1x64x24xf32> to vector<64x24xf32>
    %44 = arith.mulf %19, %43 : vector<64x24xf32>
    %45 = arith.addf %41, %44 : vector<64x24xf32>
    %c56_i32_24 = arith.constant 56 : i32
    %46 = tpu.dynamic_rotate %19 by %c56_i32_24 dim 0 : vector<64x24xf32>, i32 -> vector<64x24xf32>
    %c7 = arith.constant 7 : index
    %c0_25 = arith.constant 0 : index
    %c0_26 = arith.constant 0 : index
    %47 = vector.load %arg4[%c7, %c0_25, %c0_26] : memref<27x64x24xf32, #tpu.memory_space<vmem>>, vector<1x64x24xf32>
    %48 = vector.shape_cast %47 : vector<1x64x24xf32> to vector<64x24xf32>
    %49 = arith.mulf %46, %48 : vector<64x24xf32>
    %50 = arith.addf %45, %49 : vector<64x24xf32>
    %c63_i32 = arith.constant 63 : i32
    %51 = tpu.dynamic_rotate %19 by %c63_i32 dim 0 : vector<64x24xf32>, i32 -> vector<64x24xf32>
    %c8_i32_27 = arith.constant 8 : i32
    %52 = tpu.dynamic_rotate %51 by %c8_i32_27 dim 0 : vector<64x24xf32>, i32 -> vector<64x24xf32>
    %c2 = arith.constant 2 : index
    %c0_28 = arith.constant 0 : index
    %c0_29 = arith.constant 0 : index
    %53 = vector.load %arg4[%c2, %c0_28, %c0_29] : memref<27x64x24xf32, #tpu.memory_space<vmem>>, vector<1x64x24xf32>
    %54 = vector.shape_cast %53 : vector<1x64x24xf32> to vector<64x24xf32>
    %55 = arith.mulf %52, %54 : vector<64x24xf32>
    %56 = arith.addf %50, %55 : vector<64x24xf32>
    %c5 = arith.constant 5 : index
    %c0_30 = arith.constant 0 : index
    %c0_31 = arith.constant 0 : index
    %57 = vector.load %arg4[%c5, %c0_30, %c0_31] : memref<27x64x24xf32, #tpu.memory_space<vmem>>, vector<1x64x24xf32>
    %58 = vector.shape_cast %57 : vector<1x64x24xf32> to vector<64x24xf32>
    %59 = arith.mulf %51, %58 : vector<64x24xf32>
    %60 = arith.addf %56, %59 : vector<64x24xf32>
    %c56_i32_32 = arith.constant 56 : i32
    %61 = tpu.dynamic_rotate %51 by %c56_i32_32 dim 0 : vector<64x24xf32>, i32 -> vector<64x24xf32>
    %c8 = arith.constant 8 : index
    %c0_33 = arith.constant 0 : index
    %c0_34 = arith.constant 0 : index
    %62 = vector.load %arg4[%c8, %c0_33, %c0_34] : memref<27x64x24xf32, #tpu.memory_space<vmem>>, vector<1x64x24xf32>
    %63 = vector.shape_cast %62 : vector<1x64x24xf32> to vector<64x24xf32>
    %64 = arith.mulf %61, %63 : vector<64x24xf32>
    %65 = arith.addf %60, %64 : vector<64x24xf32>
    %c0_35 = arith.constant 0 : index
    %c0_36 = arith.constant 0 : index
    %c0_37 = arith.constant 0 : index
    %66 = vector.load %arg5[%c0_35, %c0_36, %c0_37] : memref<3x24x24xf32, #tpu.memory_space<vmem>>, vector<1x24x24xf32>
    %67 = vector.shape_cast %66 : vector<1x24x24xf32> to vector<24x24xf32>
    %cst_38 = arith.constant dense<0.000000e+00> : vector<64x24xf32>
    %68 = tpu.matmul %65, %67, %cst_38 {dimension_numbers = #tpu.dot_dimension_numbers<[1], [0], [0], [1], [0, 0, 1, 1], [], []>} : vector<64x24xf32>, vector<24x24xf32>, vector<64x24xf32> -> vector<64x24xf32>
    %69 = arith.addf %20, %68 : vector<64x24xf32>
    %cst_39 = arith.constant 0.000000e+00 : f32
    %70 = vector.broadcast %cst_39 : f32 to vector<64x24xf32>
    %c2_i32 = arith.constant 2 : i32
    %71 = tpu.dynamic_rotate %19 by %c2_i32 dim 0 : vector<64x24xf32>, i32 -> vector<64x24xf32>
    %c16_i32 = arith.constant 16 : i32
    %72 = tpu.dynamic_rotate %71 by %c16_i32 dim 0 : vector<64x24xf32>, i32 -> vector<64x24xf32>
    %c9 = arith.constant 9 : index
    %c0_40 = arith.constant 0 : index
    %c0_41 = arith.constant 0 : index
    %73 = vector.load %arg4[%c9, %c0_40, %c0_41] : memref<27x64x24xf32, #tpu.memory_space<vmem>>, vector<1x64x24xf32>
    %74 = vector.shape_cast %73 : vector<1x64x24xf32> to vector<64x24xf32>
    %75 = arith.mulf %72, %74 : vector<64x24xf32>
    %76 = arith.addf %70, %75 : vector<64x24xf32>
    %c12 = arith.constant 12 : index
    %c0_42 = arith.constant 0 : index
    %c0_43 = arith.constant 0 : index
    %77 = vector.load %arg4[%c12, %c0_42, %c0_43] : memref<27x64x24xf32, #tpu.memory_space<vmem>>, vector<1x64x24xf32>
    %78 = vector.shape_cast %77 : vector<1x64x24xf32> to vector<64x24xf32>
    %79 = arith.mulf %71, %78 : vector<64x24xf32>
    %80 = arith.addf %76, %79 : vector<64x24xf32>
    %c48_i32 = arith.constant 48 : i32
    %81 = tpu.dynamic_rotate %71 by %c48_i32 dim 0 : vector<64x24xf32>, i32 -> vector<64x24xf32>
    %c15 = arith.constant 15 : index
    %c0_44 = arith.constant 0 : index
    %c0_45 = arith.constant 0 : index
    %82 = vector.load %arg4[%c15, %c0_44, %c0_45] : memref<27x64x24xf32, #tpu.memory_space<vmem>>, vector<1x64x24xf32>
    %83 = vector.shape_cast %82 : vector<1x64x24xf32> to vector<64x24xf32>
    %84 = arith.mulf %81, %83 : vector<64x24xf32>
    %85 = arith.addf %80, %84 : vector<64x24xf32>
    %c16_i32_46 = arith.constant 16 : i32
    %86 = tpu.dynamic_rotate %19 by %c16_i32_46 dim 0 : vector<64x24xf32>, i32 -> vector<64x24xf32>
    %c10 = arith.constant 10 : index
    %c0_47 = arith.constant 0 : index
    %c0_48 = arith.constant 0 : index
    %87 = vector.load %arg4[%c10, %c0_47, %c0_48] : memref<27x64x24xf32, #tpu.memory_space<vmem>>, vector<1x64x24xf32>
    %88 = vector.shape_cast %87 : vector<1x64x24xf32> to vector<64x24xf32>
    %89 = arith.mulf %86, %88 : vector<64x24xf32>
    %90 = arith.addf %85, %89 : vector<64x24xf32>
    %c13 = arith.constant 13 : index
    %c0_49 = arith.constant 0 : index
    %c0_50 = arith.constant 0 : index
    %91 = vector.load %arg4[%c13, %c0_49, %c0_50] : memref<27x64x24xf32, #tpu.memory_space<vmem>>, vector<1x64x24xf32>
    %92 = vector.shape_cast %91 : vector<1x64x24xf32> to vector<64x24xf32>
    %93 = arith.mulf %19, %92 : vector<64x24xf32>
    %94 = arith.addf %90, %93 : vector<64x24xf32>
    %c48_i32_51 = arith.constant 48 : i32
    %95 = tpu.dynamic_rotate %19 by %c48_i32_51 dim 0 : vector<64x24xf32>, i32 -> vector<64x24xf32>
    %c16 = arith.constant 16 : index
    %c0_52 = arith.constant 0 : index
    %c0_53 = arith.constant 0 : index
    %96 = vector.load %arg4[%c16, %c0_52, %c0_53] : memref<27x64x24xf32, #tpu.memory_space<vmem>>, vector<1x64x24xf32>
    %97 = vector.shape_cast %96 : vector<1x64x24xf32> to vector<64x24xf32>
    %98 = arith.mulf %95, %97 : vector<64x24xf32>
    %99 = arith.addf %94, %98 : vector<64x24xf32>
    %c62_i32 = arith.constant 62 : i32
    %100 = tpu.dynamic_rotate %19 by %c62_i32 dim 0 : vector<64x24xf32>, i32 -> vector<64x24xf32>
    %c16_i32_54 = arith.constant 16 : i32
    %101 = tpu.dynamic_rotate %100 by %c16_i32_54 dim 0 : vector<64x24xf32>, i32 -> vector<64x24xf32>
    %c11 = arith.constant 11 : index
    %c0_55 = arith.constant 0 : index
    %c0_56 = arith.constant 0 : index
    %102 = vector.load %arg4[%c11, %c0_55, %c0_56] : memref<27x64x24xf32, #tpu.memory_space<vmem>>, vector<1x64x24xf32>
    %103 = vector.shape_cast %102 : vector<1x64x24xf32> to vector<64x24xf32>
    %104 = arith.mulf %101, %103 : vector<64x24xf32>
    %105 = arith.addf %99, %104 : vector<64x24xf32>
    %c14 = arith.constant 14 : index
    %c0_57 = arith.constant 0 : index
    %c0_58 = arith.constant 0 : index
    %106 = vector.load %arg4[%c14, %c0_57, %c0_58] : memref<27x64x24xf32, #tpu.memory_space<vmem>>, vector<1x64x24xf32>
    %107 = vector.shape_cast %106 : vector<1x64x24xf32> to vector<64x24xf32>
    %108 = arith.mulf %100, %107 : vector<64x24xf32>
    %109 = arith.addf %105, %108 : vector<64x24xf32>
    %c48_i32_59 = arith.constant 48 : i32
    %110 = tpu.dynamic_rotate %100 by %c48_i32_59 dim 0 : vector<64x24xf32>, i32 -> vector<64x24xf32>
    %c17 = arith.constant 17 : index
    %c0_60 = arith.constant 0 : index
    %c0_61 = arith.constant 0 : index
    %111 = vector.load %arg4[%c17, %c0_60, %c0_61] : memref<27x64x24xf32, #tpu.memory_space<vmem>>, vector<1x64x24xf32>
    %112 = vector.shape_cast %111 : vector<1x64x24xf32> to vector<64x24xf32>
    %113 = arith.mulf %110, %112 : vector<64x24xf32>
    %114 = arith.addf %109, %113 : vector<64x24xf32>
    %c1_62 = arith.constant 1 : index
    %c0_63 = arith.constant 0 : index
    %c0_64 = arith.constant 0 : index
    %115 = vector.load %arg5[%c1_62, %c0_63, %c0_64] : memref<3x24x24xf32, #tpu.memory_space<vmem>>, vector<1x24x24xf32>
    %116 = vector.shape_cast %115 : vector<1x24x24xf32> to vector<24x24xf32>
    %cst_65 = arith.constant dense<0.000000e+00> : vector<64x24xf32>
    %117 = tpu.matmul %114, %116, %cst_65 {dimension_numbers = #tpu.dot_dimension_numbers<[1], [0], [0], [1], [0, 0, 1, 1], [], []>} : vector<64x24xf32>, vector<24x24xf32>, vector<64x24xf32> -> vector<64x24xf32>
    %118 = arith.addf %69, %117 : vector<64x24xf32>
    %cst_66 = arith.constant 0.000000e+00 : f32
    %119 = vector.broadcast %cst_66 : f32 to vector<64x24xf32>
    %c3_i32 = arith.constant 3 : i32
    %120 = tpu.dynamic_rotate %19 by %c3_i32 dim 0 : vector<64x24xf32>, i32 -> vector<64x24xf32>
    %c24_i32 = arith.constant 24 : i32
    %121 = tpu.dynamic_rotate %120 by %c24_i32 dim 0 : vector<64x24xf32>, i32 -> vector<64x24xf32>
    %c18 = arith.constant 18 : index
    %c0_67 = arith.constant 0 : index
    %c0_68 = arith.constant 0 : index
    %122 = vector.load %arg4[%c18, %c0_67, %c0_68] : memref<27x64x24xf32, #tpu.memory_space<vmem>>, vector<1x64x24xf32>
    %123 = vector.shape_cast %122 : vector<1x64x24xf32> to vector<64x24xf32>
    %124 = arith.mulf %121, %123 : vector<64x24xf32>
    %125 = arith.addf %119, %124 : vector<64x24xf32>
    %c21 = arith.constant 21 : index
    %c0_69 = arith.constant 0 : index
    %c0_70 = arith.constant 0 : index
    %126 = vector.load %arg4[%c21, %c0_69, %c0_70] : memref<27x64x24xf32, #tpu.memory_space<vmem>>, vector<1x64x24xf32>
    %127 = vector.shape_cast %126 : vector<1x64x24xf32> to vector<64x24xf32>
    %128 = arith.mulf %120, %127 : vector<64x24xf32>
    %129 = arith.addf %125, %128 : vector<64x24xf32>
    %c40_i32 = arith.constant 40 : i32
    %130 = tpu.dynamic_rotate %120 by %c40_i32 dim 0 : vector<64x24xf32>, i32 -> vector<64x24xf32>
    %c24 = arith.constant 24 : index
    %c0_71 = arith.constant 0 : index
    %c0_72 = arith.constant 0 : index
    %131 = vector.load %arg4[%c24, %c0_71, %c0_72] : memref<27x64x24xf32, #tpu.memory_space<vmem>>, vector<1x64x24xf32>
    %132 = vector.shape_cast %131 : vector<1x64x24xf32> to vector<64x24xf32>
    %133 = arith.mulf %130, %132 : vector<64x24xf32>
    %134 = arith.addf %129, %133 : vector<64x24xf32>
    %c24_i32_73 = arith.constant 24 : i32
    %135 = tpu.dynamic_rotate %19 by %c24_i32_73 dim 0 : vector<64x24xf32>, i32 -> vector<64x24xf32>
    %c19 = arith.constant 19 : index
    %c0_74 = arith.constant 0 : index
    %c0_75 = arith.constant 0 : index
    %136 = vector.load %arg4[%c19, %c0_74, %c0_75] : memref<27x64x24xf32, #tpu.memory_space<vmem>>, vector<1x64x24xf32>
    %137 = vector.shape_cast %136 : vector<1x64x24xf32> to vector<64x24xf32>
    %138 = arith.mulf %135, %137 : vector<64x24xf32>
    %139 = arith.addf %134, %138 : vector<64x24xf32>
    %c22 = arith.constant 22 : index
    %c0_76 = arith.constant 0 : index
    %c0_77 = arith.constant 0 : index
    %140 = vector.load %arg4[%c22, %c0_76, %c0_77] : memref<27x64x24xf32, #tpu.memory_space<vmem>>, vector<1x64x24xf32>
    %141 = vector.shape_cast %140 : vector<1x64x24xf32> to vector<64x24xf32>
    %142 = arith.mulf %19, %141 : vector<64x24xf32>
    %143 = arith.addf %139, %142 : vector<64x24xf32>
    %c40_i32_78 = arith.constant 40 : i32
    %144 = tpu.dynamic_rotate %19 by %c40_i32_78 dim 0 : vector<64x24xf32>, i32 -> vector<64x24xf32>
    %c25 = arith.constant 25 : index
    %c0_79 = arith.constant 0 : index
    %c0_80 = arith.constant 0 : index
    %145 = vector.load %arg4[%c25, %c0_79, %c0_80] : memref<27x64x24xf32, #tpu.memory_space<vmem>>, vector<1x64x24xf32>
    %146 = vector.shape_cast %145 : vector<1x64x24xf32> to vector<64x24xf32>
    %147 = arith.mulf %144, %146 : vector<64x24xf32>
    %148 = arith.addf %143, %147 : vector<64x24xf32>
    %c61_i32 = arith.constant 61 : i32
    %149 = tpu.dynamic_rotate %19 by %c61_i32 dim 0 : vector<64x24xf32>, i32 -> vector<64x24xf32>
    %c24_i32_81 = arith.constant 24 : i32
    %150 = tpu.dynamic_rotate %149 by %c24_i32_81 dim 0 : vector<64x24xf32>, i32 -> vector<64x24xf32>
    %c20 = arith.constant 20 : index
    %c0_82 = arith.constant 0 : index
    %c0_83 = arith.constant 0 : index
    %151 = vector.load %arg4[%c20, %c0_82, %c0_83] : memref<27x64x24xf32, #tpu.memory_space<vmem>>, vector<1x64x24xf32>
    %152 = vector.shape_cast %151 : vector<1x64x24xf32> to vector<64x24xf32>
    %153 = arith.mulf %150, %152 : vector<64x24xf32>
    %154 = arith.addf %148, %153 : vector<64x24xf32>
    %c23 = arith.constant 23 : index
    %c0_84 = arith.constant 0 : index
    %c0_85 = arith.constant 0 : index
    %155 = vector.load %arg4[%c23, %c0_84, %c0_85] : memref<27x64x24xf32, #tpu.memory_space<vmem>>, vector<1x64x24xf32>
    %156 = vector.shape_cast %155 : vector<1x64x24xf32> to vector<64x24xf32>
    %157 = arith.mulf %149, %156 : vector<64x24xf32>
    %158 = arith.addf %154, %157 : vector<64x24xf32>
    %c40_i32_86 = arith.constant 40 : i32
    %159 = tpu.dynamic_rotate %149 by %c40_i32_86 dim 0 : vector<64x24xf32>, i32 -> vector<64x24xf32>
    %c26 = arith.constant 26 : index
    %c0_87 = arith.constant 0 : index
    %c0_88 = arith.constant 0 : index
    %160 = vector.load %arg4[%c26, %c0_87, %c0_88] : memref<27x64x24xf32, #tpu.memory_space<vmem>>, vector<1x64x24xf32>
    %161 = vector.shape_cast %160 : vector<1x64x24xf32> to vector<64x24xf32>
    %162 = arith.mulf %159, %161 : vector<64x24xf32>
    %163 = arith.addf %158, %162 : vector<64x24xf32>
    %c2_89 = arith.constant 2 : index
    %c0_90 = arith.constant 0 : index
    %c0_91 = arith.constant 0 : index
    %164 = vector.load %arg5[%c2_89, %c0_90, %c0_91] : memref<3x24x24xf32, #tpu.memory_space<vmem>>, vector<1x24x24xf32>
    %165 = vector.shape_cast %164 : vector<1x24x24xf32> to vector<24x24xf32>
    %cst_92 = arith.constant dense<0.000000e+00> : vector<64x24xf32>
    %166 = tpu.matmul %163, %165, %cst_92 {dimension_numbers = #tpu.dot_dimension_numbers<[1], [0], [0], [1], [0, 0, 1, 1], [], []>} : vector<64x24xf32>, vector<24x24xf32>, vector<64x24xf32> -> vector<64x24xf32>
    %167 = arith.addf %118, %166 : vector<64x24xf32>
    %c0_93 = arith.constant 0 : index
    %c0_94 = arith.constant 0 : index
    %168 = vector.load %arg6[%c0_93, %c0_94] : memref<1x24xf32, #tpu.memory_space<vmem>>, vector<1x24xf32>
    %169 = vector.broadcast %168 : vector<1x24xf32> to vector<64x24xf32>
    %170 = arith.addf %167, %169 : vector<64x24xf32>
    %cst_95 = arith.constant 0.000000e+00 : f32
    %171 = vector.broadcast %cst_95 : f32 to vector<64x24xf32>
    %172 = arith.cmpf oge, %170, %171 : vector<64x24xf32>
    %cst_96 = arith.constant 0.00999999977 : f32
    %173 = vector.broadcast %cst_96 : f32 to vector<64x24xf32>
    %174 = arith.mulf %173, %170 : vector<64x24xf32>
    %175 = arith.select %172, %170, %174 : vector<64x24xi1>, vector<64x24xf32>
    %176 = tpu.iota {dimensions = array<i32: 1>} : vector<64x24xi32>
    %c8_i32_97 = arith.constant 8 : i32
    %177 = vector.broadcast %c8_i32_97 : i32 to vector<64x24xi32>
    %178 = arith.cmpi slt, %176, %177 : vector<64x24xi32>
    %cst_98 = arith.constant 5.000000e-01 : f32
    %179 = vector.broadcast %cst_98 : f32 to vector<64x24xf32>
    %180 = arith.mulf %179, %175 : vector<64x24xf32>
    %cst_99 = arith.constant 4.471500e-02 : f32
    %181 = vector.broadcast %cst_99 : f32 to vector<64x24xf32>
    %182 = arith.mulf %181, %175 : vector<64x24xf32>
    %183 = arith.mulf %182, %175 : vector<64x24xf32>
    %184 = arith.mulf %183, %175 : vector<64x24xf32>
    %185 = arith.addf %175, %184 : vector<64x24xf32>
    %cst_100 = arith.constant 0.797884583 : f32
    %186 = vector.broadcast %cst_100 : f32 to vector<64x24xf32>
    %187 = arith.mulf %186, %185 : vector<64x24xf32>
    %188 = math.tanh %187 : vector<64x24xf32>
    %cst_101 = arith.constant 1.000000e+00 : f32
    %189 = vector.broadcast %cst_101 : f32 to vector<64x24xf32>
    %190 = arith.addf %189, %188 : vector<64x24xf32>
    %191 = arith.mulf %180, %190 : vector<64x24xf32>
    %192 = arith.select %178, %191, %175 : vector<64x24xi1>, vector<64x24xf32>
    %c0_102 = arith.constant 0 : index
    %c0_103 = arith.constant 0 : index
    %193 = vector.load %arg7[%c0_102, %c0_103] : memref<24x24xf32, #tpu.memory_space<vmem>>, vector<24x24xf32>
    %cst_104 = arith.constant dense<0.000000e+00> : vector<64x24xf32>
    %194 = tpu.matmul %192, %193, %cst_104 {dimension_numbers = #tpu.dot_dimension_numbers<[1], [0], [0], [1], [0, 0, 1, 1], [], []>} : vector<64x24xf32>, vector<24x24xf32>, vector<64x24xf32> -> vector<64x24xf32>
    %195 = arith.subf %175, %194 : vector<64x24xf32>
    %cst_105 = arith.constant 5.000000e-01 : f32
    %196 = vector.broadcast %cst_105 : f32 to vector<64x24xf32>
    %197 = arith.mulf %196, %195 : vector<64x24xf32>
    %cst_106 = arith.constant 4.471500e-02 : f32
    %198 = vector.broadcast %cst_106 : f32 to vector<64x24xf32>
    %199 = arith.mulf %198, %195 : vector<64x24xf32>
    %200 = arith.mulf %199, %195 : vector<64x24xf32>
    %201 = arith.mulf %200, %195 : vector<64x24xf32>
    %202 = arith.addf %195, %201 : vector<64x24xf32>
    %cst_107 = arith.constant 0.797884583 : f32
    %203 = vector.broadcast %cst_107 : f32 to vector<64x24xf32>
    %204 = arith.mulf %203, %202 : vector<64x24xf32>
    %205 = math.tanh %204 : vector<64x24xf32>
    %cst_108 = arith.constant 1.000000e+00 : f32
    %206 = vector.broadcast %cst_108 : f32 to vector<64x24xf32>
    %207 = arith.addf %206, %205 : vector<64x24xf32>
    %208 = arith.mulf %197, %207 : vector<64x24xf32>
    %cst_109 = arith.constant 0.000000e+00 : f32
    %209 = vector.broadcast %cst_109 : f32 to vector<64x24xf32>
    %c1_i32_110 = arith.constant 1 : i32
    %210 = tpu.dynamic_rotate %208 by %c1_i32_110 dim 0 : vector<64x24xf32>, i32 -> vector<64x24xf32>
    %c8_i32_111 = arith.constant 8 : i32
    %211 = tpu.dynamic_rotate %210 by %c8_i32_111 dim 0 : vector<64x24xf32>, i32 -> vector<64x24xf32>
    %c0_112 = arith.constant 0 : index
    %c0_113 = arith.constant 0 : index
    %c0_114 = arith.constant 0 : index
    %212 = vector.load %arg8[%c0_112, %c0_113, %c0_114] : memref<9x64x24xf32, #tpu.memory_space<vmem>>, vector<1x64x24xf32>
    %213 = vector.shape_cast %212 : vector<1x64x24xf32> to vector<64x24xf32>
    %214 = arith.mulf %211, %213 : vector<64x24xf32>
    %215 = arith.addf %209, %214 : vector<64x24xf32>
    %c3_115 = arith.constant 3 : index
    %c0_116 = arith.constant 0 : index
    %c0_117 = arith.constant 0 : index
    %216 = vector.load %arg8[%c3_115, %c0_116, %c0_117] : memref<9x64x24xf32, #tpu.memory_space<vmem>>, vector<1x64x24xf32>
    %217 = vector.shape_cast %216 : vector<1x64x24xf32> to vector<64x24xf32>
    %218 = arith.mulf %210, %217 : vector<64x24xf32>
    %219 = arith.addf %215, %218 : vector<64x24xf32>
    %c56_i32_118 = arith.constant 56 : i32
    %220 = tpu.dynamic_rotate %210 by %c56_i32_118 dim 0 : vector<64x24xf32>, i32 -> vector<64x24xf32>
    %c6_119 = arith.constant 6 : index
    %c0_120 = arith.constant 0 : index
    %c0_121 = arith.constant 0 : index
    %221 = vector.load %arg8[%c6_119, %c0_120, %c0_121] : memref<9x64x24xf32, #tpu.memory_space<vmem>>, vector<1x64x24xf32>
    %222 = vector.shape_cast %221 : vector<1x64x24xf32> to vector<64x24xf32>
    %223 = arith.mulf %220, %222 : vector<64x24xf32>
    %224 = arith.addf %219, %223 : vector<64x24xf32>
    %c8_i32_122 = arith.constant 8 : i32
    %225 = tpu.dynamic_rotate %208 by %c8_i32_122 dim 0 : vector<64x24xf32>, i32 -> vector<64x24xf32>
    %c1_123 = arith.constant 1 : index
    %c0_124 = arith.constant 0 : index
    %c0_125 = arith.constant 0 : index
    %226 = vector.load %arg8[%c1_123, %c0_124, %c0_125] : memref<9x64x24xf32, #tpu.memory_space<vmem>>, vector<1x64x24xf32>
    %227 = vector.shape_cast %226 : vector<1x64x24xf32> to vector<64x24xf32>
    %228 = arith.mulf %225, %227 : vector<64x24xf32>
    %229 = arith.addf %224, %228 : vector<64x24xf32>
    %c4_126 = arith.constant 4 : index
    %c0_127 = arith.constant 0 : index
    %c0_128 = arith.constant 0 : index
    %230 = vector.load %arg8[%c4_126, %c0_127, %c0_128] : memref<9x64x24xf32, #tpu.memory_space<vmem>>, vector<1x64x24xf32>
    %231 = vector.shape_cast %230 : vector<1x64x24xf32> to vector<64x24xf32>
    %232 = arith.mulf %208, %231 : vector<64x24xf32>
    %233 = arith.addf %229, %232 : vector<64x24xf32>
    %c56_i32_129 = arith.constant 56 : i32
    %234 = tpu.dynamic_rotate %208 by %c56_i32_129 dim 0 : vector<64x24xf32>, i32 -> vector<64x24xf32>
    %c7_130 = arith.constant 7 : index
    %c0_131 = arith.constant 0 : index
    %c0_132 = arith.constant 0 : index
    %235 = vector.load %arg8[%c7_130, %c0_131, %c0_132] : memref<9x64x24xf32, #tpu.memory_space<vmem>>, vector<1x64x24xf32>
    %236 = vector.shape_cast %235 : vector<1x64x24xf32> to vector<64x24xf32>
    %237 = arith.mulf %234, %236 : vector<64x24xf32>
    %238 = arith.addf %233, %237 : vector<64x24xf32>
    %c63_i32_133 = arith.constant 63 : i32
    %239 = tpu.dynamic_rotate %208 by %c63_i32_133 dim 0 : vector<64x24xf32>, i32 -> vector<64x24xf32>
    %c8_i32_134 = arith.constant 8 : i32
    %240 = tpu.dynamic_rotate %239 by %c8_i32_134 dim 0 : vector<64x24xf32>, i32 -> vector<64x24xf32>
    %c2_135 = arith.constant 2 : index
    %c0_136 = arith.constant 0 : index
    %c0_137 = arith.constant 0 : index
    %241 = vector.load %arg8[%c2_135, %c0_136, %c0_137] : memref<9x64x24xf32, #tpu.memory_space<vmem>>, vector<1x64x24xf32>
    %242 = vector.shape_cast %241 : vector<1x64x24xf32> to vector<64x24xf32>
    %243 = arith.mulf %240, %242 : vector<64x24xf32>
    %244 = arith.addf %238, %243 : vector<64x24xf32>
    %c5_138 = arith.constant 5 : index
    %c0_139 = arith.constant 0 : index
    %c0_140 = arith.constant 0 : index
    %245 = vector.load %arg8[%c5_138, %c0_139, %c0_140] : memref<9x64x24xf32, #tpu.memory_space<vmem>>, vector<1x64x24xf32>
    %246 = vector.shape_cast %245 : vector<1x64x24xf32> to vector<64x24xf32>
    %247 = arith.mulf %239, %246 : vector<64x24xf32>
    %248 = arith.addf %244, %247 : vector<64x24xf32>
    %c56_i32_141 = arith.constant 56 : i32
    %249 = tpu.dynamic_rotate %239 by %c56_i32_141 dim 0 : vector<64x24xf32>, i32 -> vector<64x24xf32>
    %c8_142 = arith.constant 8 : index
    %c0_143 = arith.constant 0 : index
    %c0_144 = arith.constant 0 : index
    %250 = vector.load %arg8[%c8_142, %c0_143, %c0_144] : memref<9x64x24xf32, #tpu.memory_space<vmem>>, vector<1x64x24xf32>
    %251 = vector.shape_cast %250 : vector<1x64x24xf32> to vector<64x24xf32>
    %252 = arith.mulf %249, %251 : vector<64x24xf32>
    %253 = arith.addf %248, %252 : vector<64x24xf32>
    %c0_145 = arith.constant 0 : index
    %c0_146 = arith.constant 0 : index
    %254 = vector.load %arg9[%c0_145, %c0_146] : memref<1x24xf32, #tpu.memory_space<vmem>>, vector<1x24xf32>
    %255 = vector.broadcast %254 : vector<1x24xf32> to vector<64x24xf32>
    %256 = arith.addf %253, %255 : vector<64x24xf32>
    %cst_147 = arith.constant 0.000000e+00 : f32
    %257 = vector.broadcast %cst_147 : f32 to vector<64x24xf32>
    %258 = arith.cmpf oge, %256, %257 : vector<64x24xf32>
    %cst_148 = arith.constant 0.00999999977 : f32
    %259 = vector.broadcast %cst_148 : f32 to vector<64x24xf32>
    %260 = arith.mulf %259, %256 : vector<64x24xf32>
    %261 = arith.select %258, %256, %260 : vector<64x24xi1>, vector<64x24xf32>
    %262 = arith.addf %261, %19 : vector<64x24xf32>
    %c0_149 = arith.constant 0 : index
    %c0_150 = arith.constant 0 : index
    %263 = vector.load %arg10[%c0_149, %c0_150] : memref<24x128xf32, #tpu.memory_space<vmem>>, vector<24x128xf32>
    %cst_151 = arith.constant dense<0.000000e+00> : vector<64x128xf32>
    %264 = tpu.matmul %262, %263, %cst_151 {dimension_numbers = #tpu.dot_dimension_numbers<[1], [0], [0], [1], [0, 0, 1, 1], [], []>} : vector<64x24xf32>, vector<24x128xf32>, vector<64x128xf32> -> vector<64x128xf32>
    %c0_152 = arith.constant 0 : index
    %c0_153 = arith.constant 0 : index
    %265 = vector.load %arg11[%c0_152, %c0_153] : memref<1x128xf32, #tpu.memory_space<vmem>>, vector<1x128xf32>
    %266 = vector.broadcast %265 : vector<1x128xf32> to vector<64x128xf32>
    %267 = arith.addf %264, %266 : vector<64x128xf32>
    %c0_154 = arith.constant 0 : index
    %c0_155 = arith.constant 0 : index
    %c0_156 = arith.constant 0 : index
    %268 = vector.load %arg12[%c0_154, %c0_155, %c0_156] : memref<1x64x128xf32, #tpu.memory_space<vmem>>, vector<1x64x128xf32>
    %269 = vector.shape_cast %268 : vector<1x64x128xf32> to vector<64x128xf32>
    %270 = vector.shape_cast %267 : vector<64x128xf32> to vector<1x64x128xf32>
    tpu.vector_store %arg12[%c0_154, %c0_155, %c0_156], %270 {strides = array<i32>} : memref<1x64x128xf32, #tpu.memory_space<vmem>>, vector<1x64x128xf32>,
    return
  }
  func.func @transform_0(%arg0: i32) -> (i32, i32, i32) {
    %c0_i32 = arith.constant 0 : i32
    %c0_i32_0 = arith.constant 0 : i32
    %c0_i32_1 = arith.constant 0 : i32
    return %arg0, %c0_i32, %c0_i32_0 : i32, i32, i32
  }
  func.func @transform_1(%arg0: i32) -> (i32, i32) {
    %c0_i32 = arith.constant 0 : i32
    %c0_i32_0 = arith.constant 0 : i32
    %c0_i32_1 = arith.constant 0 : i32
    return %c0_i32, %c0_i32_0 : i32, i32
  }
  func.func @transform_2(%arg0: i32) -> (i32, i32) {
    %c0_i32 = arith.constant 0 : i32
    %c0_i32_0 = arith.constant 0 : i32
    %c0_i32_1 = arith.constant 0 : i32
    return %c0_i32, %c0_i32_0 : i32, i32
  }
  func.func @transform_3(%arg0: i32) -> (i32, i32, i32) {
    %c0_i32 = arith.constant 0 : i32
    %c0_i32_0 = arith.constant 0 : i32
    %c0_i32_1 = arith.constant 0 : i32
    %c0_i32_2 = arith.constant 0 : i32
    return %c0_i32, %c0_i32_0, %c0_i32_1 : i32, i32, i32
  }
  func.func @transform_4(%arg0: i32) -> (i32, i32, i32) {
    %c0_i32 = arith.constant 0 : i32
    %c0_i32_0 = arith.constant 0 : i32
    %c0_i32_1 = arith.constant 0 : i32
    %c0_i32_2 = arith.constant 0 : i32
    return %c0_i32, %c0_i32_0, %c0_i32_1 : i32, i32, i32
  }
  func.func @transform_5(%arg0: i32) -> (i32, i32) {
    %c0_i32 = arith.constant 0 : i32
    %c0_i32_0 = arith.constant 0 : i32
    %c0_i32_1 = arith.constant 0 : i32
    return %c0_i32, %c0_i32_0 : i32, i32
  }
  func.func @transform_6(%arg0: i32) -> (i32, i32) {
    %c0_i32 = arith.constant 0 : i32
    %c0_i32_0 = arith.constant 0 : i32
    %c0_i32_1 = arith.constant 0 : i32
    return %c0_i32, %c0_i32_0 : i32, i32
  }
  func.func @transform_7(%arg0: i32) -> (i32, i32, i32) {
    %c0_i32 = arith.constant 0 : i32
    %c0_i32_0 = arith.constant 0 : i32
    %c0_i32_1 = arith.constant 0 : i32
    %c0_i32_2 = arith.constant 0 : i32
    return %c0_i32, %c0_i32_0, %c0_i32_1 : i32, i32, i32
  }
  func.func @transform_8(%arg0: i32) -> (i32, i32) {
    %c0_i32 = arith.constant 0 : i32
    %c0_i32_0 = arith.constant 0 : i32
    %c0_i32_1 = arith.constant 0 : i32
    return %c0_i32, %c0_i32_0 : i32, i32
  }
  func.func @transform_9(%arg0: i32) -> (i32, i32) {
    %c0_i32 = arith.constant 0 : i32
    %c0_i32_0 = arith.constant 0 : i32
    %c0_i32_1 = arith.constant 0 : i32
    return %c0_i32, %c0_i32_0 : i32, i32
  }
  func.func @transform_10(%arg0: i32) -> (i32, i32) {
    %c0_i32 = arith.constant 0 : i32
    %c0_i32_0 = arith.constant 0 : i32
    %c0_i32_1 = arith.constant 0 : i32
    return %c0_i32, %c0_i32_0 : i32, i32
  }
  func.func @transform_11(%arg0: i32) -> (i32, i32, i32) {
    %c0_i32 = arith.constant 0 : i32
    %c0_i32_0 = arith.constant 0 : i32
    %c0_i32_1 = arith.constant 0 : i32
    return %arg0, %c0_i32, %c0_i32_0 : i32, i32, i32
  }
}

</mosaic_0001>

<llo_original>
// kernel: tpu_custom_call.1
$region0: #{tpu_custom_call.1}
  #allocation0 [shape = 'u32[]', space=smem, size = 0x4, offset = 0x4, fixed_abs, tag = 'smem constant byte address 0x4 - core index']
  #allocation1 [shape = 'u32[144,128]{1,0:T(1,128)}', space=vmem, size = 0x12000, scoped, tag = 'internal scratch']
  %s0 = inlined_call_operand.vmem [shape: f32[2,64,24], index: 0, kind: input, shape index: {}]
  %s1 = inlined_call_operand.vmem [shape: f32[24,24], index: 1, kind: input, shape index: {}]
  %s2 = inlined_call_operand.vmem [shape: f32[1,24], index: 2, kind: input, shape index: {}]
  %s3 = inlined_call_operand.vmem [shape: f32[27,64,24], index: 3, kind: input, shape index: {}]
  %s4 = inlined_call_operand.vmem [shape: f32[3,24,24], index: 4, kind: input, shape index: {}]
  %s5 = inlined_call_operand.vmem [shape: f32[1,24], index: 5, kind: input, shape index: {}]
  %s6 = inlined_call_operand.vmem [shape: f32[24,24], index: 6, kind: input, shape index: {}]
  %s7 = inlined_call_operand.vmem [shape: f32[9,64,24], index: 7, kind: input, shape index: {}]
  %s8 = inlined_call_operand.vmem [shape: f32[1,24], index: 8, kind: input, shape index: {}]
  %s9 = inlined_call_operand.vmem [shape: f32[24,128], index: 9, kind: input, shape index: {}]
  %s10 = inlined_call_operand.vmem [shape: f32[1,128], index: 10, kind: input, shape index: {}]
  %s11 = inlined_call_operand.hbm [shape: f32[2,64,128], index: 11, kind: output, shape index: {}]
  %s12 = sld [smem:[#allocation0]]
  $region77: #{tpu_custom_call.1} parent=0
    _
  %s14 = ssub.s32 1, %s12
  %s15 = scalar_select 0, %s14, %s12
  $region1: #{tpu_custom_call.1} parent=0
    #allocation2 [shape = 'u8[65536]{0}', space=vmem, size = 0x10000, scoped, tag = 'output window, operand 0']
    #allocation3 [shape = 's32[2]{0}', space=sflag, size = 0x8, scoped, tag = 'scoped memory for tpu_custom_call.1']
    %16 = vsyncpa [#allocation3], 0
    %s17 = scalar_lea.sflag [#allocation3], 1
    %18 = vsyncpa %s17, 0
    loop: start=0, step=1, limit=4
    $region2: #{tpu_custom_call.1} parent=1 // loop_pre_header
      _
    $region3: #{tpu_custom_call.1} parent=1 // loop_header
      %s20 = sphi 0, %s24
      %p21 = scmp.ge.s32.totalorder %s20, 4
      %s30 = sphi 0, %s32
      %s33 = sphi 0, %s30
      %s34 = sphi 0, %s33
      %s50 = sphi 0, %s34
      %s54 = sphi 0, %s54
      %s56 = sphi 0, %s54
      %s57 = sphi 0, %s56
      %s71 = sphi 0, %s57
      %s75 = sphi 0, %s75
      %s77 = sphi 0, %s75
      %s78 = sphi 0, %s77
      %s92 = sphi 0, %s78
      %s96 = sphi 0, %s96
      %s98 = sphi 0, %s96
      %s99 = sphi 0, %s98
      %s113 = sphi 0, %s99
      %s117 = sphi 0, %s117
      %s119 = sphi 0, %s117
      %s120 = sphi 0, %s119
      %s134 = sphi 0, %s120
      %s138 = sphi 0, %s138
      %s140 = sphi 0, %s138
      %s141 = sphi 0, %s140
      %s155 = sphi 0, %s141
      %s159 = sphi 0, %s159
      %s161 = sphi 0, %s159
      %s162 = sphi 0, %s161
      %s176 = sphi 0, %s162
      %s180 = sphi 0, %s180
      %s182 = sphi 0, %s180
      %s183 = sphi 0, %s182
      %s197 = sphi 0, %s183
      %s201 = sphi 0, %s201
      %s203 = sphi 0, %s201
      %s204 = sphi 0, %s203
      %s218 = sphi 0, %s204
      %s222 = sphi 0, %s222
      %s224 = sphi 0, %s222
      %s225 = sphi 0, %s224
      %s239 = sphi 0, %s225
      %s243 = sphi 0, %s243
      %s245 = sphi 0, %s243
      %s246 = sphi 0, %s245
      %s260 = sphi 0, %s246
      %s266 = sphi 0, %s268
      %s269 = sphi 0, %s266
      %s270 = sphi 0, %s269
      %s286 = sphi 0, %s270
    $region4: #{tpu_custom_call.1} parent=1 // loop_header_branch
      %23 = sbr.rel (%p21) target = $region8
    $region5: #{tpu_custom_call.1} parent=1 // loop_body
      %s25 = ssub.s32 %s20, 1
      %s26 = ssub.s32 %s20, 2
      %s27 = sadd.s32 %s20, 1
      %s28 = ssub.s32 %s20, %s27
      %p29 = scmp.eq.s32.totalorder %s28, 0
      %s31 = sadd.s32 %s30, 1
      %s32 = scalar_select %p29, %s30, %s31
      %p35 = pneg %p29
      %p36 = scmp.eq.s32.totalorder %s20, 1
      %p37 = por %p35, %p36
      %p38 = scmp.ne.s32.totalorder %s30, %s33
      %p39 = scmp.eq.s32.totalorder %s20, 0
      %p40 = por %p38, %p39
      %p41 = scmp.ne.s32.totalorder %s30, %s33
      %p42 = scmp.eq.s32.totalorder %s25, 1
      %p43 = por %p41, %p42
      %p44 = scmp.ne.s32.totalorder %s33, %s34
      %p45 = scmp.eq.s32.totalorder %s25, 0
      %p46 = por %p44, %p45
      %p47 = scmp.ne.s32.totalorder %s33, %s34
      %p48 = scmp.eq.s32.totalorder %s26, 1
      %p49 = por %p47, %p48
      %p51 = scmp.ne.s32.totalorder %s34, %s50
      %p52 = scmp.eq.s32.totalorder %s26, 0
      %p53 = por %p51, %p52
      %s55 = sadd.s32 %s54, 1
      %p58 = scmp.eq.s32.totalorder %s20, 1
      %p59 = scmp.ne.s32.totalorder %s54, %s56
      %p60 = scmp.eq.s32.totalorder %s20, 0
      %p61 = por %p59, %p60
      %p62 = scmp.ne.s32.totalorder %s54, %s56
      %p63 = scmp.eq.s32.totalorder %s25, 1
      %p64 = por %p62, %p63
      %p65 = scmp.ne.s32.totalorder %s56, %s57
      %p66 = scmp.eq.s32.totalorder %s25, 0
      %p67 = por %p65, %p66
      %p68 = scmp.ne.s32.totalorder %s56, %s57
      %p69 = scmp.eq.s32.totalorder %s26, 1
      %p70 = por %p68, %p69
      %p72 = scmp.ne.s32.totalorder %s57, %s71
      %p73 = scmp.eq.s32.totalorder %s26, 0
      %p74 = por %p72, %p73
      %s76 = sadd.s32 %s75, 1
      %p79 = scmp.eq.s32.totalorder %s20, 1
      %p80 = scmp.ne.s32.totalorder %s75, %s77
      %p81 = scmp.eq.s32.totalorder %s20, 0
      %p82 = por %p80, %p81
      %p83 = scmp.ne.s32.totalorder %s75, %s77
      %p84 = scmp.eq.s32.totalorder %s25, 1
      %p85 = por %p83, %p84
      %p86 = scmp.ne.s32.totalorder %s77, %s78
      %p87 = scmp.eq.s32.totalorder %s25, 0
      %p88 = por %p86, %p87
      %p89 = scmp.ne.s32.totalorder %s77, %s78
      %p90 = scmp.eq.s32.totalorder %s26, 1
      %p91 = por %p89, %p90
      %p93 = scmp.ne.s32.totalorder %s78, %s92
      %p94 = scmp.eq.s32.totalorder %s26, 0
      %p95 = por %p93, %p94
      %s97 = sadd.s32 %s96, 1
      %p100 = scmp.eq.s32.totalorder %s20, 1
      %p101 = scmp.ne.s32.totalorder %s96, %s98
      %p102 = scmp.eq.s32.totalorder %s20, 0
      %p103 = por %p101, %p102
      %p104 = scmp.ne.s32.totalorder %s96, %s98
      %p105 = scmp.eq.s32.totalorder %s25, 1
      %p106 = por %p104, %p105
      %p107 = scmp.ne.s32.totalorder %s98, %s99
      %p108 = scmp.eq.s32.totalorder %s25, 0
      %p109 = por %p107, %p108
      %p110 = scmp.ne.s32.totalorder %s98, %s99
      %p111 = scmp.eq.s32.totalorder %s26, 1
      %p112 = por %p110, %p111
      %p114 = scmp.ne.s32.totalorder %s99, %s113
      %p115 = scmp.eq.s32.totalorder %s26, 0
      %p116 = por %p114, %p115
      %s118 = sadd.s32 %s117, 1
      %p121 = scmp.eq.s32.totalorder %s20, 1
      %p122 = scmp.ne.s32.totalorder %s117, %s119
      %p123 = scmp.eq.s32.totalorder %s20, 0
      %p124 = por %p122, %p123
      %p125 = scmp.ne.s32.totalorder %s117, %s119
      %p126 = scmp.eq.s32.totalorder %s25, 1
      %p127 = por %p125, %p126
      %p128 = scmp.ne.s32.totalorder %s119, %s120
      %p129 = scmp.eq.s32.totalorder %s25, 0
      %p130 = por %p128, %p129
      %p131 = scmp.ne.s32.totalorder %s119, %s120
      %p132 = scmp.eq.s32.totalorder %s26, 1
      %p133 = por %p131, %p132
      %p135 = scmp.ne.s32.totalorder %s120, %s134
      %p136 = scmp.eq.s32.totalorder %s26, 0
      %p137 = por %p135, %p136
      %s139 = sadd.s32 %s138, 1
      %p142 = scmp.eq.s32.totalorder %s20, 1
      %p143 = scmp.ne.s32.totalorder %s138, %s140
      %p144 = scmp.eq.s32.totalorder %s20, 0
      %p145 = por %p143, %p144
      %p146 = scmp.ne.s32.totalorder %s138, %s140
      %p147 = scmp.eq.s32.totalorder %s25, 1
      %p148 = por %p146, %p147
      %p149 = scmp.ne.s32.totalorder %s140, %s141
      %p150 = scmp.eq.s32.totalorder %s25, 0
      %p151 = por %p149, %p150
      %p152 = scmp.ne.s32.totalorder %s140, %s141
      %p153 = scmp.eq.s32.totalorder %s26, 1
      %p154 = por %p152, %p153
      %p156 = scmp.ne.s32.totalorder %s141, %s155
      %p157 = scmp.eq.s32.totalorder %s26, 0
      %p158 = por %p156, %p157
      %s160 = sadd.s32 %s159, 1
      %p163 = scmp.eq.s32.totalorder %s20, 1
      %p164 = scmp.ne.s32.totalorder %s159, %s161
      %p165 = scmp.eq.s32.totalorder %s20, 0
      %p166 = por %p164, %p165
      %p167 = scmp.ne.s32.totalorder %s159, %s161
      %p168 = scmp.eq.s32.totalorder %s25, 1
      %p169 = por %p167, %p168
      %p170 = scmp.ne.s32.totalorder %s161, %s162
      %p171 = scmp.eq.s32.totalorder %s25, 0
      %p172 = por %p170, %p171
      %p173 = scmp.ne.s32.totalorder %s161, %s162
      %p174 = scmp.eq.s32.totalorder %s26, 1
      %p175 = por %p173, %p174
      %p177 = scmp.ne.s32.totalorder %s162, %s176
      %p178 = scmp.eq.s32.totalorder %s26, 0
      %p179 = por %p177, %p178
      %s181 = sadd.s32 %s180, 1
      %p184 = scmp.eq.s32.totalorder %s20, 1
      %p185 = scmp.ne.s32.totalorder %s180, %s182
      %p186 = scmp.eq.s32.totalorder %s20, 0
      %p187 = por %p185, %p186
      %p188 = scmp.ne.s32.totalorder %s180, %s182
      %p189 = scmp.eq.s32.totalorder %s25, 1
      %p190 = por %p188, %p189
      %p191 = scmp.ne.s32.totalorder %s182, %s183
      %p192 = scmp.eq.s32.totalorder %s25, 0
      %p193 = por %p191, %p192
      %p194 = scmp.ne.s32.totalorder %s182, %s183
      %p195 = scmp.eq.s32.totalorder %s26, 1
      %p196 = por %p194, %p195
      %p198 = scmp.ne.s32.totalorder %s183, %s197
      %p199 = scmp.eq.s32.totalorder %s26, 0
      %p200 = por %p198, %p199
      %s202 = sadd.s32 %s201, 1
      %p205 = scmp.eq.s32.totalorder %s20, 1
      %p206 = scmp.ne.s32.totalorder %s201, %s203
      %p207 = scmp.eq.s32.totalorder %s20, 0
      %p208 = por %p206, %p207
      %p209 = scmp.ne.s32.totalorder %s201, %s203
      %p210 = scmp.eq.s32.totalorder %s25, 1
      %p211 = por %p209, %p210
      %p212 = scmp.ne.s32.totalorder %s203, %s204
      %p213 = scmp.eq.s32.totalorder %s25, 0
      %p214 = por %p212, %p213
      %p215 = scmp.ne.s32.totalorder %s203, %s204
      %p216 = scmp.eq.s32.totalorder %s26, 1
      %p217 = por %p215, %p216
      %p219 = scmp.ne.s32.totalorder %s204, %s218
      %p220 = scmp.eq.s32.totalorder %s26, 0
      %p221 = por %p219, %p220
      %s223 = sadd.s32 %s222, 1
      %p226 = scmp.eq.s32.totalorder %s20, 1
      %p227 = scmp.ne.s32.totalorder %s222, %s224
      %p228 = scmp.eq.s32.totalorder %s20, 0
      %p229 = por %p227, %p228
      %p230 = scmp.ne.s32.totalorder %s222, %s224
      %p231 = scmp.eq.s32.totalorder %s25, 1
      %p232 = por %p230, %p231
      %p233 = scmp.ne.s32.totalorder %s224, %s225
      %p234 = scmp.eq.s32.totalorder %s25, 0
      %p235 = por %p233, %p234
      %p236 = scmp.ne.s32.totalorder %s224, %s225
      %p237 = scmp.eq.s32.totalorder %s26, 1
      %p238 = por %p236, %p237
      %p240 = scmp.ne.s32.totalorder %s225, %s239
      %p241 = scmp.eq.s32.totalorder %s26, 0
      %p242 = por %p240, %p241
      %s244 = sadd.s32 %s243, 1
      %p247 = scmp.eq.s32.totalorder %s20, 1
      %p248 = scmp.ne.s32.totalorder %s243, %s245
      %p249 = scmp.eq.s32.totalorder %s20, 0
      %p250 = por %p248, %p249
      %p251 = scmp.ne.s32.totalorder %s243, %s245
      %p252 = scmp.eq.s32.totalorder %s25, 1
      %p253 = por %p251, %p252
      %p254 = scmp.ne.s32.totalorder %s245, %s246
      %p255 = scmp.eq.s32.totalorder %s25, 0
      %p256 = por %p254, %p255
      %p257 = scmp.ne.s32.totalorder %s245, %s246
      %p258 = scmp.eq.s32.totalorder %s26, 1
      %p259 = por %p257, %p258
      %p261 = scmp.ne.s32.totalorder %s246, %s260
      %p262 = scmp.eq.s32.totalorder %s26, 0
      %p263 = por %p261, %p262
      %s264 = ssub.s32 %s20, %s27
      %p265 = scmp.eq.s32.totalorder %s264, 0
      %s267 = sadd.s32 %s266, 1
      %s268 = scalar_select %p265, %s266, %s267
      %p271 = pneg %p265
      %p272 = scmp.eq.s32.totalorder %s20, 1
      %p273 = por %p271, %p272
      %p274 = scmp.ne.s32.totalorder %s266, %s269
      %p275 = scmp.eq.s32.totalorder %s20, 0
      %p276 = por %p274, %p275
      %p277 = scmp.ne.s32.totalorder %s266, %s269
      %p278 = scmp.eq.s32.totalorder %s25, 1
      %p279 = por %p277, %p278
      %p280 = scmp.ne.s32.totalorder %s269, %s270
      %p281 = scmp.eq.s32.totalorder %s25, 0
      %p282 = por %p280, %p281
      %p283 = scmp.ne.s32.totalorder %s269, %s270
      %p284 = scmp.eq.s32.totalorder %s26, 1
      %p285 = por %p283, %p284
      %p287 = scmp.ne.s32.totalorder %s270, %s286
      %p288 = scmp.eq.s32.totalorder %s26, 0
      %p289 = por %p287, %p288
      %p290 = scmp.le.s32.totalorder 1, %s20
      %p291 = scmp.lt.s32.totalorder %s20, 3
      %p292 = pnand %p290, %p291
      %p293 = pneg %p292
      // Predicated region
      $region9: #{tpu_custom_call.1} parent=5 // pred_check
        _
      $region10: #{tpu_custom_call.1} parent=5 // pred_check_branch
        %295 = sbr.rel (%p292) target = $region12
      $region11: #{tpu_custom_call.1} parent=5 // pred_region
        %s296 = ssub.s32 %s20, 1
        // Predicated region
        $region13: #{tpu_custom_call.1} parent=11 // pred_check
          %p297 = pneg %p67
        $region14: #{tpu_custom_call.1} parent=11 // pred_check_branch
          %299 = sbr.rel (%p297) target = $region16
        $region15: #{tpu_custom_call.1} parent=11 // pred_region
          _
        $region16: #{tpu_custom_call.1} parent=11 // pred_fallthru
          _
        // Predicated region
        $region17: #{tpu_custom_call.1} parent=11 // pred_check
          %p300 = pneg %p88
        $region18: #{tpu_custom_call.1} parent=11 // pred_check_branch
          %302 = sbr.rel (%p300) target = $region20
        $region19: #{tpu_custom_call.1} parent=11 // pred_region
          _
        $region20: #{tpu_custom_call.1} parent=11 // pred_fallthru
          _
        // Predicated region
        $region21: #{tpu_custom_call.1} parent=11 // pred_check
          %p303 = pneg %p109
        $region22: #{tpu_custom_call.1} parent=11 // pred_check_branch
          %305 = sbr.rel (%p303) target = $region24
        $region23: #{tpu_custom_call.1} parent=11 // pred_region
          _
        $region24: #{tpu_custom_call.1} parent=11 // pred_fallthru
          _
        // Predicated region
        $region25: #{tpu_custom_call.1} parent=11 // pred_check
          %p306 = pneg %p130
        $region26: #{tpu_custom_call.1} parent=11 // pred_check_branch
          %308 = sbr.rel (%p306) target = $region28
        $region27: #{tpu_custom_call.1} parent=11 // pred_region
          _
        $region28: #{tpu_custom_call.1} parent=11 // pred_fallthru
          _
        // Predicated region
        $region29: #{tpu_custom_call.1} parent=11 // pred_check
          %p309 = pneg %p151
        $region30: #{tpu_custom_call.1} parent=11 // pred_check_branch
          %311 = sbr.rel (%p309) target = $region32
        $region31: #{tpu_custom_call.1} parent=11 // pred_region
          _
        $region32: #{tpu_custom_call.1} parent=11 // pred_fallthru
          _
        // Predicated region
        $region33: #{tpu_custom_call.1} parent=11 // pred_check
          %p312 = pneg %p172
        $region34: #{tpu_custom_call.1} parent=11 // pred_check_branch
          %314 = sbr.rel (%p312) target = $region36
        $region35: #{tpu_custom_call.1} parent=11 // pred_region
          _
        $region36: #{tpu_custom_call.1} parent=11 // pred_fallthru
          _
        // Predicated region
        $region37: #{tpu_custom_call.1} parent=11 // pred_check
          %p315 = pneg %p193
        $region38: #{tpu_custom_call.1} parent=11 // pred_check_branch
          %317 = sbr.rel (%p315) target = $region40
        $region39: #{tpu_custom_call.1} parent=11 // pred_region
          _
        $region40: #{tpu_custom_call.1} parent=11 // pred_fallthru
          _
        // Predicated region
        $region41: #{tpu_custom_call.1} parent=11 // pred_check
          %p318 = pneg %p214
        $region42: #{tpu_custom_call.1} parent=11 // pred_check_branch
          %320 = sbr.rel (%p318) target = $region44
        $region43: #{tpu_custom_call.1} parent=11 // pred_region
          _
        $region44: #{tpu_custom_call.1} parent=11 // pred_fallthru
          _
        // Predicated region
        $region45: #{tpu_custom_call.1} parent=11 // pred_check
          %p321 = pneg %p235
        $region46: #{tpu_custom_call.1} parent=11 // pred_check_branch
          %323 = sbr.rel (%p321) target = $region48
        $region47: #{tpu_custom_call.1} parent=11 // pred_region
          _
        $region48: #{tpu_custom_call.1} parent=11 // pred_fallthru
          _
        // Predicated region
        $region49: #{tpu_custom_call.1} parent=11 // pred_check
          %p324 = pneg %p256
        $region50: #{tpu_custom_call.1} parent=11 // pred_check_branch
          %326 = sbr.rel (%p324) target = $region52
        $region51: #{tpu_custom_call.1} parent=11 // pred_region
          _
        $region52: #{tpu_custom_call.1} parent=11 // pred_fallthru
          _
      $region12: #{tpu_custom_call.1} parent=5 // pred_fallthru
        _
      %p327 = scmp.lt.s32.totalorder %s20, 2
      // Predicated region
      $region53: #{tpu_custom_call.1} parent=5 // pred_check
        %p328 = pneg %p327
      $region54: #{tpu_custom_call.1} parent=5 // pred_check_branch
        %330 = sbr.rel (%p328) target = $region56
      $region55: #{tpu_custom_call.1} parent=5 // pred_region
        // Predicated region
        $region57: #{tpu_custom_call.1} parent=55 // pred_check
          %p331 = pneg %p40
        $region58: #{tpu_custom_call.1} parent=55 // pred_check_branch
          %333 = sbr.rel (%p331) target = $region60
        $region59: #{tpu_custom_call.1} parent=55 // pred_region
          %p334 = scmp.lt.s32.totalorder %s20, 1
          %s335 = scalar_select %p334, %s20, 1
          %s336 = smul.addr %s335, 8
          %s337 = smul.addr %s336, 8
          %s338 = scalar_lea.vmem %s0, %s337
        $region60: #{tpu_custom_call.1} parent=55 // pred_fallthru
          _
      $region56: #{tpu_custom_call.1} parent=5 // pred_fallthru
        _
      %p339 = scmp.le.s32.totalorder 1, %s20
      %p340 = scmp.lt.s32.totalorder %s20, 3
      %p341 = pnand %p339, %p340
      %p342 = pneg %p341
      // Predicated region
      $region61: #{tpu_custom_call.1} parent=5 // pred_check
        _
      $region62: #{tpu_custom_call.1} parent=5 // pred_check_branch
        %344 = sbr.rel (%p341) target = $region64
      $region63: #{tpu_custom_call.1} parent=5 // pred_region
        %s345 = ssub.s32 %s20, 1
        %p346 = scmp.lt.s32.totalorder %s25, 1
        %s347 = scalar_select %p346, %s25, 1
        %s348 = smul.addr %s347, 8
        %s349 = smul.addr %s348, 8
        %s350 = scalar_lea.vmem %s0, %s349
        %p351 = pneg %p46
        %p352 = pneg %p43
        %p353 = pneg %p67
        %p354 = pneg %p64
        %p355 = pneg %p88
        %p356 = pneg %p85
        %p357 = pneg %p109
        %p358 = pneg %p106
        %p359 = pneg %p130
        %p360 = pneg %p127
        %p361 = pneg %p151
        %p362 = pneg %p148
        %p363 = pneg %p172
        %p364 = pneg %p169
        %p365 = pneg %p193
        %p366 = pneg %p190
        %p367 = pneg %p214
        %p368 = pneg %p211
        %p369 = pneg %p235
        %p370 = pneg %p232
        %p371 = pneg %p256
        %p372 = pneg %p253
        %p373 = pneg %p282
        %p374 = pneg %p279
        %s375 = sand.u32 %s269, 1
        %s376 = scalar_lea.sflag [#allocation3], %s375
        %s377 = sand.u32 %s269, 1
        %s378 = smul.addr %s377, 64
        %s379 = scalar_lea.vmem [#allocation2], %s378
        %p380 = scmp.lt.s32.totalorder %s25, 1
        %s381 = scalar_select %p380, %s25, 1
        %s382 = smul.addr %s381, 8
        %s383 = smul.addr %s382, 8
        %s384 = scalar_lea.vmem %s0, %s383
        %v385 = vld [vmem:[%s384] sm:$0xff]
        %v386 = vld [vmem:[%s384 + $0x8] sm:$0xff]
        %v387 = vld [vmem:[%s384 + $0x10] sm:$0xff]
        %v388 = vld [vmem:[%s384 + $0x18] sm:$0xff]
        %v389 = vld [vmem:[%s384 + $0x20] sm:$0xff]
        %v390 = vld [vmem:[%s384 + $0x28] sm:$0xff]
        %v391 = vld [vmem:[%s384 + $0x30] sm:$0xff]
        %v392 = vld [vmem:[%s384 + $0x38] sm:$0xff]
        %v393 = vld [vmem:[%s1] sm:$0xff]
        %v394 = vld [vmem:[%s1 + $0x8] sm:$0xff]
        %v395 = vld [vmem:[%s1 + $0x10] sm:$0xff]
        %v396 = vld [vmem:[%s2] sm:$0x1]
        %v398 = vlaneseq
        %v399 = vshrl.u32 %v398, 7
        %v400 = vsub.s32 0, %v399
        %v401 = vrot.slane %v396, %v400
        %vm403 = vcmask 195584
        %v405 = vsel %vm403, %v385, 0
        %v408 = vsel %vm403, %v386, 0
        %v411 = vsel %vm403, %v387, 0
        %v414 = vsel %vm403, %v388, 0
        %v417 = vsel %vm403, %v389, 0
        %v420 = vsel %vm403, %v390, 0
        %v423 = vsel %vm403, %v391, 0
        %v426 = vsel %vm403, %v392, 0
        %428 = vmatprep.subr.mxu0 0.0
        %429 = vmatpush1.msra.mxu0 %v393
        %430 = vmatprep.subr.mxu0 0.0
        %431 = vmatpush1.msra.mxu0 %v394
        %432 = vmatprep.subr.mxu0 0.0
        %433 = vmatpush1.msra.mxu0 %v395
        %434 = vmatprep.subr.mxu0 0.0
        %435 = vmatpush1.msra.mxu0 0.0
        %436 = vmatprep.subr.mxu0 0.0
        %437 = vmatpush1.msra.mxu0 0.0
        %438 = vmatprep.subr.mxu0 0.0
        %439 = vmatpush1.msra.mxu0 0.0
        %440 = vmatprep.subr.mxu0 0.0
        %441 = vmatpush1.msra.mxu0 0.0
        %442 = vmatprep.subr.mxu0 0.0
        %443 = vmatpush1.msra.mxu0 0.0
        %444 = vmatprep.subr.mxu0 0.0
        %445 = vmatpush1.msra.mxu0 0.0
        %446 = vmatprep.subr.mxu0 0.0
        %447 = vmatpush1.msra.mxu0 0.0
        %448 = vmatprep.subr.mxu0 0.0
        %449 = vmatpush1.msra.mxu0 0.0
        %450 = vmatprep.subr.mxu0 0.0
        %451 = vmatpush1.msra.mxu0 0.0
        %452 = vmatprep.subr.mxu0 0.0
        %453 = vmatpush1.msra.mxu0 0.0
        %454 = vmatprep.subr.mxu0 0.0
        %455 = vmatpush1.msra.mxu0 0.0
        %456 = vmatprep.subr.mxu0 0.0
        %457 = vmatpush1.msra.mxu0 0.0
        %458 = vmatprep.subr.mxu0 0.0
        %459 = vmatpush1.msra.mxu0 0.0
        %460 = vmatprep.subr.mxu0 0.0
        %461 = vmatpush1.msra.mxu0 0.0
        %462 = vmatprep.subr.mxu0 0.0
        %463 = vmatpush1.msra.mxu0 0.0
        %464 = vmatprep.subr.mxu0 0.0
        %465 = vmatpush1.msra.mxu0 0.0
        %466 = vmatprep.subr.mxu0 0.0
        %467 = vmatpush1.msra.mxu0 0.0
        %468 = vmatprep.subr.mxu0 0.0
        %469 = vmatpush1.msra.mxu0 0.0
        %470 = vmatprep.subr.mxu0 0.0
        %471 = vmatpush1.msra.mxu0 0.0
        %472 = vmatprep.subr.mxu0 0.0
        %473 = vmatpush1.msra.mxu0 0.0
        %474 = vmatprep.subr.mxu0 0.0
        %475 = vmatpush1.msra.mxu0 0.0
        %476 = vmatprep.subr.mxu0 0.0
        %477 = vmatpush1.msra.mxu0 0.0
        %478 = vmatprep.subr.mxu0 0.0
        %479 = vmatpush1.msra.mxu0 0.0
        %480 = vmatprep.subr.mxu0 0.0
        %481 = vmatpush1.msra.mxu0 0.0
        %482 = vmatprep.subr.mxu0 0.0
        %483 = vmatpush1.msra.mxu0 0.0
        %484 = vmatprep.subr.mxu0 0.0
        %485 = vmatpush1.msra.mxu0 0.0
        %486 = vmatprep.subr.mxu0 0.0
        %487 = vmatpush1.msra.mxu0 0.0
        %488 = vmatprep.subr.mxu0 0.0
        %489 = vmatpush1.msra.mxu0 0.0
        %490 = vmatprep.subr.mxu0 0.0
        %491 = vmatpush1.msra.mxu0 0.0
        %492 = vmatprep.mubr.f32.mxu0 0.0
        %493 = vmatmul.mubr.f32.gmra.mrb[0].mxu0 %v405
        %v494 = vpop.f32.mrb[0].mxu0
        %v495 = vadd.f32 %v401, %v494
        %v496 = vpop.f32.mrb[0].mxu0
        %497 = vmatprep.mubr.f32.mxu0 0.0
        %498 = vmatmul.mubr.f32.gmra.mrb[0].mxu0 %v408
        %v499 = vpop.f32.mrb[0].mxu0
        %v500 = vadd.f32 %v401, %v499
        %v501 = vpop.f32.mrb[0].mxu0
        %502 = vmatprep.mubr.f32.mxu0 0.0
        %503 = vmatmul.mubr.f32.gmra.mrb[0].mxu0 %v411
        %v504 = vpop.f32.mrb[0].mxu0
        %v505 = vadd.f32 %v401, %v504
        %v506 = vpop.f32.mrb[0].mxu0
        %507 = vmatprep.mubr.f32.mxu0 0.0
        %508 = vmatmul.mubr.f32.gmra.mrb[0].mxu0 %v414
        %v509 = vpop.f32.mrb[0].mxu0
        %v510 = vadd.f32 %v401, %v509
        %v511 = vpop.f32.mrb[0].mxu0
        %512 = vmatprep.mubr.f32.mxu0 0.0
        %513 = vmatmul.mubr.f32.gmra.mrb[0].mxu0 %v417
        %v514 = vpop.f32.mrb[0].mxu0
        %v515 = vadd.f32 %v401, %v514
        %v516 = vpop.f32.mrb[0].mxu0
        %517 = vmatprep.mubr.f32.mxu0 0.0
        %518 = vmatmul.mubr.f32.gmra.mrb[0].mxu0 %v420
        %v519 = vpop.f32.mrb[0].mxu0
        %v520 = vadd.f32 %v401, %v519
        %v521 = vpop.f32.mrb[0].mxu0
        %522 = vmatprep.mubr.f32.mxu0 0.0
        %523 = vmatmul.mubr.f32.gmra.mrb[0].mxu0 %v423
        %v524 = vpop.f32.mrb[0].mxu0
        %v525 = vadd.f32 %v401, %v524
        %v526 = vpop.f32.mrb[0].mxu0
        %527 = vmatprep.mubr.f32.mxu0 0.0
        %528 = vmatmul.mubr.f32.gmra.mrb[0].mxu0 %v426
        %v529 = vpop.f32.mrb[0].mxu0
        %v530 = vadd.f32 %v401, %v529
        %v531 = vpop.f32.mrb[0].mxu0
        %532 = vdwg.mxu0
        %v533 = vmul.f32 %v495, 0.5
        %v534 = vmul.f32 %v500, 0.5
        %v535 = vmul.f32 %v505, 0.5
        %v536 = vmul.f32 %v510, 0.5
        %v537 = vmul.f32 %v515, 0.5
        %v538 = vmul.f32 %v520, 0.5
        %v539 = vmul.f32 %v525, 0.5
        %v540 = vmul.f32 %v530, 0.5
        %v541 = vmul.f32 %v495, 0.044715
        %v542 = vmul.f32 %v500, 0.044715
        %v543 = vmul.f32 %v505, 0.044715
        %v544 = vmul.f32 %v510, 0.044715
        %v545 = vmul.f32 %v515, 0.044715
        %v546 = vmul.f32 %v520, 0.044715
        %v547 = vmul.f32 %v525, 0.044715
        %v548 = vmul.f32 %v530, 0.044715
        %v549 = vmul.f32 %v541, %v495
        %v550 = vmul.f32 %v542, %v500
        %v551 = vmul.f32 %v543, %v505
        %v552 = vmul.f32 %v544, %v510
        %v553 = vmul.f32 %v545, %v515
        %v554 = vmul.f32 %v546, %v520
        %v555 = vmul.f32 %v547, %v525
        %v556 = vmul.f32 %v548, %v530
        %v557 = vmul.f32 %v549, %v495
        %v558 = vmul.f32 %v550, %v500
        %v559 = vmul.f32 %v551, %v505
        %v560 = vmul.f32 %v552, %v510
        %v561 = vmul.f32 %v553, %v515
        %v562 = vmul.f32 %v554, %v520
        %v563 = vmul.f32 %v555, %v525
        %v564 = vmul.f32 %v556, %v530
        %v565 = vadd.f32 %v495, %v557
        %v566 = vadd.f32 %v500, %v558
        %v567 = vadd.f32 %v505, %v559
        %v568 = vadd.f32 %v510, %v560
        %v569 = vadd.f32 %v515, %v561
        %v570 = vadd.f32 %v520, %v562
        %v571 = vadd.f32 %v525, %v563
        %v572 = vadd.f32 %v530, %v564
        %v573 = vmul.f32 %v565, 0.7978846
        %v574 = vmul.f32 %v566, 0.7978846
        %v575 = vmul.f32 %v567, 0.7978846
        %v576 = vmul.f32 %v568, 0.7978846
        %v577 = vmul.f32 %v569, 0.7978846
        %v578 = vmul.f32 %v570, 0.7978846
        %v579 = vmul.f32 %v571, 0.7978846
        %v580 = vmul.f32 %v572, 0.7978846
        %v581 = vtanh.pop %v573
        %v582 = vtanh.pop %v574
        %v583 = vtanh.pop %v575
        %v584 = vtanh.pop %v576
        %v585 = vtanh.pop %v577
        %v586 = vtanh.pop %v578
        %v587 = vtanh.pop %v579
        %v588 = vtanh.pop %v580
        %v589 = vadd.f32 %v581, 1.0
        %v590 = vadd.f32 %v582, 1.0
        %v591 = vadd.f32 %v583, 1.0
        %v592 = vadd.f32 %v584, 1.0
        %v593 = vadd.f32 %v585, 1.0
        %v594 = vadd.f32 %v586, 1.0
        %v595 = vadd.f32 %v587, 1.0
        %v596 = vadd.f32 %v588, 1.0
        %v597 = vmul.f32 %v533, %v589
        %v598 = vmul.f32 %v534, %v590
        %v599 = vmul.f32 %v535, %v591
        %v600 = vmul.f32 %v536, %v592
        %v601 = vmul.f32 %v537, %v593
        %v602 = vmul.f32 %v538, %v594
        %v603 = vmul.f32 %v539, %v595
        %v604 = vmul.f32 %v540, %v596
        %v605 = vrot.slane %v597, 7
        %v606 = vrot.slane %v598, 7
        %v607 = vrot.slane %v599, 7
        %v608 = vrot.slane %v600, 7
        %v609 = vrot.slane %v601, 7
        %v610 = vrot.slane %v602, 7
        %v611 = vrot.slane %v603, 7
        %v612 = vrot.slane %v604, 7
        %v613 = vlaneseq
        %v614 = vshrl.u32 %v613, 7
        %vm615 = vcmp.lt.s32.totalorder %v614, 1
        %v616 = vsel %vm615, %v611, %v612
        %v617 = vsel %vm615, %v610, %v611
        %v618 = vsel %vm615, %v609, %v610
        %v619 = vsel %vm615, %v608, %v609
        %v620 = vsel %vm615, %v607, %v608
        %v621 = vsel %vm615, %v606, %v607
        %v622 = vsel %vm615, %v605, %v606
        %v623 = vsel %vm615, %v612, %v605
        %v624 = vld [vmem:[%s3] sm:$0xff]
        %v625 = vld [vmem:[%s3 + $0x8] sm:$0xff]
        %v626 = vld [vmem:[%s3 + $0x10] sm:$0xff]
        %v627 = vld [vmem:[%s3 + $0x18] sm:$0xff]
        %v628 = vld [vmem:[%s3 + $0x20] sm:$0xff]
        %v629 = vld [vmem:[%s3 + $0x28] sm:$0xff]
        %v630 = vld [vmem:[%s3 + $0x30] sm:$0xff]
        %v631 = vld [vmem:[%s3 + $0x38] sm:$0xff]
        %v632 = vmul.f32 %v616, %v624
        %v633 = vmul.f32 %v623, %v625
        %v634 = vmul.f32 %v622, %v626
        %v635 = vmul.f32 %v621, %v627
        %v636 = vmul.f32 %v620, %v628
        %v637 = vmul.f32 %v619, %v629
        %v638 = vmul.f32 %v618, %v630
        %v639 = vmul.f32 %v617, %v631
        %v640 = vadd.f32 %v632, 0.0
        %v641 = vadd.f32 %v633, 0.0
        %v642 = vadd.f32 %v634, 0.0
        %v643 = vadd.f32 %v635, 0.0
        %v644 = vadd.f32 %v636, 0.0
        %v645 = vadd.f32 %v637, 0.0
        %v646 = vadd.f32 %v638, 0.0
        %v647 = vadd.f32 %v639, 0.0
        %s648 = scalar_lea.vmem %s3, 192
        %v649 = vld [vmem:[%s648] sm:$0xff]
        %v650 = vld [vmem:[%s648 + $0x8] sm:$0xff]
        %v651 = vld [vmem:[%s648 + $0x10] sm:$0xff]
        %v652 = vld [vmem:[%s648 + $0x18] sm:$0xff]
        %v653 = vld [vmem:[%s648 + $0x20] sm:$0xff]
        %v654 = vld [vmem:[%s648 + $0x28] sm:$0xff]
        %v655 = vld [vmem:[%s648 + $0x30] sm:$0xff]
        %v656 = vld [vmem:[%s648 + $0x38] sm:$0xff]
        %v657 = vmul.f32 %v623, %v649
        %v658 = vmul.f32 %v622, %v650
        %v659 = vmul.f32 %v621, %v651
        %v660 = vmul.f32 %v620, %v652
        %v661 = vmul.f32 %v619, %v653
        %v662 = vmul.f32 %v618, %v654
        %v663 = vmul.f32 %v617, %v655
        %v664 = vmul.f32 %v616, %v656
        %v665 = vadd.f32 %v640, %v657
        %v666 = vadd.f32 %v641, %v658
        %v667 = vadd.f32 %v642, %v659
        %v668 = vadd.f32 %v643, %v660
        %v669 = vadd.f32 %v644, %v661
        %v670 = vadd.f32 %v645, %v662
        %v671 = vadd.f32 %v646, %v663
        %v672 = vadd.f32 %v647, %v664
        %s673 = scalar_lea.vmem %s3, 384
        %v674 = vld [vmem:[%s673] sm:$0xff]
        %v675 = vld [vmem:[%s673 + $0x8] sm:$0xff]
        %v676 = vld [vmem:[%s673 + $0x10] sm:$0xff]
        %v677 = vld [vmem:[%s673 + $0x18] sm:$0xff]
        %v678 = vld [vmem:[%s673 + $0x20] sm:$0xff]
        %v679 = vld [vmem:[%s673 + $0x28] sm:$0xff]
        %v680 = vld [vmem:[%s673 + $0x30] sm:$0xff]
        %v681 = vld [vmem:[%s673 + $0x38] sm:$0xff]
        %v682 = vmul.f32 %v622, %v674
        %v683 = vmul.f32 %v621, %v675
        %v684 = vmul.f32 %v620, %v676
        %v685 = vmul.f32 %v619, %v677
        %v686 = vmul.f32 %v618, %v678
        %v687 = vmul.f32 %v617, %v679
        %v688 = vmul.f32 %v616, %v680
        %v689 = vmul.f32 %v623, %v681
        %v690 = vadd.f32 %v665, %v682
        %v691 = vadd.f32 %v666, %v683
        %v692 = vadd.f32 %v667, %v684
        %v693 = vadd.f32 %v668, %v685
        %v694 = vadd.f32 %v669, %v686
        %v695 = vadd.f32 %v670, %v687
        %v696 = vadd.f32 %v671, %v688
        %v697 = vadd.f32 %v672, %v689
        %s698 = scalar_lea.vmem %s3, 64
        %v699 = vld [vmem:[%s698] sm:$0xff]
        %v700 = vld [vmem:[%s698 + $0x8] sm:$0xff]
        %v701 = vld [vmem:[%s698 + $0x10] sm:$0xff]
        %v702 = vld [vmem:[%s698 + $0x18] sm:$0xff]
        %v703 = vld [vmem:[%s698 + $0x20] sm:$0xff]
        %v704 = vld [vmem:[%s698 + $0x28] sm:$0xff]
        %v705 = vld [vmem:[%s698 + $0x30] sm:$0xff]
        %v706 = vld [vmem:[%s698 + $0x38] sm:$0xff]
        %v707 = vmul.f32 %v604, %v699
        %v708 = vmul.f32 %v597, %v700
        %v709 = vmul.f32 %v598, %v701
        %v710 = vmul.f32 %v599, %v702
        %v711 = vmul.f32 %v600, %v703
        %v712 = vmul.f32 %v601, %v704
        %v713 = vmul.f32 %v602, %v705
        %v714 = vmul.f32 %v603, %v706
        %v715 = vadd.f32 %v690, %v707
        %v716 = vadd.f32 %v691, %v708
        %v717 = vadd.f32 %v692, %v709
        %v718 = vadd.f32 %v693, %v710
        %v719 = vadd.f32 %v694, %v711
        %v720 = vadd.f32 %v695, %v712
        %v721 = vadd.f32 %v696, %v713
        %v722 = vadd.f32 %v697, %v714
        %s723 = scalar_lea.vmem %s3, 256
        %v724 = vld [vmem:[%s723] sm:$0xff]
        %v725 = vld [vmem:[%s723 + $0x8] sm:$0xff]
        %v726 = vld [vmem:[%s723 + $0x10] sm:$0xff]
        %v727 = vld [vmem:[%s723 + $0x18] sm:$0xff]
        %v728 = vld [vmem:[%s723 + $0x20] sm:$0xff]
        %v729 = vld [vmem:[%s723 + $0x28] sm:$0xff]
        %v730 = vld [vmem:[%s723 + $0x30] sm:$0xff]
        %v731 = vld [vmem:[%s723 + $0x38] sm:$0xff]
        %v732 = vmul.f32 %v597, %v724
        %v733 = vmul.f32 %v598, %v725
        %v734 = vmul.f32 %v599, %v726
        %v735 = vmul.f32 %v600, %v727
        %v736 = vmul.f32 %v601, %v728
        %v737 = vmul.f32 %v602, %v729
        %v738 = vmul.f32 %v603, %v730
        %v739 = vmul.f32 %v604, %v731
        %v740 = vadd.f32 %v715, %v732
        %v741 = vadd.f32 %v716, %v733
        %v742 = vadd.f32 %v717, %v734
        %v743 = vadd.f32 %v718, %v735
        %v744 = vadd.f32 %v719, %v736
        %v745 = vadd.f32 %v720, %v737
        %v746 = vadd.f32 %v721, %v738
        %v747 = vadd.f32 %v722, %v739
        %s748 = scalar_lea.vmem %s3, 448
        %v749 = vld [vmem:[%s748] sm:$0xff]
        %v750 = vld [vmem:[%s748 + $0x8] sm:$0xff]
        %v751 = vld [vmem:[%s748 + $0x10] sm:$0xff]
        %v752 = vld [vmem:[%s748 + $0x18] sm:$0xff]
        %v753 = vld [vmem:[%s748 + $0x20] sm:$0xff]
        %v754 = vld [vmem:[%s748 + $0x28] sm:$0xff]
        %v755 = vld [vmem:[%s748 + $0x30] sm:$0xff]
        %v756 = vld [vmem:[%s748 + $0x38] sm:$0xff]
        %v757 = vmul.f32 %v598, %v749
        %v758 = vmul.f32 %v599, %v750
        %v759 = vmul.f32 %v600, %v751
        %v760 = vmul.f32 %v601, %v752
        %v761 = vmul.f32 %v602, %v753
        %v762 = vmul.f32 %v603, %v754
        %v763 = vmul.f32 %v604, %v755
        %v764 = vmul.f32 %v597, %v756
        %v765 = vadd.f32 %v740, %v757
        %v766 = vadd.f32 %v741, %v758
        %v767 = vadd.f32 %v742, %v759
        %v768 = vadd.f32 %v743, %v760
        %v769 = vadd.f32 %v744, %v761
        %v770 = vadd.f32 %v745, %v762
        %v771 = vadd.f32 %v746, %v763
        %v772 = vadd.f32 %v747, %v764
        %v773 = vrot.slane %v597, 1
        %v774 = vrot.slane %v598, 1
        %v775 = vrot.slane %v599, 1
        %v776 = vrot.slane %v600, 1
        %v777 = vrot.slane %v601, 1
        %v778 = vrot.slane %v602, 1
        %v779 = vrot.slane %v603, 1
        %v780 = vrot.slane %v604, 1
        %vm781 = vcmp.lt.s32.totalorder %v614, 7
        %v782 = vsel %vm781, %v779, %v780
        %v783 = vsel %vm781, %v778, %v779
        %v784 = vsel %vm781, %v777, %v778
        %v785 = vsel %vm781, %v776, %v777
        %v786 = vsel %vm781, %v775, %v776
        %v787 = vsel %vm781, %v774, %v775
        %v788 = vsel %vm781, %v773, %v774
        %v789 = vsel %vm781, %v780, %v773
        %s790 = scalar_lea.vmem %s3, 128
        %v791 = vld [vmem:[%s790] sm:$0xff]
        %v792 = vld [vmem:[%s790 + $0x8] sm:$0xff]
        %v793 = vld [vmem:[%s790 + $0x10] sm:$0xff]
        %v794 = vld [vmem:[%s790 + $0x18] sm:$0xff]
        %v795 = vld [vmem:[%s790 + $0x20] sm:$0xff]
        %v796 = vld [vmem:[%s790 + $0x28] sm:$0xff]
        %v797 = vld [vmem:[%s790 + $0x30] sm:$0xff]
        %v798 = vld [vmem:[%s790 + $0x38] sm:$0xff]
        %v799 = vmul.f32 %v789, %v791
        %v800 = vmul.f32 %v788, %v792
        %v801 = vmul.f32 %v787, %v793
        %v802 = vmul.f32 %v786, %v794
        %v803 = vmul.f32 %v785, %v795
        %v804 = vmul.f32 %v784, %v796
        %v805 = vmul.f32 %v783, %v797
        %v806 = vmul.f32 %v782, %v798
        %v807 = vadd.f32 %v765, %v799
        %v808 = vadd.f32 %v766, %v800
        %v809 = vadd.f32 %v767, %v801
        %v810 = vadd.f32 %v768, %v802
        %v811 = vadd.f32 %v769, %v803
        %v812 = vadd.f32 %v770, %v804
        %v813 = vadd.f32 %v771, %v805
        %v814 = vadd.f32 %v772, %v806
        %s815 = scalar_lea.vmem %s3, 320
        %v816 = vld [vmem:[%s815] sm:$0xff]
        %v817 = vld [vmem:[%s815 + $0x8] sm:$0xff]
        %v818 = vld [vmem:[%s815 + $0x10] sm:$0xff]
        %v819 = vld [vmem:[%s815 + $0x18] sm:$0xff]
        %v820 = vld [vmem:[%s815 + $0x20] sm:$0xff]
        %v821 = vld [vmem:[%s815 + $0x28] sm:$0xff]
        %v822 = vld [vmem:[%s815 + $0x30] sm:$0xff]
        %v823 = vld [vmem:[%s815 + $0x38] sm:$0xff]
        %v824 = vmul.f32 %v788, %v816
        %v825 = vmul.f32 %v787, %v817
        %v826 = vmul.f32 %v786, %v818
        %v827 = vmul.f32 %v785, %v819
        %v828 = vmul.f32 %v784, %v820
        %v829 = vmul.f32 %v783, %v821
        %v830 = vmul.f32 %v782, %v822
        %v831 = vmul.f32 %v789, %v823
        %v832 = vadd.f32 %v807, %v824
        %v833 = vadd.f32 %v808, %v825
        %v834 = vadd.f32 %v809, %v826
        %v835 = vadd.f32 %v810, %v827
        %v836 = vadd.f32 %v811, %v828
        %v837 = vadd.f32 %v812, %v829
        %v838 = vadd.f32 %v813, %v830
        %v839 = vadd.f32 %v814, %v831
        %s840 = scalar_lea.vmem %s3, 512
        %v841 = vld [vmem:[%s840] sm:$0xff]
        %v842 = vld [vmem:[%s840 + $0x8] sm:$0xff]
        %v843 = vld [vmem:[%s840 + $0x10] sm:$0xff]
        %v844 = vld [vmem:[%s840 + $0x18] sm:$0xff]
        %v845 = vld [vmem:[%s840 + $0x20] sm:$0xff]
        %v846 = vld [vmem:[%s840 + $0x28] sm:$0xff]
        %v847 = vld [vmem:[%s840 + $0x30] sm:$0xff]
        %v848 = vld [vmem:[%s840 + $0x38] sm:$0xff]
        %v849 = vmul.f32 %v787, %v841
        %v850 = vmul.f32 %v786, %v842
        %v851 = vmul.f32 %v785, %v843
        %v852 = vmul.f32 %v784, %v844
        %v853 = vmul.f32 %v783, %v845
        %v854 = vmul.f32 %v782, %v846
        %v855 = vmul.f32 %v789, %v847
        %v856 = vmul.f32 %v788, %v848
        %v857 = vadd.f32 %v832, %v849
        %v858 = vadd.f32 %v833, %v850
        %v859 = vadd.f32 %v834, %v851
        %v860 = vadd.f32 %v835, %v852
        %v861 = vadd.f32 %v836, %v853
        %v862 = vadd.f32 %v837, %v854
        %v863 = vadd.f32 %v838, %v855
        %v864 = vadd.f32 %v839, %v856
        %v865 = vld [vmem:[%s4] sm:$0xff]
        %v866 = vld [vmem:[%s4 + $0x8] sm:$0xff]
        %v867 = vld [vmem:[%s4 + $0x10] sm:$0xff]
        %v868 = vrot.slane %v597, 6
        %v869 = vrot.slane %v598, 6
        %v870 = vrot.slane %v599, 6
        %v871 = vrot.slane %v600, 6
        %v872 = vrot.slane %v601, 6
        %v873 = vrot.slane %v602, 6
        %v874 = vrot.slane %v603, 6
        %v875 = vrot.slane %v604, 6
        %vm876 = vcmp.lt.s32.totalorder %v614, 2
        %v877 = vsel %vm876, %v874, %v875
        %v878 = vsel %vm876, %v873, %v874
        %v879 = vsel %vm876, %v872, %v873
        %v880 = vsel %vm876, %v871, %v872
        %v881 = vsel %vm876, %v870, %v871
        %v882 = vsel %vm876, %v869, %v870
        %v883 = vsel %vm876, %v868, %v869
        %v884 = vsel %vm876, %v875, %v868
        %s885 = scalar_lea.vmem %s3, 576
        %v886 = vld [vmem:[%s885] sm:$0xff]
        %v887 = vld [vmem:[%s885 + $0x8] sm:$0xff]
        %v888 = vld [vmem:[%s885 + $0x10] sm:$0xff]
        %v889 = vld [vmem:[%s885 + $0x18] sm:$0xff]
        %v890 = vld [vmem:[%s885 + $0x20] sm:$0xff]
        %v891 = vld [vmem:[%s885 + $0x28] sm:$0xff]
        %v892 = vld [vmem:[%s885 + $0x30] sm:$0xff]
        %v893 = vld [vmem:[%s885 + $0x38] sm:$0xff]
        %v894 = vmul.f32 %v878, %v886
        %v895 = vmul.f32 %v877, %v887
        %v896 = vmul.f32 %v884, %v888
        %v897 = vmul.f32 %v883, %v889
        %v898 = vmul.f32 %v882, %v890
        %v899 = vmul.f32 %v881, %v891
        %v900 = vmul.f32 %v880, %v892
        %v901 = vmul.f32 %v879, %v893
        %v902 = vadd.f32 %v894, 0.0
        %v903 = vadd.f32 %v895, 0.0
        %v904 = vadd.f32 %v896, 0.0
        %v905 = vadd.f32 %v897, 0.0
        %v906 = vadd.f32 %v898, 0.0
        %v907 = vadd.f32 %v899, 0.0
        %v908 = vadd.f32 %v900, 0.0
        %v909 = vadd.f32 %v901, 0.0
        %s910 = scalar_lea.vmem %s3, 768
        %v911 = vld [vmem:[%s910] sm:$0xff]
        %v912 = vld [vmem:[%s910 + $0x8] sm:$0xff]
        %v913 = vld [vmem:[%s910 + $0x10] sm:$0xff]
        %v914 = vld [vmem:[%s910 + $0x18] sm:$0xff]
        %v915 = vld [vmem:[%s910 + $0x20] sm:$0xff]
        %v916 = vld [vmem:[%s910 + $0x28] sm:$0xff]
        %v917 = vld [vmem:[%s910 + $0x30] sm:$0xff]
        %v918 = vld [vmem:[%s910 + $0x38] sm:$0xff]
        %v919 = vmul.f32 %v884, %v911
        %v920 = vmul.f32 %v883, %v912
        %v921 = vmul.f32 %v882, %v913
        %v922 = vmul.f32 %v881, %v914
        %v923 = vmul.f32 %v880, %v915
        %v924 = vmul.f32 %v879, %v916
        %v925 = vmul.f32 %v878, %v917
        %v926 = vmul.f32 %v877, %v918
        %v927 = vadd.f32 %v902, %v919
        %v928 = vadd.f32 %v903, %v920
        %v929 = vadd.f32 %v904, %v921
        %v930 = vadd.f32 %v905, %v922
        %v931 = vadd.f32 %v906, %v923
        %v932 = vadd.f32 %v907, %v924
        %v933 = vadd.f32 %v908, %v925
        %v934 = vadd.f32 %v909, %v926
        %s935 = scalar_lea.vmem %s3, 960
        %v936 = vld [vmem:[%s935] sm:$0xff]
        %v937 = vld [vmem:[%s935 + $0x8] sm:$0xff]
        %v938 = vld [vmem:[%s935 + $0x10] sm:$0xff]
        %v939 = vld [vmem:[%s935 + $0x18] sm:$0xff]
        %v940 = vld [vmem:[%s935 + $0x20] sm:$0xff]
        %v941 = vld [vmem:[%s935 + $0x28] sm:$0xff]
        %v942 = vld [vmem:[%s935 + $0x30] sm:$0xff]
        %v943 = vld [vmem:[%s935 + $0x38] sm:$0xff]
        %v944 = vmul.f32 %v882, %v936
        %v945 = vmul.f32 %v881, %v937
        %v946 = vmul.f32 %v880, %v938
        %v947 = vmul.f32 %v879, %v939
        %v948 = vmul.f32 %v878, %v940
        %v949 = vmul.f32 %v877, %v941
        %v950 = vmul.f32 %v884, %v942
        %v951 = vmul.f32 %v883, %v943
        %v952 = vadd.f32 %v927, %v944
        %v953 = vadd.f32 %v928, %v945
        %v954 = vadd.f32 %v929, %v946
        %v955 = vadd.f32 %v930, %v947
        %v956 = vadd.f32 %v931, %v948
        %v957 = vadd.f32 %v932, %v949
        %v958 = vadd.f32 %v933, %v950
        %v959 = vadd.f32 %v934, %v951
        %s960 = scalar_lea.vmem %s3, 640
        %v961 = vld [vmem:[%s960] sm:$0xff]
        %v962 = vld [vmem:[%s960 + $0x8] sm:$0xff]
        %v963 = vld [vmem:[%s960 + $0x10] sm:$0xff]
        %v964 = vld [vmem:[%s960 + $0x18] sm:$0xff]
        %v965 = vld [vmem:[%s960 + $0x20] sm:$0xff]
        %v966 = vld [vmem:[%s960 + $0x28] sm:$0xff]
        %v967 = vld [vmem:[%s960 + $0x30] sm:$0xff]
        %v968 = vld [vmem:[%s960 + $0x38] sm:$0xff]
        %v969 = vmul.f32 %v603, %v961
        %v970 = vmul.f32 %v604, %v962
        %v971 = vmul.f32 %v597, %v963
        %v972 = vmul.f32 %v598, %v964
        %v973 = vmul.f32 %v599, %v965
        %v974 = vmul.f32 %v600, %v966
        %v975 = vmul.f32 %v601, %v967
        %v976 = vmul.f32 %v602, %v968
        %v977 = vadd.f32 %v952, %v969
        %v978 = vadd.f32 %v953, %v970
        %v979 = vadd.f32 %v954, %v971
        %v980 = vadd.f32 %v955, %v972
        %v981 = vadd.f32 %v956, %v973
        %v982 = vadd.f32 %v957, %v974
        %v983 = vadd.f32 %v958, %v975
        %v984 = vadd.f32 %v959, %v976
        %s985 = scalar_lea.vmem %s3, 832
        %v986 = vld [vmem:[%s985] sm:$0xff]
        %v987 = vld [vmem:[%s985 + $0x8] sm:$0xff]
        %v988 = vld [vmem:[%s985 + $0x10] sm:$0xff]
        %v989 = vld [vmem:[%s985 + $0x18] sm:$0xff]
        %v990 = vld [vmem:[%s985 + $0x20] sm:$0xff]
        %v991 = vld [vmem:[%s985 + $0x28] sm:$0xff]
        %v992 = vld [vmem:[%s985 + $0x30] sm:$0xff]
        %v993 = vld [vmem:[%s985 + $0x38] sm:$0xff]
        %v994 = vmul.f32 %v597, %v986
        %v995 = vmul.f32 %v598, %v987
        %v996 = vmul.f32 %v599, %v988
        %v997 = vmul.f32 %v600, %v989
        %v998 = vmul.f32 %v601, %v990
        %v999 = vmul.f32 %v602, %v991
        %v1000 = vmul.f32 %v603, %v992
        %v1001 = vmul.f32 %v604, %v993
        %v1002 = vadd.f32 %v977, %v994
        %v1003 = vadd.f32 %v978, %v995
        %v1004 = vadd.f32 %v979, %v996
        %v1005 = vadd.f32 %v980, %v997
        %v1006 = vadd.f32 %v981, %v998
        %v1007 = vadd.f32 %v982, %v999
        %v1008 = vadd.f32 %v983, %v1000
        %v1009 = vadd.f32 %v984, %v1001
        %s1010 = scalar_lea.vmem %s3, 1024
        %v1011 = vld [vmem:[%s1010] sm:$0xff]
        %v1012 = vld [vmem:[%s1010 + $0x8] sm:$0xff]
        %v1013 = vld [vmem:[%s1010 + $0x10] sm:$0xff]
        %v1014 = vld [vmem:[%s1010 + $0x18] sm:$0xff]
        %v1015 = vld [vmem:[%s1010 + $0x20] sm:$0xff]
        %v1016 = vld [vmem:[%s1010 + $0x28] sm:$0xff]
        %v1017 = vld [vmem:[%s1010 + $0x30] sm:$0xff]
        %v1018 = vld [vmem:[%s1010 + $0x38] sm:$0xff]
        %v1019 = vmul.f32 %v599, %v1011
        %v1020 = vmul.f32 %v600, %v1012
        %v1021 = vmul.f32 %v601, %v1013
        %v1022 = vmul.f32 %v602, %v1014
        %v1023 = vmul.f32 %v603, %v1015
        %v1024 = vmul.f32 %v604, %v1016
        %v1025 = vmul.f32 %v597, %v1017
        %v1026 = vmul.f32 %v598, %v1018
        %v1027 = vadd.f32 %v1002, %v1019
        %v1028 = vadd.f32 %v1003, %v1020
        %v1029 = vadd.f32 %v1004, %v1021
        %v1030 = vadd.f32 %v1005, %v1022
        %v1031 = vadd.f32 %v1006, %v1023
        %v1032 = vadd.f32 %v1007, %v1024
        %v1033 = vadd.f32 %v1008, %v1025
        %v1034 = vadd.f32 %v1009, %v1026
        %v1035 = vrot.slane %v597, 2
        %v1036 = vrot.slane %v598, 2
        %v1037 = vrot.slane %v599, 2
        %v1038 = vrot.slane %v600, 2
        %v1039 = vrot.slane %v601, 2
        %v1040 = vrot.slane %v602, 2
        %v1041 = vrot.slane %v603, 2
        %v1042 = vrot.slane %v604, 2
        %vm1043 = vcmp.lt.s32.totalorder %v614, 6
        %v1044 = vsel %vm1043, %v1041, %v1042
        %v1045 = vsel %vm1043, %v1040, %v1041
        %v1046 = vsel %vm1043, %v1039, %v1040
        %v1047 = vsel %vm1043, %v1038, %v1039
        %v1048 = vsel %vm1043, %v1037, %v1038
        %v1049 = vsel %vm1043, %v1036, %v1037
        %v1050 = vsel %vm1043, %v1035, %v1036
        %v1051 = vsel %vm1043, %v1042, %v1035
        %s1052 = scalar_lea.vmem %s3, 704
        %v1053 = vld [vmem:[%s1052] sm:$0xff]
        %v1054 = vld [vmem:[%s1052 + $0x8] sm:$0xff]
        %v1055 = vld [vmem:[%s1052 + $0x10] sm:$0xff]
        %v1056 = vld [vmem:[%s1052 + $0x18] sm:$0xff]
        %v1057 = vld [vmem:[%s1052 + $0x20] sm:$0xff]
        %v1058 = vld [vmem:[%s1052 + $0x28] sm:$0xff]
        %v1059 = vld [vmem:[%s1052 + $0x30] sm:$0xff]
        %v1060 = vld [vmem:[%s1052 + $0x38] sm:$0xff]
        %v1061 = vmul.f32 %v1044, %v1053
        %v1062 = vmul.f32 %v1051, %v1054
        %v1063 = vmul.f32 %v1050, %v1055
        %v1064 = vmul.f32 %v1049, %v1056
        %v1065 = vmul.f32 %v1048, %v1057
        %v1066 = vmul.f32 %v1047, %v1058
        %v1067 = vmul.f32 %v1046, %v1059
        %v1068 = vmul.f32 %v1045, %v1060
        %v1069 = vadd.f32 %v1027, %v1061
        %v1070 = vadd.f32 %v1028, %v1062
        %v1071 = vadd.f32 %v1029, %v1063
        %v1072 = vadd.f32 %v1030, %v1064
        %v1073 = vadd.f32 %v1031, %v1065
        %v1074 = vadd.f32 %v1032, %v1066
        %v1075 = vadd.f32 %v1033, %v1067
        %v1076 = vadd.f32 %v1034, %v1068
        %s1077 = scalar_lea.vmem %s3, 896
        %v1078 = vld [vmem:[%s1077] sm:$0xff]
        %v1079 = vld [vmem:[%s1077 + $0x8] sm:$0xff]
        %v1080 = vld [vmem:[%s1077 + $0x10] sm:$0xff]
        %v1081 = vld [vmem:[%s1077 + $0x18] sm:$0xff]
        %v1082 = vld [vmem:[%s1077 + $0x20] sm:$0xff]
        %v1083 = vld [vmem:[%s1077 + $0x28] sm:$0xff]
        %v1084 = vld [vmem:[%s1077 + $0x30] sm:$0xff]
        %v1085 = vld [vmem:[%s1077 + $0x38] sm:$0xff]
        %v1086 = vmul.f32 %v1050, %v1078
        %v1087 = vmul.f32 %v1049, %v1079
        %v1088 = vmul.f32 %v1048, %v1080
        %v1089 = vmul.f32 %v1047, %v1081
        %v1090 = vmul.f32 %v1046, %v1082
        %v1091 = vmul.f32 %v1045, %v1083
        %v1092 = vmul.f32 %v1044, %v1084
        %v1093 = vmul.f32 %v1051, %v1085
        %v1094 = vadd.f32 %v1069, %v1086
        %v1095 = vadd.f32 %v1070, %v1087
        %v1096 = vadd.f32 %v1071, %v1088
        %v1097 = vadd.f32 %v1072, %v1089
        %v1098 = vadd.f32 %v1073, %v1090
        %v1099 = vadd.f32 %v1074, %v1091
        %v1100 = vadd.f32 %v1075, %v1092
        %v1101 = vadd.f32 %v1076, %v1093
        %s1102 = scalar_lea.vmem %s3, 1088
        %v1103 = vld [vmem:[%s1102] sm:$0xff]
        %v1104 = vld [vmem:[%s1102 + $0x8] sm:$0xff]
        %v1105 = vld [vmem:[%s1102 + $0x10] sm:$0xff]
        %v1106 = vld [vmem:[%s1102 + $0x18] sm:$0xff]
        %v1107 = vld [vmem:[%s1102 + $0x20] sm:$0xff]
        %v1108 = vld [vmem:[%s1102 + $0x28] sm:$0xff]
        %v1109 = vld [vmem:[%s1102 + $0x30] sm:$0xff]
        %v1110 = vld [vmem:[%s1102 + $0x38] sm:$0xff]
        %v1111 = vmul.f32 %v1048, %v1103
        %v1112 = vmul.f32 %v1047, %v1104
        %v1113 = vmul.f32 %v1046, %v1105
        %v1114 = vmul.f32 %v1045, %v1106
        %v1115 = vmul.f32 %v1044, %v1107
        %v1116 = vmul.f32 %v1051, %v1108
        %v1117 = vmul.f32 %v1050, %v1109
        %v1118 = vmul.f32 %v1049, %v1110
        %v1119 = vadd.f32 %v1094, %v1111
        %v1120 = vadd.f32 %v1095, %v1112
        %v1121 = vadd.f32 %v1096, %v1113
        %v1122 = vadd.f32 %v1097, %v1114
        %v1123 = vadd.f32 %v1098, %v1115
        %v1124 = vadd.f32 %v1099, %v1116
        %v1125 = vadd.f32 %v1100, %v1117
        %v1126 = vadd.f32 %v1101, %v1118
        %s1127 = scalar_lea.vmem %s4, 24
        %v1128 = vld [vmem:[%s1127] sm:$0xff]
        %v1129 = vld [vmem:[%s1127 + $0x8] sm:$0xff]
        %v1130 = vld [vmem:[%s1127 + $0x10] sm:$0xff]
        %v1132 = vsel %vm403, %v1119, 0
        %v1135 = vsel %vm403, %v1120, 0
        %v1138 = vsel %vm403, %v1121, 0
        %v1141 = vsel %vm403, %v1122, 0
        %v1144 = vsel %vm403, %v1123, 0
        %v1147 = vsel %vm403, %v1124, 0
        %v1150 = vsel %vm403, %v1125, 0
        %v1153 = vsel %vm403, %v1126, 0
        %1155 = vmatprep.subr.mxu0 0.0
        %1156 = vmatpush1.msra.mxu0 %v1128
        %1157 = vmatprep.subr.mxu0 0.0
        %1158 = vmatpush1.msra.mxu0 %v1129
        %1159 = vmatprep.subr.mxu0 0.0
        %1160 = vmatpush1.msra.mxu0 %v1130
        %1161 = vmatprep.subr.mxu0 0.0
        %1162 = vmatpush1.msra.mxu0 0.0
        %1163 = vmatprep.subr.mxu0 0.0
        %1164 = vmatpush1.msra.mxu0 0.0
        %1165 = vmatprep.subr.mxu0 0.0
        %1166 = vmatpush1.msra.mxu0 0.0
        %1167 = vmatprep.subr.mxu0 0.0
        %1168 = vmatpush1.msra.mxu0 0.0
        %1169 = vmatprep.subr.mxu0 0.0
        %1170 = vmatpush1.msra.mxu0 0.0
        %1171 = vmatprep.subr.mxu0 0.0
        %1172 = vmatpush1.msra.mxu0 0.0
        %1173 = vmatprep.subr.mxu0 0.0
        %1174 = vmatpush1.msra.mxu0 0.0
        %1175 = vmatprep.subr.mxu0 0.0
        %1176 = vmatpush1.msra.mxu0 0.0
        %1177 = vmatprep.subr.mxu0 0.0
        %1178 = vmatpush1.msra.mxu0 0.0
        %1179 = vmatprep.subr.mxu0 0.0
        %1180 = vmatpush1.msra.mxu0 0.0
        %1181 = vmatprep.subr.mxu0 0.0
        %1182 = vmatpush1.msra.mxu0 0.0
        %1183 = vmatprep.subr.mxu0 0.0
        %1184 = vmatpush1.msra.mxu0 0.0
        %1185 = vmatprep.subr.mxu0 0.0
        %1186 = vmatpush1.msra.mxu0 0.0
        %1187 = vmatprep.subr.mxu0 0.0
        %1188 = vmatpush1.msra.mxu0 0.0
        %1189 = vmatprep.subr.mxu0 0.0
        %1190 = vmatpush1.msra.mxu0 0.0
        %1191 = vmatprep.subr.mxu0 0.0
        %1192 = vmatpush1.msra.mxu0 0.0
        %1193 = vmatprep.subr.mxu0 0.0
        %1194 = vmatpush1.msra.mxu0 0.0
        %1195 = vmatprep.subr.mxu0 0.0
        %1196 = vmatpush1.msra.mxu0 0.0
        %1197 = vmatprep.subr.mxu0 0.0
        %1198 = vmatpush1.msra.mxu0 0.0
        %1199 = vmatprep.subr.mxu0 0.0
        %1200 = vmatpush1.msra.mxu0 0.0
        %1201 = vmatprep.subr.mxu0 0.0
        %1202 = vmatpush1.msra.mxu0 0.0
        %1203 = vmatprep.subr.mxu0 0.0
        %1204 = vmatpush1.msra.mxu0 0.0
        %1205 = vmatprep.subr.mxu0 0.0
        %1206 = vmatpush1.msra.mxu0 0.0
        %1207 = vmatprep.subr.mxu0 0.0
        %1208 = vmatpush1.msra.mxu0 0.0
        %1209 = vmatprep.subr.mxu0 0.0
        %1210 = vmatpush1.msra.mxu0 0.0
        %1211 = vmatprep.subr.mxu0 0.0
        %1212 = vmatpush1.msra.mxu0 0.0
        %1213 = vmatprep.subr.mxu0 0.0
        %1214 = vmatpush1.msra.mxu0 0.0
        %1215 = vmatprep.subr.mxu0 0.0
        %1216 = vmatpush1.msra.mxu0 0.0
        %1217 = vmatprep.subr.mxu0 0.0
        %1218 = vmatpush1.msra.mxu0 0.0
        %1219 = vmatprep.mubr.f32.mxu0 0.0
        %1220 = vmatmul.mubr.f32.gmra.mrb[0].mxu0 %v1132
        %v1221 = vpop.f32.mrb[0].mxu0
        %v1222 = vadd.f32 0.0, %v1221
        %v1223 = vpop.f32.mrb[0].mxu0
        %1224 = vmatprep.mubr.f32.mxu0 0.0
        %1225 = vmatmul.mubr.f32.gmra.mrb[0].mxu0 %v1135
        %v1226 = vpop.f32.mrb[0].mxu0
        %v1227 = vadd.f32 0.0, %v1226
        %v1228 = vpop.f32.mrb[0].mxu0
        %1229 = vmatprep.mubr.f32.mxu0 0.0
        %1230 = vmatmul.mubr.f32.gmra.mrb[0].mxu0 %v1138
        %v1231 = vpop.f32.mrb[0].mxu0
        %v1232 = vadd.f32 0.0, %v1231
        %v1233 = vpop.f32.mrb[0].mxu0
        %1234 = vmatprep.mubr.f32.mxu0 0.0
        %1235 = vmatmul.mubr.f32.gmra.mrb[0].mxu0 %v1141
        %v1236 = vpop.f32.mrb[0].mxu0
        %v1237 = vadd.f32 0.0, %v1236
        %v1238 = vpop.f32.mrb[0].mxu0
        %1239 = vmatprep.mubr.f32.mxu0 0.0
        %1240 = vmatmul.mubr.f32.gmra.mrb[0].mxu0 %v1144
        %v1241 = vpop.f32.mrb[0].mxu0
        %v1242 = vadd.f32 0.0, %v1241
        %v1243 = vpop.f32.mrb[0].mxu0
        %1244 = vmatprep.mubr.f32.mxu0 0.0
        %1245 = vmatmul.mubr.f32.gmra.mrb[0].mxu0 %v1147
        %v1246 = vpop.f32.mrb[0].mxu0
        %v1247 = vadd.f32 0.0, %v1246
        %v1248 = vpop.f32.mrb[0].mxu0
        %1249 = vmatprep.mubr.f32.mxu0 0.0
        %1250 = vmatmul.mubr.f32.gmra.mrb[0].mxu0 %v1150
        %v1251 = vpop.f32.mrb[0].mxu0
        %v1252 = vadd.f32 0.0, %v1251
        %v1253 = vpop.f32.mrb[0].mxu0
        %1254 = vmatprep.mubr.f32.mxu0 0.0
        %1255 = vmatmul.mubr.f32.gmra.mrb[0].mxu0 %v1153
        %v1256 = vpop.f32.mrb[0].mxu0
        %v1257 = vadd.f32 0.0, %v1256
        %v1258 = vpop.f32.mrb[0].mxu0
        %1259 = vdwg.mxu0
        %v1261 = vsel %vm403, %v857, 0
        %v1264 = vsel %vm403, %v858, 0
        %v1267 = vsel %vm403, %v859, 0
        %v1270 = vsel %vm403, %v860, 0
        %v1273 = vsel %vm403, %v861, 0
        %v1276 = vsel %vm403, %v862, 0
        %v1279 = vsel %vm403, %v863, 0
        %v1282 = vsel %vm403, %v864, 0
        %1284 = vmatprep.subr.mxu0 0.0
        %1285 = vmatpush1.msra.mxu0 %v865
        %1286 = vmatprep.subr.mxu0 0.0
        %1287 = vmatpush1.msra.mxu0 %v866
        %1288 = vmatprep.subr.mxu0 0.0
        %1289 = vmatpush1.msra.mxu0 %v867
        %1290 = vmatprep.subr.mxu0 0.0
        %1291 = vmatpush1.msra.mxu0 0.0
        %1292 = vmatprep.subr.mxu0 0.0
        %1293 = vmatpush1.msra.mxu0 0.0
        %1294 = vmatprep.subr.mxu0 0.0
        %1295 = vmatpush1.msra.mxu0 0.0
        %1296 = vmatprep.subr.mxu0 0.0
        %1297 = vmatpush1.msra.mxu0 0.0
        %1298 = vmatprep.subr.mxu0 0.0
        %1299 = vmatpush1.msra.mxu0 0.0
        %1300 = vmatprep.subr.mxu0 0.0
        %1301 = vmatpush1.msra.mxu0 0.0
        %1302 = vmatprep.subr.mxu0 0.0
        %1303 = vmatpush1.msra.mxu0 0.0
        %1304 = vmatprep.subr.mxu0 0.0
        %1305 = vmatpush1.msra.mxu0 0.0
        %1306 = vmatprep.subr.mxu0 0.0
        %1307 = vmatpush1.msra.mxu0 0.0
        %1308 = vmatprep.subr.mxu0 0.0
        %1309 = vmatpush1.msra.mxu0 0.0
        %1310 = vmatprep.subr.mxu0 0.0
        %1311 = vmatpush1.msra.mxu0 0.0
        %1312 = vmatprep.subr.mxu0 0.0
        %1313 = vmatpush1.msra.mxu0 0.0
        %1314 = vmatprep.subr.mxu0 0.0
        %1315 = vmatpush1.msra.mxu0 0.0
        %1316 = vmatprep.subr.mxu0 0.0
        %1317 = vmatpush1.msra.mxu0 0.0
        %1318 = vmatprep.subr.mxu0 0.0
        %1319 = vmatpush1.msra.mxu0 0.0
        %1320 = vmatprep.subr.mxu0 0.0
        %1321 = vmatpush1.msra.mxu0 0.0
        %1322 = vmatprep.subr.mxu0 0.0
        %1323 = vmatpush1.msra.mxu0 0.0
        %1324 = vmatprep.subr.mxu0 0.0
        %1325 = vmatpush1.msra.mxu0 0.0
        %1326 = vmatprep.subr.mxu0 0.0
        %1327 = vmatpush1.msra.mxu0 0.0
        %1328 = vmatprep.subr.mxu0 0.0
        %1329 = vmatpush1.msra.mxu0 0.0
        %1330 = vmatprep.subr.mxu0 0.0
        %1331 = vmatpush1.msra.mxu0 0.0
        %1332 = vmatprep.subr.mxu0 0.0
        %1333 = vmatpush1.msra.mxu0 0.0
        %1334 = vmatprep.subr.mxu0 0.0
        %1335 = vmatpush1.msra.mxu0 0.0
        %1336 = vmatprep.subr.mxu0 0.0
        %1337 = vmatpush1.msra.mxu0 0.0
        %1338 = vmatprep.subr.mxu0 0.0
        %1339 = vmatpush1.msra.mxu0 0.0
        %1340 = vmatprep.subr.mxu0 0.0
        %1341 = vmatpush1.msra.mxu0 0.0
        %1342 = vmatprep.subr.mxu0 0.0
        %1343 = vmatpush1.msra.mxu0 0.0
        %1344 = vmatprep.subr.mxu0 0.0
        %1345 = vmatpush1.msra.mxu0 0.0
        %1346 = vmatprep.subr.mxu0 0.0
        %1347 = vmatpush1.msra.mxu0 0.0
        %1348 = vmatprep.mubr.f32.mxu0 0.0
        %1349 = vmatmul.mubr.f32.gmra.mrb[0].mxu0 %v1261
        %v1350 = vpop.f32.mrb[0].mxu0
        %v1351 = vadd.f32 %v1222, %v1350
        %v1352 = vpop.f32.mrb[0].mxu0
        %1353 = vmatprep.mubr.f32.mxu0 0.0
        %1354 = vmatmul.mubr.f32.gmra.mrb[0].mxu0 %v1264
        %v1355 = vpop.f32.mrb[0].mxu0
        %v1356 = vadd.f32 %v1227, %v1355
        %v1357 = vpop.f32.mrb[0].mxu0
        %1358 = vmatprep.mubr.f32.mxu0 0.0
        %1359 = vmatmul.mubr.f32.gmra.mrb[0].mxu0 %v1267
        %v1360 = vpop.f32.mrb[0].mxu0
        %v1361 = vadd.f32 %v1232, %v1360
        %v1362 = vpop.f32.mrb[0].mxu0
        %1363 = vmatprep.mubr.f32.mxu0 0.0
        %1364 = vmatmul.mubr.f32.gmra.mrb[0].mxu0 %v1270
        %v1365 = vpop.f32.mrb[0].mxu0
        %v1366 = vadd.f32 %v1237, %v1365
        %v1367 = vpop.f32.mrb[0].mxu0
        %1368 = vmatprep.mubr.f32.mxu0 0.0
        %1369 = vmatmul.mubr.f32.gmra.mrb[0].mxu0 %v1273
        %v1370 = vpop.f32.mrb[0].mxu0
        %v1371 = vadd.f32 %v1242, %v1370
        %v1372 = vpop.f32.mrb[0].mxu0
        %1373 = vmatprep.mubr.f32.mxu0 0.0
        %1374 = vmatmul.mubr.f32.gmra.mrb[0].mxu0 %v1276
        %v1375 = vpop.f32.mrb[0].mxu0
        %v1376 = vadd.f32 %v1247, %v1375
        %v1377 = vpop.f32.mrb[0].mxu0
        %1378 = vmatprep.mubr.f32.mxu0 0.0
        %1379 = vmatmul.mubr.f32.gmra.mrb[0].mxu0 %v1279
        %v1380 = vpop.f32.mrb[0].mxu0
        %v1381 = vadd.f32 %v1252, %v1380
        %v1382 = vpop.f32.mrb[0].mxu0
        %1383 = vmatprep.mubr.f32.mxu0 0.0
        %1384 = vmatmul.mubr.f32.gmra.mrb[0].mxu0 %v1282
        %v1385 = vpop.f32.mrb[0].mxu0
        %v1386 = vadd.f32 %v1257, %v1385
        %v1387 = vpop.f32.mrb[0].mxu0
        %1388 = vdwg.mxu0
        %v1389 = vrot.slane %v597, 5
        %v1390 = vrot.slane %v598, 5
        %v1391 = vrot.slane %v599, 5
        %v1392 = vrot.slane %v600, 5
        %v1393 = vrot.slane %v601, 5
        %v1394 = vrot.slane %v602, 5
        %v1395 = vrot.slane %v603, 5
        %v1396 = vrot.slane %v604, 5
        %vm1397 = vcmp.lt.s32.totalorder %v614, 3
        %v1398 = vsel %vm1397, %v1395, %v1396
        %v1399 = vsel %vm1397, %v1394, %v1395
        %v1400 = vsel %vm1397, %v1393, %v1394
        %v1401 = vsel %vm1397, %v1392, %v1393
        %v1402 = vsel %vm1397, %v1391, %v1392
        %v1403 = vsel %vm1397, %v1390, %v1391
        %v1404 = vsel %vm1397, %v1389, %v1390
        %v1405 = vsel %vm1397, %v1396, %v1389
        %s1406 = scalar_lea.vmem %s3, 1152
        %v1407 = vld [vmem:[%s1406] sm:$0xff]
        %v1408 = vld [vmem:[%s1406 + $0x8] sm:$0xff]
        %v1409 = vld [vmem:[%s1406 + $0x10] sm:$0xff]
        %v1410 = vld [vmem:[%s1406 + $0x18] sm:$0xff]
        %v1411 = vld [vmem:[%s1406 + $0x20] sm:$0xff]
        %v1412 = vld [vmem:[%s1406 + $0x28] sm:$0xff]
        %v1413 = vld [vmem:[%s1406 + $0x30] sm:$0xff]
        %v1414 = vld [vmem:[%s1406 + $0x38] sm:$0xff]
        %v1415 = vmul.f32 %v1400, %v1407
        %v1416 = vmul.f32 %v1399, %v1408
        %v1417 = vmul.f32 %v1398, %v1409
        %v1418 = vmul.f32 %v1405, %v1410
        %v1419 = vmul.f32 %v1404, %v1411
        %v1420 = vmul.f32 %v1403, %v1412
        %v1421 = vmul.f32 %v1402, %v1413
        %v1422 = vmul.f32 %v1401, %v1414
        %v1423 = vadd.f32 %v1415, 0.0
        %v1424 = vadd.f32 %v1416, 0.0
        %v1425 = vadd.f32 %v1417, 0.0
        %v1426 = vadd.f32 %v1418, 0.0
        %v1427 = vadd.f32 %v1419, 0.0
        %v1428 = vadd.f32 %v1420, 0.0
        %v1429 = vadd.f32 %v1421, 0.0
        %v1430 = vadd.f32 %v1422, 0.0
        %s1431 = scalar_lea.vmem %s3, 1344
        %v1432 = vld [vmem:[%s1431] sm:$0xff]
        %v1433 = vld [vmem:[%s1431 + $0x8] sm:$0xff]
        %v1434 = vld [vmem:[%s1431 + $0x10] sm:$0xff]
        %v1435 = vld [vmem:[%s1431 + $0x18] sm:$0xff]
        %v1436 = vld [vmem:[%s1431 + $0x20] sm:$0xff]
        %v1437 = vld [vmem:[%s1431 + $0x28] sm:$0xff]
        %v1438 = vld [vmem:[%s1431 + $0x30] sm:$0xff]
        %v1439 = vld [vmem:[%s1431 + $0x38] sm:$0xff]
        %v1440 = vmul.f32 %v1405, %v1432
        %v1441 = vmul.f32 %v1404, %v1433
        %v1442 = vmul.f32 %v1403, %v1434
        %v1443 = vmul.f32 %v1402, %v1435
        %v1444 = vmul.f32 %v1401, %v1436
        %v1445 = vmul.f32 %v1400, %v1437
        %v1446 = vmul.f32 %v1399, %v1438
        %v1447 = vmul.f32 %v1398, %v1439
        %v1448 = vadd.f32 %v1423, %v1440
        %v1449 = vadd.f32 %v1424, %v1441
        %v1450 = vadd.f32 %v1425, %v1442
        %v1451 = vadd.f32 %v1426, %v1443
        %v1452 = vadd.f32 %v1427, %v1444
        %v1453 = vadd.f32 %v1428, %v1445
        %v1454 = vadd.f32 %v1429, %v1446
        %v1455 = vadd.f32 %v1430, %v1447
        %s1456 = scalar_lea.vmem %s3, 1536
        %v1457 = vld [vmem:[%s1456] sm:$0xff]
        %v1458 = vld [vmem:[%s1456 + $0x8] sm:$0xff]
        %v1459 = vld [vmem:[%s1456 + $0x10] sm:$0xff]
        %v1460 = vld [vmem:[%s1456 + $0x18] sm:$0xff]
        %v1461 = vld [vmem:[%s1456 + $0x20] sm:$0xff]
        %v1462 = vld [vmem:[%s1456 + $0x28] sm:$0xff]
        %v1463 = vld [vmem:[%s1456 + $0x30] sm:$0xff]
        %v1464 = vld [vmem:[%s1456 + $0x38] sm:$0xff]
        %v1465 = vmul.f32 %v1402, %v1457
        %v1466 = vmul.f32 %v1401, %v1458
        %v1467 = vmul.f32 %v1400, %v1459
        %v1468 = vmul.f32 %v1399, %v1460
        %v1469 = vmul.f32 %v1398, %v1461
        %v1470 = vmul.f32 %v1405, %v1462
        %v1471 = vmul.f32 %v1404, %v1463
        %v1472 = vmul.f32 %v1403, %v1464
        %v1473 = vadd.f32 %v1448, %v1465
        %v1474 = vadd.f32 %v1449, %v1466
        %v1475 = vadd.f32 %v1450, %v1467
        %v1476 = vadd.f32 %v1451, %v1468
        %v1477 = vadd.f32 %v1452, %v1469
        %v1478 = vadd.f32 %v1453, %v1470
        %v1479 = vadd.f32 %v1454, %v1471
        %v1480 = vadd.f32 %v1455, %v1472
        %s1481 = scalar_lea.vmem %s3, 1216
        %v1482 = vld [vmem:[%s1481] sm:$0xff]
        %v1483 = vld [vmem:[%s1481 + $0x8] sm:$0xff]
        %v1484 = vld [vmem:[%s1481 + $0x10] sm:$0xff]
        %v1485 = vld [vmem:[%s1481 + $0x18] sm:$0xff]
        %v1486 = vld [vmem:[%s1481 + $0x20] sm:$0xff]
        %v1487 = vld [vmem:[%s1481 + $0x28] sm:$0xff]
        %v1488 = vld [vmem:[%s1481 + $0x30] sm:$0xff]
        %v1489 = vld [vmem:[%s1481 + $0x38] sm:$0xff]
        %v1490 = vmul.f32 %v602, %v1482
        %v1491 = vmul.f32 %v603, %v1483
        %v1492 = vmul.f32 %v604, %v1484
        %v1493 = vmul.f32 %v597, %v1485
        %v1494 = vmul.f32 %v598, %v1486
        %v1495 = vmul.f32 %v599, %v1487
        %v1496 = vmul.f32 %v600, %v1488
        %v1497 = vmul.f32 %v601, %v1489
        %v1498 = vadd.f32 %v1473, %v1490
        %v1499 = vadd.f32 %v1474, %v1491
        %v1500 = vadd.f32 %v1475, %v1492
        %v1501 = vadd.f32 %v1476, %v1493
        %v1502 = vadd.f32 %v1477, %v1494
        %v1503 = vadd.f32 %v1478, %v1495
        %v1504 = vadd.f32 %v1479, %v1496
        %v1505 = vadd.f32 %v1480, %v1497
        %s1506 = scalar_lea.vmem %s3, 1408
        %v1507 = vld [vmem:[%s1506] sm:$0xff]
        %v1508 = vld [vmem:[%s1506 + $0x8] sm:$0xff]
        %v1509 = vld [vmem:[%s1506 + $0x10] sm:$0xff]
        %v1510 = vld [vmem:[%s1506 + $0x18] sm:$0xff]
        %v1511 = vld [vmem:[%s1506 + $0x20] sm:$0xff]
        %v1512 = vld [vmem:[%s1506 + $0x28] sm:$0xff]
        %v1513 = vld [vmem:[%s1506 + $0x30] sm:$0xff]
        %v1514 = vld [vmem:[%s1506 + $0x38] sm:$0xff]
        %v1515 = vmul.f32 %v597, %v1507
        %v1516 = vmul.f32 %v598, %v1508
        %v1517 = vmul.f32 %v599, %v1509
        %v1518 = vmul.f32 %v600, %v1510
        %v1519 = vmul.f32 %v601, %v1511
        %v1520 = vmul.f32 %v602, %v1512
        %v1521 = vmul.f32 %v603, %v1513
        %v1522 = vmul.f32 %v604, %v1514
        %v1523 = vadd.f32 %v1498, %v1515
        %v1524 = vadd.f32 %v1499, %v1516
        %v1525 = vadd.f32 %v1500, %v1517
        %v1526 = vadd.f32 %v1501, %v1518
        %v1527 = vadd.f32 %v1502, %v1519
        %v1528 = vadd.f32 %v1503, %v1520
        %v1529 = vadd.f32 %v1504, %v1521
        %v1530 = vadd.f32 %v1505, %v1522
        %s1531 = scalar_lea.vmem %s3, 1600
        %v1532 = vld [vmem:[%s1531] sm:$0xff]
        %v1533 = vld [vmem:[%s1531 + $0x8] sm:$0xff]
        %v1534 = vld [vmem:[%s1531 + $0x10] sm:$0xff]
        %v1535 = vld [vmem:[%s1531 + $0x18] sm:$0xff]
        %v1536 = vld [vmem:[%s1531 + $0x20] sm:$0xff]
        %v1537 = vld [vmem:[%s1531 + $0x28] sm:$0xff]
        %v1538 = vld [vmem:[%s1531 + $0x30] sm:$0xff]
        %v1539 = vld [vmem:[%s1531 + $0x38] sm:$0xff]
        %v1540 = vmul.f32 %v600, %v1532
        %v1541 = vmul.f32 %v601, %v1533
        %v1542 = vmul.f32 %v602, %v1534
        %v1543 = vmul.f32 %v603, %v1535
        %v1544 = vmul.f32 %v604, %v1536
        %v1545 = vmul.f32 %v597, %v1537
        %v1546 = vmul.f32 %v598, %v1538
        %v1547 = vmul.f32 %v599, %v1539
        %v1548 = vadd.f32 %v1523, %v1540
        %v1549 = vadd.f32 %v1524, %v1541
        %v1550 = vadd.f32 %v1525, %v1542
        %v1551 = vadd.f32 %v1526, %v1543
        %v1552 = vadd.f32 %v1527, %v1544
        %v1553 = vadd.f32 %v1528, %v1545
        %v1554 = vadd.f32 %v1529, %v1546
        %v1555 = vadd.f32 %v1530, %v1547
        %v1556 = vrot.slane %v597, 3
        %v1557 = vrot.slane %v598, 3
        %v1558 = vrot.slane %v599, 3
        %v1559 = vrot.slane %v600, 3
        %v1560 = vrot.slane %v601, 3
        %v1561 = vrot.slane %v602, 3
        %v1562 = vrot.slane %v603, 3
        %v1563 = vrot.slane %v604, 3
        %vm1564 = vcmp.lt.s32.totalorder %v614, 5
        %v1565 = vsel %vm1564, %v1562, %v1563
        %v1566 = vsel %vm1564, %v1561, %v1562
        %v1567 = vsel %vm1564, %v1560, %v1561
        %v1568 = vsel %vm1564, %v1559, %v1560
        %v1569 = vsel %vm1564, %v1558, %v1559
        %v1570 = vsel %vm1564, %v1557, %v1558
        %v1571 = vsel %vm1564, %v1556, %v1557
        %v1572 = vsel %vm1564, %v1563, %v1556
        %s1573 = scalar_lea.vmem %s3, 1280
        %v1574 = vld [vmem:[%s1573] sm:$0xff]
        %v1575 = vld [vmem:[%s1573 + $0x8] sm:$0xff]
        %v1576 = vld [vmem:[%s1573 + $0x10] sm:$0xff]
        %v1577 = vld [vmem:[%s1573 + $0x18] sm:$0xff]
        %v1578 = vld [vmem:[%s1573 + $0x20] sm:$0xff]
        %v1579 = vld [vmem:[%s1573 + $0x28] sm:$0xff]
        %v1580 = vld [vmem:[%s1573 + $0x30] sm:$0xff]
        %v1581 = vld [vmem:[%s1573 + $0x38] sm:$0xff]
        %v1582 = vmul.f32 %v1566, %v1574
        %v1583 = vmul.f32 %v1565, %v1575
        %v1584 = vmul.f32 %v1572, %v1576
        %v1585 = vmul.f32 %v1571, %v1577
        %v1586 = vmul.f32 %v1570, %v1578
        %v1587 = vmul.f32 %v1569, %v1579
        %v1588 = vmul.f32 %v1568, %v1580
        %v1589 = vmul.f32 %v1567, %v1581
        %v1590 = vadd.f32 %v1548, %v1582
        %v1591 = vadd.f32 %v1549, %v1583
        %v1592 = vadd.f32 %v1550, %v1584
        %v1593 = vadd.f32 %v1551, %v1585
        %v1594 = vadd.f32 %v1552, %v1586
        %v1595 = vadd.f32 %v1553, %v1587
        %v1596 = vadd.f32 %v1554, %v1588
        %v1597 = vadd.f32 %v1555, %v1589
        %s1598 = scalar_lea.vmem %s3, 1472
        %v1599 = vld [vmem:[%s1598] sm:$0xff]
        %v1600 = vld [vmem:[%s1598 + $0x8] sm:$0xff]
        %v1601 = vld [vmem:[%s1598 + $0x10] sm:$0xff]
        %v1602 = vld [vmem:[%s1598 + $0x18] sm:$0xff]
        %v1603 = vld [vmem:[%s1598 + $0x20] sm:$0xff]
        %v1604 = vld [vmem:[%s1598 + $0x28] sm:$0xff]
        %v1605 = vld [vmem:[%s1598 + $0x30] sm:$0xff]
        %v1606 = vld [vmem:[%s1598 + $0x38] sm:$0xff]
        %v1607 = vmul.f32 %v1571, %v1599
        %v1608 = vmul.f32 %v1570, %v1600
        %v1609 = vmul.f32 %v1569, %v1601
        %v1610 = vmul.f32 %v1568, %v1602
        %v1611 = vmul.f32 %v1567, %v1603
        %v1612 = vmul.f32 %v1566, %v1604
        %v1613 = vmul.f32 %v1565, %v1605
        %v1614 = vmul.f32 %v1572, %v1606
        %v1615 = vadd.f32 %v1590, %v1607
        %v1616 = vadd.f32 %v1591, %v1608
        %v1617 = vadd.f32 %v1592, %v1609
        %v1618 = vadd.f32 %v1593, %v1610
        %v1619 = vadd.f32 %v1594, %v1611
        %v1620 = vadd.f32 %v1595, %v1612
        %v1621 = vadd.f32 %v1596, %v1613
        %v1622 = vadd.f32 %v1597, %v1614
        %s1623 = scalar_lea.vmem %s3, 1664
        %v1624 = vld [vmem:[%s1623] sm:$0xff]
        %v1625 = vld [vmem:[%s1623 + $0x8] sm:$0xff]
        %v1626 = vld [vmem:[%s1623 + $0x10] sm:$0xff]
        %v1627 = vld [vmem:[%s1623 + $0x18] sm:$0xff]
        %v1628 = vld [vmem:[%s1623 + $0x20] sm:$0xff]
        %v1629 = vld [vmem:[%s1623 + $0x28] sm:$0xff]
        %v1630 = vld [vmem:[%s1623 + $0x30] sm:$0xff]
        %v1631 = vld [vmem:[%s1623 + $0x38] sm:$0xff]
        %v1632 = vmul.f32 %v1568, %v1624
        %v1633 = vmul.f32 %v1567, %v1625
        %v1634 = vmul.f32 %v1566, %v1626
        %v1635 = vmul.f32 %v1565, %v1627
        %v1636 = vmul.f32 %v1572, %v1628
        %v1637 = vmul.f32 %v1571, %v1629
        %v1638 = vmul.f32 %v1570, %v1630
        %v1639 = vmul.f32 %v1569, %v1631
        %v1640 = vadd.f32 %v1615, %v1632
        %v1641 = vadd.f32 %v1616, %v1633
        %v1642 = vadd.f32 %v1617, %v1634
        %v1643 = vadd.f32 %v1618, %v1635
        %v1644 = vadd.f32 %v1619, %v1636
        %v1645 = vadd.f32 %v1620, %v1637
        %v1646 = vadd.f32 %v1621, %v1638
        %v1647 = vadd.f32 %v1622, %v1639
        %s1648 = scalar_lea.vmem %s4, 48
        %v1649 = vld [vmem:[%s1648] sm:$0xff]
        %v1650 = vld [vmem:[%s1648 + $0x8] sm:$0xff]
        %v1651 = vld [vmem:[%s1648 + $0x10] sm:$0xff]
        %v1653 = vsel %vm403, %v1640, 0
        %v1656 = vsel %vm403, %v1641, 0
        %v1659 = vsel %vm403, %v1642, 0
        %v1662 = vsel %vm403, %v1643, 0
        %v1665 = vsel %vm403, %v1644, 0
        %v1668 = vsel %vm403, %v1645, 0
        %v1671 = vsel %vm403, %v1646, 0
        %v1674 = vsel %vm403, %v1647, 0
        %1676 = vmatprep.subr.mxu0 0.0
        %1677 = vmatpush1.msra.mxu0 %v1649
        %1678 = vmatprep.subr.mxu0 0.0
        %1679 = vmatpush1.msra.mxu0 %v1650
        %1680 = vmatprep.subr.mxu0 0.0
        %1681 = vmatpush1.msra.mxu0 %v1651
        %1682 = vmatprep.subr.mxu0 0.0
        %1683 = vmatpush1.msra.mxu0 0.0
        %1684 = vmatprep.subr.mxu0 0.0
        %1685 = vmatpush1.msra.mxu0 0.0
        %1686 = vmatprep.subr.mxu0 0.0
        %1687 = vmatpush1.msra.mxu0 0.0
        %1688 = vmatprep.subr.mxu0 0.0
        %1689 = vmatpush1.msra.mxu0 0.0
        %1690 = vmatprep.subr.mxu0 0.0
        %1691 = vmatpush1.msra.mxu0 0.0
        %1692 = vmatprep.subr.mxu0 0.0
        %1693 = vmatpush1.msra.mxu0 0.0
        %1694 = vmatprep.subr.mxu0 0.0
        %1695 = vmatpush1.msra.mxu0 0.0
        %1696 = vmatprep.subr.mxu0 0.0
        %1697 = vmatpush1.msra.mxu0 0.0
        %1698 = vmatprep.subr.mxu0 0.0
        %1699 = vmatpush1.msra.mxu0 0.0
        %1700 = vmatprep.subr.mxu0 0.0
        %1701 = vmatpush1.msra.mxu0 0.0
        %1702 = vmatprep.subr.mxu0 0.0
        %1703 = vmatpush1.msra.mxu0 0.0
        %1704 = vmatprep.subr.mxu0 0.0
        %1705 = vmatpush1.msra.mxu0 0.0
        %1706 = vmatprep.subr.mxu0 0.0
        %1707 = vmatpush1.msra.mxu0 0.0
        %1708 = vmatprep.subr.mxu0 0.0
        %1709 = vmatpush1.msra.mxu0 0.0
        %1710 = vmatprep.subr.mxu0 0.0
        %1711 = vmatpush1.msra.mxu0 0.0
        %1712 = vmatprep.subr.mxu0 0.0
        %1713 = vmatpush1.msra.mxu0 0.0
        %1714 = vmatprep.subr.mxu0 0.0
        %1715 = vmatpush1.msra.mxu0 0.0
        %1716 = vmatprep.subr.mxu0 0.0
        %1717 = vmatpush1.msra.mxu0 0.0
        %1718 = vmatprep.subr.mxu0 0.0
        %1719 = vmatpush1.msra.mxu0 0.0
        %1720 = vmatprep.subr.mxu0 0.0
        %1721 = vmatpush1.msra.mxu0 0.0
        %1722 = vmatprep.subr.mxu0 0.0
        %1723 = vmatpush1.msra.mxu0 0.0
        %1724 = vmatprep.subr.mxu0 0.0
        %1725 = vmatpush1.msra.mxu0 0.0
        %1726 = vmatprep.subr.mxu0 0.0
        %1727 = vmatpush1.msra.mxu0 0.0
        %1728 = vmatprep.subr.mxu0 0.0
        %1729 = vmatpush1.msra.mxu0 0.0
        %1730 = vmatprep.subr.mxu0 0.0
        %1731 = vmatpush1.msra.mxu0 0.0
        %1732 = vmatprep.subr.mxu0 0.0
        %1733 = vmatpush1.msra.mxu0 0.0
        %1734 = vmatprep.subr.mxu0 0.0
        %1735 = vmatpush1.msra.mxu0 0.0
        %1736 = vmatprep.subr.mxu0 0.0
        %1737 = vmatpush1.msra.mxu0 0.0
        %1738 = vmatprep.subr.mxu0 0.0
        %1739 = vmatpush1.msra.mxu0 0.0
        %1740 = vmatprep.mubr.f32.mxu0 0.0
        %1741 = vmatmul.mubr.f32.gmra.mrb[0].mxu0 %v1653
        %v1742 = vpop.f32.mrb[0].mxu0
        %v1743 = vadd.f32 0.0, %v1742
        %v1744 = vpop.f32.mrb[0].mxu0
        %1745 = vmatprep.mubr.f32.mxu0 0.0
        %1746 = vmatmul.mubr.f32.gmra.mrb[0].mxu0 %v1656
        %v1747 = vpop.f32.mrb[0].mxu0
        %v1748 = vadd.f32 0.0, %v1747
        %v1749 = vpop.f32.mrb[0].mxu0
        %1750 = vmatprep.mubr.f32.mxu0 0.0
        %1751 = vmatmul.mubr.f32.gmra.mrb[0].mxu0 %v1659
        %v1752 = vpop.f32.mrb[0].mxu0
        %v1753 = vadd.f32 0.0, %v1752
        %v1754 = vpop.f32.mrb[0].mxu0
        %1755 = vmatprep.mubr.f32.mxu0 0.0
        %1756 = vmatmul.mubr.f32.gmra.mrb[0].mxu0 %v1662
        %v1757 = vpop.f32.mrb[0].mxu0
        %v1758 = vadd.f32 0.0, %v1757
        %v1759 = vpop.f32.mrb[0].mxu0
        %1760 = vmatprep.mubr.f32.mxu0 0.0
        %1761 = vmatmul.mubr.f32.gmra.mrb[0].mxu0 %v1665
        %v1762 = vpop.f32.mrb[0].mxu0
        %v1763 = vadd.f32 0.0, %v1762
        %v1764 = vpop.f32.mrb[0].mxu0
        %1765 = vmatprep.mubr.f32.mxu0 0.0
        %1766 = vmatmul.mubr.f32.gmra.mrb[0].mxu0 %v1668
        %v1767 = vpop.f32.mrb[0].mxu0
        %v1768 = vadd.f32 0.0, %v1767
        %v1769 = vpop.f32.mrb[0].mxu0
        %1770 = vmatprep.mubr.f32.mxu0 0.0
        %1771 = vmatmul.mubr.f32.gmra.mrb[0].mxu0 %v1671
        %v1772 = vpop.f32.mrb[0].mxu0
        %v1773 = vadd.f32 0.0, %v1772
        %v1774 = vpop.f32.mrb[0].mxu0
        %1775 = vmatprep.mubr.f32.mxu0 0.0
        %1776 = vmatmul.mubr.f32.gmra.mrb[0].mxu0 %v1674
        %v1777 = vpop.f32.mrb[0].mxu0
        %v1778 = vadd.f32 0.0, %v1777
        %v1779 = vpop.f32.mrb[0].mxu0
        %1780 = vdwg.mxu0
        %v1781 = vadd.f32 %v1351, %v1743
        %v1782 = vadd.f32 %v1356, %v1748
        %v1783 = vadd.f32 %v1361, %v1753
        %v1784 = vadd.f32 %v1366, %v1758
        %v1785 = vadd.f32 %v1371, %v1763
        %v1786 = vadd.f32 %v1376, %v1768
        %v1787 = vadd.f32 %v1381, %v1773
        %v1788 = vadd.f32 %v1386, %v1778
        %v1789 = vld [vmem:[%s5] sm:$0x1]
        %v1791 = vlaneseq
        %v1792 = vshrl.u32 %v1791, 7
        %v1793 = vsub.s32 0, %v1792
        %v1794 = vrot.slane %v1789, %v1793
        %v1796 = vadd.f32 %v1781, %v1794
        %v1797 = vadd.f32 %v1782, %v1794
        %v1798 = vadd.f32 %v1783, %v1794
        %v1799 = vadd.f32 %v1784, %v1794
        %v1800 = vadd.f32 %v1785, %v1794
        %v1801 = vadd.f32 %v1786, %v1794
        %v1802 = vadd.f32 %v1787, %v1794
        %v1803 = vadd.f32 %v1788, %v1794
        %vm1804 = vcmp.ge.f32.partialorder %v1796, 0.0
        %vm1805 = vcmp.ge.f32.partialorder %v1797, 0.0
        %vm1806 = vcmp.ge.f32.partialorder %v1798, 0.0
        %vm1807 = vcmp.ge.f32.partialorder %v1799, 0.0
        %vm1808 = vcmp.ge.f32.partialorder %v1800, 0.0
        %vm1809 = vcmp.ge.f32.partialorder %v1801, 0.0
        %vm1810 = vcmp.ge.f32.partialorder %v1802, 0.0
        %vm1811 = vcmp.ge.f32.partialorder %v1803, 0.0
        %v1812 = vmul.f32 %v1796, 0.01
        %v1813 = vmul.f32 %v1797, 0.01
        %v1814 = vmul.f32 %v1798, 0.01
        %v1815 = vmul.f32 %v1799, 0.01
        %v1816 = vmul.f32 %v1800, 0.01
        %v1817 = vmul.f32 %v1801, 0.01
        %v1818 = vmul.f32 %v1802, 0.01
        %v1819 = vmul.f32 %v1803, 0.01
        %v1820 = vsel %vm1804, %v1796, %v1812
        %v1821 = vsel %vm1805, %v1797, %v1813
        %v1822 = vsel %vm1806, %v1798, %v1814
        %v1823 = vsel %vm1807, %v1799, %v1815
        %v1824 = vsel %vm1808, %v1800, %v1816
        %v1825 = vsel %vm1809, %v1801, %v1817
        %v1826 = vsel %vm1810, %v1802, %v1818
        %v1827 = vsel %vm1811, %v1803, %v1819
        %v1828 = vlaneseq
        %v1829 = vand.u32 %v1828, 127
        %vm1830 = vcmp.lt.s32.totalorder %v1829, 8
        %v1831 = vmul.f32 %v1820, 0.5
        %v1832 = vmul.f32 %v1821, 0.5
        %v1833 = vmul.f32 %v1822, 0.5
        %v1834 = vmul.f32 %v1823, 0.5
        %v1835 = vmul.f32 %v1824, 0.5
        %v1836 = vmul.f32 %v1825, 0.5
        %v1837 = vmul.f32 %v1826, 0.5
        %v1838 = vmul.f32 %v1827, 0.5
        %v1839 = vmul.f32 %v1820, 0.044715
        %v1840 = vmul.f32 %v1821, 0.044715
        %v1841 = vmul.f32 %v1822, 0.044715
        %v1842 = vmul.f32 %v1823, 0.044715
        %v1843 = vmul.f32 %v1824, 0.044715
        %v1844 = vmul.f32 %v1825, 0.044715
        %v1845 = vmul.f32 %v1826, 0.044715
        %v1846 = vmul.f32 %v1827, 0.044715
        %v1847 = vmul.f32 %v1839, %v1820
        %v1848 = vmul.f32 %v1840, %v1821
        %v1849 = vmul.f32 %v1841, %v1822
        %v1850 = vmul.f32 %v1842, %v1823
        %v1851 = vmul.f32 %v1843, %v1824
        %v1852 = vmul.f32 %v1844, %v1825
        %v1853 = vmul.f32 %v1845, %v1826
        %v1854 = vmul.f32 %v1846, %v1827
        %v1855 = vmul.f32 %v1847, %v1820
        %v1856 = vmul.f32 %v1848, %v1821
        %v1857 = vmul.f32 %v1849, %v1822
        %v1858 = vmul.f32 %v1850, %v1823
        %v1859 = vmul.f32 %v1851, %v1824
        %v1860 = vmul.f32 %v1852, %v1825
        %v1861 = vmul.f32 %v1853, %v1826
        %v1862 = vmul.f32 %v1854, %v1827
        %v1863 = vadd.f32 %v1820, %v1855
        %v1864 = vadd.f32 %v1821, %v1856
        %v1865 = vadd.f32 %v1822, %v1857
        %v1866 = vadd.f32 %v1823, %v1858
        %v1867 = vadd.f32 %v1824, %v1859
        %v1868 = vadd.f32 %v1825, %v1860
        %v1869 = vadd.f32 %v1826, %v1861
        %v1870 = vadd.f32 %v1827, %v1862
        %v1871 = vmul.f32 %v1863, 0.7978846
        %v1872 = vmul.f32 %v1864, 0.7978846
        %v1873 = vmul.f32 %v1865, 0.7978846
        %v1874 = vmul.f32 %v1866, 0.7978846
        %v1875 = vmul.f32 %v1867, 0.7978846
        %v1876 = vmul.f32 %v1868, 0.7978846
        %v1877 = vmul.f32 %v1869, 0.7978846
        %v1878 = vmul.f32 %v1870, 0.7978846
        %v1879 = vtanh.pop %v1871
        %v1880 = vtanh.pop %v1872
        %v1881 = vtanh.pop %v1873
        %v1882 = vtanh.pop %v1874
        %v1883 = vtanh.pop %v1875
        %v1884 = vtanh.pop %v1876
        %v1885 = vtanh.pop %v1877
        %v1886 = vtanh.pop %v1878
        %v1887 = vadd.f32 %v1879, 1.0
        %v1888 = vadd.f32 %v1880, 1.0
        %v1889 = vadd.f32 %v1881, 1.0
        %v1890 = vadd.f32 %v1882, 1.0
        %v1891 = vadd.f32 %v1883, 1.0
        %v1892 = vadd.f32 %v1884, 1.0
        %v1893 = vadd.f32 %v1885, 1.0
        %v1894 = vadd.f32 %v1886, 1.0
        %v1895 = vmul.f32 %v1831, %v1887
        %v1896 = vmul.f32 %v1832, %v1888
        %v1897 = vmul.f32 %v1833, %v1889
        %v1898 = vmul.f32 %v1834, %v1890
        %v1899 = vmul.f32 %v1835, %v1891
        %v1900 = vmul.f32 %v1836, %v1892
        %v1901 = vmul.f32 %v1837, %v1893
        %v1902 = vmul.f32 %v1838, %v1894
        %v1903 = vsel %vm1830, %v1895, %v1820
        %v1904 = vsel %vm1830, %v1896, %v1821
        %v1905 = vsel %vm1830, %v1897, %v1822
        %v1906 = vsel %vm1830, %v1898, %v1823
        %v1907 = vsel %vm1830, %v1899, %v1824
        %v1908 = vsel %vm1830, %v1900, %v1825
        %v1909 = vsel %vm1830, %v1901, %v1826
        %v1910 = vsel %vm1830, %v1902, %v1827
        %v1911 = vld [vmem:[%s6] sm:$0xff]
        %v1912 = vld [vmem:[%s6 + $0x8] sm:$0xff]
        %v1913 = vld [vmem:[%s6 + $0x10] sm:$0xff]
        %v1915 = vsel %vm403, %v1903, 0
        %v1918 = vsel %vm403, %v1904, 0
        %v1921 = vsel %vm403, %v1905, 0
        %v1924 = vsel %vm403, %v1906, 0
        %v1927 = vsel %vm403, %v1907, 0
        %v1930 = vsel %vm403, %v1908, 0
        %v1933 = vsel %vm403, %v1909, 0
        %v1936 = vsel %vm403, %v1910, 0
        %1938 = vmatprep.subr.mxu0 0.0
        %1939 = vmatpush1.msra.mxu0 %v1911
        %1940 = vmatprep.subr.mxu0 0.0
        %1941 = vmatpush1.msra.mxu0 %v1912
        %1942 = vmatprep.subr.mxu0 0.0
        %1943 = vmatpush1.msra.mxu0 %v1913
        %1944 = vmatprep.subr.mxu0 0.0
        %1945 = vmatpush1.msra.mxu0 0.0
        %1946 = vmatprep.subr.mxu0 0.0
        %1947 = vmatpush1.msra.mxu0 0.0
        %1948 = vmatprep.subr.mxu0 0.0
        %1949 = vmatpush1.msra.mxu0 0.0
        %1950 = vmatprep.subr.mxu0 0.0
        %1951 = vmatpush1.msra.mxu0 0.0
        %1952 = vmatprep.subr.mxu0 0.0
        %1953 = vmatpush1.msra.mxu0 0.0
        %1954 = vmatprep.subr.mxu0 0.0
        %1955 = vmatpush1.msra.mxu0 0.0
        %1956 = vmatprep.subr.mxu0 0.0
        %1957 = vmatpush1.msra.mxu0 0.0
        %1958 = vmatprep.subr.mxu0 0.0
        %1959 = vmatpush1.msra.mxu0 0.0
        %1960 = vmatprep.subr.mxu0 0.0
        %1961 = vmatpush1.msra.mxu0 0.0
        %1962 = vmatprep.subr.mxu0 0.0
        %1963 = vmatpush1.msra.mxu0 0.0
        %1964 = vmatprep.subr.mxu0 0.0
        %1965 = vmatpush1.msra.mxu0 0.0
        %1966 = vmatprep.subr.mxu0 0.0
        %1967 = vmatpush1.msra.mxu0 0.0
        %1968 = vmatprep.subr.mxu0 0.0
        %1969 = vmatpush1.msra.mxu0 0.0
        %1970 = vmatprep.subr.mxu0 0.0
        %1971 = vmatpush1.msra.mxu0 0.0
        %1972 = vmatprep.subr.mxu0 0.0
        %1973 = vmatpush1.msra.mxu0 0.0
        %1974 = vmatprep.subr.mxu0 0.0
        %1975 = vmatpush1.msra.mxu0 0.0
        %1976 = vmatprep.subr.mxu0 0.0
        %1977 = vmatpush1.msra.mxu0 0.0
        %1978 = vmatprep.subr.mxu0 0.0
        %1979 = vmatpush1.msra.mxu0 0.0
        %1980 = vmatprep.subr.mxu0 0.0
        %1981 = vmatpush1.msra.mxu0 0.0
        %1982 = vmatprep.subr.mxu0 0.0
        %1983 = vmatpush1.msra.mxu0 0.0
        %1984 = vmatprep.subr.mxu0 0.0
        %1985 = vmatpush1.msra.mxu0 0.0
        %1986 = vmatprep.subr.mxu0 0.0
        %1987 = vmatpush1.msra.mxu0 0.0
        %1988 = vmatprep.subr.mxu0 0.0
        %1989 = vmatpush1.msra.mxu0 0.0
        %1990 = vmatprep.subr.mxu0 0.0
        %1991 = vmatpush1.msra.mxu0 0.0
        %1992 = vmatprep.subr.mxu0 0.0
        %1993 = vmatpush1.msra.mxu0 0.0
        %1994 = vmatprep.subr.mxu0 0.0
        %1995 = vmatpush1.msra.mxu0 0.0
        %1996 = vmatprep.subr.mxu0 0.0
        %1997 = vmatpush1.msra.mxu0 0.0
        %1998 = vmatprep.subr.mxu0 0.0
        %1999 = vmatpush1.msra.mxu0 0.0
        %2000 = vmatprep.subr.mxu0 0.0
        %2001 = vmatpush1.msra.mxu0 0.0
        %2002 = vmatprep.mubr.f32.mxu0 0.0
        %2003 = vmatmul.mubr.f32.gmra.mrb[0].mxu0 %v1915
        %v2004 = vpop.f32.mrb[0].mxu0
        %v2005 = vadd.f32 0.0, %v2004
        %v2006 = vpop.f32.mrb[0].mxu0
        %2007 = vmatprep.mubr.f32.mxu0 0.0
        %2008 = vmatmul.mubr.f32.gmra.mrb[0].mxu0 %v1918
        %v2009 = vpop.f32.mrb[0].mxu0
        %v2010 = vadd.f32 0.0, %v2009
        %v2011 = vpop.f32.mrb[0].mxu0
        %2012 = vmatprep.mubr.f32.mxu0 0.0
        %2013 = vmatmul.mubr.f32.gmra.mrb[0].mxu0 %v1921
        %v2014 = vpop.f32.mrb[0].mxu0
        %v2015 = vadd.f32 0.0, %v2014
        %v2016 = vpop.f32.mrb[0].mxu0
        %2017 = vmatprep.mubr.f32.mxu0 0.0
        %2018 = vmatmul.mubr.f32.gmra.mrb[0].mxu0 %v1924
        %v2019 = vpop.f32.mrb[0].mxu0
        %v2020 = vadd.f32 0.0, %v2019
        %v2021 = vpop.f32.mrb[0].mxu0
        %2022 = vmatprep.mubr.f32.mxu0 0.0
        %2023 = vmatmul.mubr.f32.gmra.mrb[0].mxu0 %v1927
        %v2024 = vpop.f32.mrb[0].mxu0
        %v2025 = vadd.f32 0.0, %v2024
        %v2026 = vpop.f32.mrb[0].mxu0
        %2027 = vmatprep.mubr.f32.mxu0 0.0
        %2028 = vmatmul.mubr.f32.gmra.mrb[0].mxu0 %v1930
        %v2029 = vpop.f32.mrb[0].mxu0
        %v2030 = vadd.f32 0.0, %v2029
        %v2031 = vpop.f32.mrb[0].mxu0
        %2032 = vmatprep.mubr.f32.mxu0 0.0
        %2033 = vmatmul.mubr.f32.gmra.mrb[0].mxu0 %v1933
        %v2034 = vpop.f32.mrb[0].mxu0
        %v2035 = vadd.f32 0.0, %v2034
        %v2036 = vpop.f32.mrb[0].mxu0
        %2037 = vmatprep.mubr.f32.mxu0 0.0
        %2038 = vmatmul.mubr.f32.gmra.mrb[0].mxu0 %v1936
        %v2039 = vpop.f32.mrb[0].mxu0
        %v2040 = vadd.f32 0.0, %v2039
        %v2041 = vpop.f32.mrb[0].mxu0
        %2042 = vdwg.mxu0
        %v2043 = vsub.f32 %v1820, %v2005
        %v2044 = vsub.f32 %v1821, %v2010
        %v2045 = vsub.f32 %v1822, %v2015
        %v2046 = vsub.f32 %v1823, %v2020
        %v2047 = vsub.f32 %v1824, %v2025
        %v2048 = vsub.f32 %v1825, %v2030
        %v2049 = vsub.f32 %v1826, %v2035
        %v2050 = vsub.f32 %v1827, %v2040
        %v2051 = vmul.f32 %v2043, 0.5
        %v2052 = vmul.f32 %v2044, 0.5
        %v2053 = vmul.f32 %v2045, 0.5
        %v2054 = vmul.f32 %v2046, 0.5
        %v2055 = vmul.f32 %v2047, 0.5
        %v2056 = vmul.f32 %v2048, 0.5
        %v2057 = vmul.f32 %v2049, 0.5
        %v2058 = vmul.f32 %v2050, 0.5
        %v2059 = vmul.f32 %v2043, 0.044715
        %v2060 = vmul.f32 %v2044, 0.044715
        %v2061 = vmul.f32 %v2045, 0.044715
        %v2062 = vmul.f32 %v2046, 0.044715
        %v2063 = vmul.f32 %v2047, 0.044715
        %v2064 = vmul.f32 %v2048, 0.044715
        %v2065 = vmul.f32 %v2049, 0.044715
        %v2066 = vmul.f32 %v2050, 0.044715
        %v2067 = vmul.f32 %v2059, %v2043
        %v2068 = vmul.f32 %v2060, %v2044
        %v2069 = vmul.f32 %v2061, %v2045
        %v2070 = vmul.f32 %v2062, %v2046
        %v2071 = vmul.f32 %v2063, %v2047
        %v2072 = vmul.f32 %v2064, %v2048
        %v2073 = vmul.f32 %v2065, %v2049
        %v2074 = vmul.f32 %v2066, %v2050
        %v2075 = vmul.f32 %v2067, %v2043
        %v2076 = vmul.f32 %v2068, %v2044
        %v2077 = vmul.f32 %v2069, %v2045
        %v2078 = vmul.f32 %v2070, %v2046
        %v2079 = vmul.f32 %v2071, %v2047
        %v2080 = vmul.f32 %v2072, %v2048
        %v2081 = vmul.f32 %v2073, %v2049
        %v2082 = vmul.f32 %v2074, %v2050
        %v2083 = vadd.f32 %v2043, %v2075
        %v2084 = vadd.f32 %v2044, %v2076
        %v2085 = vadd.f32 %v2045, %v2077
        %v2086 = vadd.f32 %v2046, %v2078
        %v2087 = vadd.f32 %v2047, %v2079
        %v2088 = vadd.f32 %v2048, %v2080
        %v2089 = vadd.f32 %v2049, %v2081
        %v2090 = vadd.f32 %v2050, %v2082
        %v2091 = vmul.f32 %v2083, 0.7978846
        %v2092 = vmul.f32 %v2084, 0.7978846
        %v2093 = vmul.f32 %v2085, 0.7978846
        %v2094 = vmul.f32 %v2086, 0.7978846
        %v2095 = vmul.f32 %v2087, 0.7978846
        %v2096 = vmul.f32 %v2088, 0.7978846
        %v2097 = vmul.f32 %v2089, 0.7978846
        %v2098 = vmul.f32 %v2090, 0.7978846
        %v2099 = vtanh.pop %v2091
        %v2100 = vtanh.pop %v2092
        %v2101 = vtanh.pop %v2093
        %v2102 = vtanh.pop %v2094
        %v2103 = vtanh.pop %v2095
        %v2104 = vtanh.pop %v2096
        %v2105 = vtanh.pop %v2097
        %v2106 = vtanh.pop %v2098
        %v2107 = vadd.f32 %v2099, 1.0
        %v2108 = vadd.f32 %v2100, 1.0
        %v2109 = vadd.f32 %v2101, 1.0
        %v2110 = vadd.f32 %v2102, 1.0
        %v2111 = vadd.f32 %v2103, 1.0
        %v2112 = vadd.f32 %v2104, 1.0
        %v2113 = vadd.f32 %v2105, 1.0
        %v2114 = vadd.f32 %v2106, 1.0
        %v2115 = vmul.f32 %v2051, %v2107
        %v2116 = vmul.f32 %v2052, %v2108
        %v2117 = vmul.f32 %v2053, %v2109
        %v2118 = vmul.f32 %v2054, %v2110
        %v2119 = vmul.f32 %v2055, %v2111
        %v2120 = vmul.f32 %v2056, %v2112
        %v2121 = vmul.f32 %v2057, %v2113
        %v2122 = vmul.f32 %v2058, %v2114
        %v2123 = vrot.slane %v2115, 7
        %v2124 = vrot.slane %v2116, 7
        %v2125 = vrot.slane %v2117, 7
        %v2126 = vrot.slane %v2118, 7
        %v2127 = vrot.slane %v2119, 7
        %v2128 = vrot.slane %v2120, 7
        %v2129 = vrot.slane %v2121, 7
        %v2130 = vrot.slane %v2122, 7
        %v2131 = vsel %vm615, %v2129, %v2130
        %v2132 = vsel %vm615, %v2128, %v2129
        %v2133 = vsel %vm615, %v2127, %v2128
        %v2134 = vsel %vm615, %v2126, %v2127
        %v2135 = vsel %vm615, %v2125, %v2126
        %v2136 = vsel %vm615, %v2124, %v2125
        %v2137 = vsel %vm615, %v2123, %v2124
        %v2138 = vsel %vm615, %v2130, %v2123
        %v2139 = vld [vmem:[%s7] sm:$0xff]
        %v2140 = vld [vmem:[%s7 + $0x8] sm:$0xff]
        %v2141 = vld [vmem:[%s7 + $0x10] sm:$0xff]
        %v2142 = vld [vmem:[%s7 + $0x18] sm:$0xff]
        %v2143 = vld [vmem:[%s7 + $0x20] sm:$0xff]
        %v2144 = vld [vmem:[%s7 + $0x28] sm:$0xff]
        %v2145 = vld [vmem:[%s7 + $0x30] sm:$0xff]
        %v2146 = vld [vmem:[%s7 + $0x38] sm:$0xff]
        %v2147 = vmul.f32 %v2131, %v2139
        %v2148 = vmul.f32 %v2138, %v2140
        %v2149 = vmul.f32 %v2137, %v2141
        %v2150 = vmul.f32 %v2136, %v2142
        %v2151 = vmul.f32 %v2135, %v2143
        %v2152 = vmul.f32 %v2134, %v2144
        %v2153 = vmul.f32 %v2133, %v2145
        %v2154 = vmul.f32 %v2132, %v2146
        %v2155 = vadd.f32 %v2147, 0.0
        %v2156 = vadd.f32 %v2148, 0.0
        %v2157 = vadd.f32 %v2149, 0.0
        %v2158 = vadd.f32 %v2150, 0.0
        %v2159 = vadd.f32 %v2151, 0.0
        %v2160 = vadd.f32 %v2152, 0.0
        %v2161 = vadd.f32 %v2153, 0.0
        %v2162 = vadd.f32 %v2154, 0.0
        %s2163 = scalar_lea.vmem %s7, 192
        %v2164 = vld [vmem:[%s2163] sm:$0xff]
        %v2165 = vld [vmem:[%s2163 + $0x8] sm:$0xff]
        %v2166 = vld [vmem:[%s2163 + $0x10] sm:$0xff]
        %v2167 = vld [vmem:[%s2163 + $0x18] sm:$0xff]
        %v2168 = vld [vmem:[%s2163 + $0x20] sm:$0xff]
        %v2169 = vld [vmem:[%s2163 + $0x28] sm:$0xff]
        %v2170 = vld [vmem:[%s2163 + $0x30] sm:$0xff]
        %v2171 = vld [vmem:[%s2163 + $0x38] sm:$0xff]
        %v2172 = vmul.f32 %v2138, %v2164
        %v2173 = vmul.f32 %v2137, %v2165
        %v2174 = vmul.f32 %v2136, %v2166
        %v2175 = vmul.f32 %v2135, %v2167
        %v2176 = vmul.f32 %v2134, %v2168
        %v2177 = vmul.f32 %v2133, %v2169
        %v2178 = vmul.f32 %v2132, %v2170
        %v2179 = vmul.f32 %v2131, %v2171
        %v2180 = vadd.f32 %v2155, %v2172
        %v2181 = vadd.f32 %v2156, %v2173
        %v2182 = vadd.f32 %v2157, %v2174
        %v2183 = vadd.f32 %v2158, %v2175
        %v2184 = vadd.f32 %v2159, %v2176
        %v2185 = vadd.f32 %v2160, %v2177
        %v2186 = vadd.f32 %v2161, %v2178
        %v2187 = vadd.f32 %v2162, %v2179
        %s2188 = scalar_lea.vmem %s7, 384
        %v2189 = vld [vmem:[%s2188] sm:$0xff]
        %v2190 = vld [vmem:[%s2188 + $0x8] sm:$0xff]
        %v2191 = vld [vmem:[%s2188 + $0x10] sm:$0xff]
        %v2192 = vld [vmem:[%s2188 + $0x18] sm:$0xff]
        %v2193 = vld [vmem:[%s2188 + $0x20] sm:$0xff]
        %v2194 = vld [vmem:[%s2188 + $0x28] sm:$0xff]
        %v2195 = vld [vmem:[%s2188 + $0x30] sm:$0xff]
        %v2196 = vld [vmem:[%s2188 + $0x38] sm:$0xff]
        %v2197 = vmul.f32 %v2137, %v2189
        %v2198 = vmul.f32 %v2136, %v2190
        %v2199 = vmul.f32 %v2135, %v2191
        %v2200 = vmul.f32 %v2134, %v2192
        %v2201 = vmul.f32 %v2133, %v2193
        %v2202 = vmul.f32 %v2132, %v2194
        %v2203 = vmul.f32 %v2131, %v2195
        %v2204 = vmul.f32 %v2138, %v2196
        %v2205 = vadd.f32 %v2180, %v2197
        %v2206 = vadd.f32 %v2181, %v2198
        %v2207 = vadd.f32 %v2182, %v2199
        %v2208 = vadd.f32 %v2183, %v2200
        %v2209 = vadd.f32 %v2184, %v2201
        %v2210 = vadd.f32 %v2185, %v2202
        %v2211 = vadd.f32 %v2186, %v2203
        %v2212 = vadd.f32 %v2187, %v2204
        %s2213 = scalar_lea.vmem %s7, 64
        %v2214 = vld [vmem:[%s2213] sm:$0xff]
        %v2215 = vld [vmem:[%s2213 + $0x8] sm:$0xff]
        %v2216 = vld [vmem:[%s2213 + $0x10] sm:$0xff]
        %v2217 = vld [vmem:[%s2213 + $0x18] sm:$0xff]
        %v2218 = vld [vmem:[%s2213 + $0x20] sm:$0xff]
        %v2219 = vld [vmem:[%s2213 + $0x28] sm:$0xff]
        %v2220 = vld [vmem:[%s2213 + $0x30] sm:$0xff]
        %v2221 = vld [vmem:[%s2213 + $0x38] sm:$0xff]
        %v2222 = vmul.f32 %v2122, %v2214
        %v2223 = vmul.f32 %v2115, %v2215
        %v2224 = vmul.f32 %v2116, %v2216
        %v2225 = vmul.f32 %v2117, %v2217
        %v2226 = vmul.f32 %v2118, %v2218
        %v2227 = vmul.f32 %v2119, %v2219
        %v2228 = vmul.f32 %v2120, %v2220
        %v2229 = vmul.f32 %v2121, %v2221
        %v2230 = vadd.f32 %v2205, %v2222
        %v2231 = vadd.f32 %v2206, %v2223
        %v2232 = vadd.f32 %v2207, %v2224
        %v2233 = vadd.f32 %v2208, %v2225
        %v2234 = vadd.f32 %v2209, %v2226
        %v2235 = vadd.f32 %v2210, %v2227
        %v2236 = vadd.f32 %v2211, %v2228
        %v2237 = vadd.f32 %v2212, %v2229
        %s2238 = scalar_lea.vmem %s7, 256
        %v2239 = vld [vmem:[%s2238] sm:$0xff]
        %v2240 = vld [vmem:[%s2238 + $0x8] sm:$0xff]
        %v2241 = vld [vmem:[%s2238 + $0x10] sm:$0xff]
        %v2242 = vld [vmem:[%s2238 + $0x18] sm:$0xff]
        %v2243 = vld [vmem:[%s2238 + $0x20] sm:$0xff]
        %v2244 = vld [vmem:[%s2238 + $0x28] sm:$0xff]
        %v2245 = vld [vmem:[%s2238 + $0x30] sm:$0xff]
        %v2246 = vld [vmem:[%s2238 + $0x38] sm:$0xff]
        %v2247 = vmul.f32 %v2115, %v2239
        %v2248 = vmul.f32 %v2116, %v2240
        %v2249 = vmul.f32 %v2117, %v2241
        %v2250 = vmul.f32 %v2118, %v2242
        %v2251 = vmul.f32 %v2119, %v2243
        %v2252 = vmul.f32 %v2120, %v2244
        %v2253 = vmul.f32 %v2121, %v2245
        %v2254 = vmul.f32 %v2122, %v2246
        %v2255 = vadd.f32 %v2230, %v2247
        %v2256 = vadd.f32 %v2231, %v2248
        %v2257 = vadd.f32 %v2232, %v2249
        %v2258 = vadd.f32 %v2233, %v2250
        %v2259 = vadd.f32 %v2234, %v2251
        %v2260 = vadd.f32 %v2235, %v2252
        %v2261 = vadd.f32 %v2236, %v2253
        %v2262 = vadd.f32 %v2237, %v2254
        %s2263 = scalar_lea.vmem %s7, 448
        %v2264 = vld [vmem:[%s2263] sm:$0xff]
        %v2265 = vld [vmem:[%s2263 + $0x8] sm:$0xff]
        %v2266 = vld [vmem:[%s2263 + $0x10] sm:$0xff]
        %v2267 = vld [vmem:[%s2263 + $0x18] sm:$0xff]
        %v2268 = vld [vmem:[%s2263 + $0x20] sm:$0xff]
        %v2269 = vld [vmem:[%s2263 + $0x28] sm:$0xff]
        %v2270 = vld [vmem:[%s2263 + $0x30] sm:$0xff]
        %v2271 = vld [vmem:[%s2263 + $0x38] sm:$0xff]
        %v2272 = vmul.f32 %v2116, %v2264
        %v2273 = vmul.f32 %v2117, %v2265
        %v2274 = vmul.f32 %v2118, %v2266
        %v2275 = vmul.f32 %v2119, %v2267
        %v2276 = vmul.f32 %v2120, %v2268
        %v2277 = vmul.f32 %v2121, %v2269
        %v2278 = vmul.f32 %v2122, %v2270
        %v2279 = vmul.f32 %v2115, %v2271
        %v2280 = vadd.f32 %v2255, %v2272
        %v2281 = vadd.f32 %v2256, %v2273
        %v2282 = vadd.f32 %v2257, %v2274
        %v2283 = vadd.f32 %v2258, %v2275
        %v2284 = vadd.f32 %v2259, %v2276
        %v2285 = vadd.f32 %v2260, %v2277
        %v2286 = vadd.f32 %v2261, %v2278
        %v2287 = vadd.f32 %v2262, %v2279
        %v2288 = vrot.slane %v2115, 1
        %v2289 = vrot.slane %v2116, 1
        %v2290 = vrot.slane %v2117, 1
        %v2291 = vrot.slane %v2118, 1
        %v2292 = vrot.slane %v2119, 1
        %v2293 = vrot.slane %v2120, 1
        %v2294 = vrot.slane %v2121, 1
        %v2295 = vrot.slane %v2122, 1
        %v2296 = vsel %vm781, %v2294, %v2295
        %v2297 = vsel %vm781, %v2293, %v2294
        %v2298 = vsel %vm781, %v2292, %v2293
        %v2299 = vsel %vm781, %v2291, %v2292
        %v2300 = vsel %vm781, %v2290, %v2291
        %v2301 = vsel %vm781, %v2289, %v2290
        %v2302 = vsel %vm781, %v2288, %v2289
        %v2303 = vsel %vm781, %v2295, %v2288
        %s2304 = scalar_lea.vmem %s7, 128
        %v2305 = vld [vmem:[%s2304] sm:$0xff]
        %v2306 = vld [vmem:[%s2304 + $0x8] sm:$0xff]
        %v2307 = vld [vmem:[%s2304 + $0x10] sm:$0xff]
        %v2308 = vld [vmem:[%s2304 + $0x18] sm:$0xff]
        %v2309 = vld [vmem:[%s2304 + $0x20] sm:$0xff]
        %v2310 = vld [vmem:[%s2304 + $0x28] sm:$0xff]
        %v2311 = vld [vmem:[%s2304 + $0x30] sm:$0xff]
        %v2312 = vld [vmem:[%s2304 + $0x38] sm:$0xff]
        %v2313 = vmul.f32 %v2303, %v2305
        %v2314 = vmul.f32 %v2302, %v2306
        %v2315 = vmul.f32 %v2301, %v2307
        %v2316 = vmul.f32 %v2300, %v2308
        %v2317 = vmul.f32 %v2299, %v2309
        %v2318 = vmul.f32 %v2298, %v2310
        %v2319 = vmul.f32 %v2297, %v2311
        %v2320 = vmul.f32 %v2296, %v2312
        %v2321 = vadd.f32 %v2280, %v2313
        %v2322 = vadd.f32 %v2281, %v2314
        %v2323 = vadd.f32 %v2282, %v2315
        %v2324 = vadd.f32 %v2283, %v2316
        %v2325 = vadd.f32 %v2284, %v2317
        %v2326 = vadd.f32 %v2285, %v2318
        %v2327 = vadd.f32 %v2286, %v2319
        %v2328 = vadd.f32 %v2287, %v2320
        %s2329 = scalar_lea.vmem %s7, 320
        %v2330 = vld [vmem:[%s2329] sm:$0xff]
        %v2331 = vld [vmem:[%s2329 + $0x8] sm:$0xff]
        %v2332 = vld [vmem:[%s2329 + $0x10] sm:$0xff]
        %v2333 = vld [vmem:[%s2329 + $0x18] sm:$0xff]
        %v2334 = vld [vmem:[%s2329 + $0x20] sm:$0xff]
        %v2335 = vld [vmem:[%s2329 + $0x28] sm:$0xff]
        %v2336 = vld [vmem:[%s2329 + $0x30] sm:$0xff]
        %v2337 = vld [vmem:[%s2329 + $0x38] sm:$0xff]
        %v2338 = vmul.f32 %v2302, %v2330
        %v2339 = vmul.f32 %v2301, %v2331
        %v2340 = vmul.f32 %v2300, %v2332
        %v2341 = vmul.f32 %v2299, %v2333
        %v2342 = vmul.f32 %v2298, %v2334
        %v2343 = vmul.f32 %v2297, %v2335
        %v2344 = vmul.f32 %v2296, %v2336
        %v2345 = vmul.f32 %v2303, %v2337
        %v2346 = vadd.f32 %v2321, %v2338
        %v2347 = vadd.f32 %v2322, %v2339
        %v2348 = vadd.f32 %v2323, %v2340
        %v2349 = vadd.f32 %v2324, %v2341
        %v2350 = vadd.f32 %v2325, %v2342
        %v2351 = vadd.f32 %v2326, %v2343
        %v2352 = vadd.f32 %v2327, %v2344
        %v2353 = vadd.f32 %v2328, %v2345
        %s2354 = scalar_lea.vmem %s7, 512
        %v2355 = vld [vmem:[%s2354] sm:$0xff]
        %v2356 = vld [vmem:[%s2354 + $0x8] sm:$0xff]
        %v2357 = vld [vmem:[%s2354 + $0x10] sm:$0xff]
        %v2358 = vld [vmem:[%s2354 + $0x18] sm:$0xff]
        %v2359 = vld [vmem:[%s2354 + $0x20] sm:$0xff]
        %v2360 = vld [vmem:[%s2354 + $0x28] sm:$0xff]
        %v2361 = vld [vmem:[%s2354 + $0x30] sm:$0xff]
        %v2362 = vld [vmem:[%s2354 + $0x38] sm:$0xff]
        %v2363 = vmul.f32 %v2301, %v2355
        %v2364 = vmul.f32 %v2300, %v2356
        %v2365 = vmul.f32 %v2299, %v2357
        %v2366 = vmul.f32 %v2298, %v2358
        %v2367 = vmul.f32 %v2297, %v2359
        %v2368 = vmul.f32 %v2296, %v2360
        %v2369 = vmul.f32 %v2303, %v2361
        %v2370 = vmul.f32 %v2302, %v2362
        %v2371 = vadd.f32 %v2346, %v2363
        %v2372 = vadd.f32 %v2347, %v2364
        %v2373 = vadd.f32 %v2348, %v2365
        %v2374 = vadd.f32 %v2349, %v2366
        %v2375 = vadd.f32 %v2350, %v2367
        %v2376 = vadd.f32 %v2351, %v2368
        %v2377 = vadd.f32 %v2352, %v2369
        %v2378 = vadd.f32 %v2353, %v2370
        %v2379 = vld [vmem:[%s8] sm:$0x1]
        %v2381 = vlaneseq
        %v2382 = vshrl.u32 %v2381, 7
        %v2383 = vsub.s32 0, %v2382
        %v2384 = vrot.slane %v2379, %v2383
        %v2386 = vadd.f32 %v2371, %v2384
        %v2387 = vadd.f32 %v2372, %v2384
        %v2388 = vadd.f32 %v2373, %v2384
        %v2389 = vadd.f32 %v2374, %v2384
        %v2390 = vadd.f32 %v2375, %v2384
        %v2391 = vadd.f32 %v2376, %v2384
        %v2392 = vadd.f32 %v2377, %v2384
        %v2393 = vadd.f32 %v2378, %v2384
        %vm2394 = vcmp.ge.f32.partialorder %v2386, 0.0
        %vm2395 = vcmp.ge.f32.partialorder %v2387, 0.0
        %vm2396 = vcmp.ge.f32.partialorder %v2388, 0.0
        %vm2397 = vcmp.ge.f32.partialorder %v2389, 0.0
        %vm2398 = vcmp.ge.f32.partialorder %v2390, 0.0
        %vm2399 = vcmp.ge.f32.partialorder %v2391, 0.0
        %vm2400 = vcmp.ge.f32.partialorder %v2392, 0.0
        %vm2401 = vcmp.ge.f32.partialorder %v2393, 0.0
        %v2402 = vmul.f32 %v2386, 0.01
        %v2403 = vmul.f32 %v2387, 0.01
        %v2404 = vmul.f32 %v2388, 0.01
        %v2405 = vmul.f32 %v2389, 0.01
        %v2406 = vmul.f32 %v2390, 0.01
        %v2407 = vmul.f32 %v2391, 0.01
        %v2408 = vmul.f32 %v2392, 0.01
        %v2409 = vmul.f32 %v2393, 0.01
        %v2410 = vsel %vm2394, %v2386, %v2402
        %v2411 = vsel %vm2395, %v2387, %v2403
        %v2412 = vsel %vm2396, %v2388, %v2404
        %v2413 = vsel %vm2397, %v2389, %v2405
        %v2414 = vsel %vm2398, %v2390, %v2406
        %v2415 = vsel %vm2399, %v2391, %v2407
        %v2416 = vsel %vm2400, %v2392, %v2408
        %v2417 = vsel %vm2401, %v2393, %v2409
        %v2418 = vadd.f32 %v2410, %v597
        %v2419 = vadd.f32 %v2411, %v598
        %v2420 = vadd.f32 %v2412, %v599
        %v2421 = vadd.f32 %v2413, %v600
        %v2422 = vadd.f32 %v2414, %v601
        %v2423 = vadd.f32 %v2415, %v602
        %v2424 = vadd.f32 %v2416, %v603
        %v2425 = vadd.f32 %v2417, %v604
        %v2426 = vld [vmem:[%s9] sm:$0xff]
        %v2427 = vld [vmem:[%s9 + $0x8] sm:$0xff]
        %v2428 = vld [vmem:[%s9 + $0x10] sm:$0xff]
        %v2429 = vld [vmem:[%s10] sm:$0x1]
        %v2431 = vlaneseq
        %v2432 = vshrl.u32 %v2431, 7
        %v2433 = vsub.s32 0, %v2432
        %v2434 = vrot.slane %v2429, %v2433
        %v2437 = vsel %vm403, %v2418, 0
        %v2440 = vsel %vm403, %v2419, 0
        %v2443 = vsel %vm403, %v2420, 0
        %v2446 = vsel %vm403, %v2421, 0
        %v2449 = vsel %vm403, %v2422, 0
        %v2452 = vsel %vm403, %v2423, 0
        %v2455 = vsel %vm403, %v2424, 0
        %v2458 = vsel %vm403, %v2425, 0
        %2460 = vmatprep.subr.mxu0 0.0
        %2461 = vmatpush1.msra.mxu0 %v2426
        %2462 = vmatprep.subr.mxu0 0.0
        %2463 = vmatpush1.msra.mxu0 %v2427
        %2464 = vmatprep.subr.mxu0 0.0
        %2465 = vmatpush1.msra.mxu0 %v2428
        %2466 = vmatprep.subr.mxu0 0.0
        %2467 = vmatpush1.msra.mxu0 0.0
        %2468 = vmatprep.subr.mxu0 0.0
        %2469 = vmatpush1.msra.mxu0 0.0
        %2470 = vmatprep.subr.mxu0 0.0
        %2471 = vmatpush1.msra.mxu0 0.0
        %2472 = vmatprep.subr.mxu0 0.0
        %2473 = vmatpush1.msra.mxu0 0.0
        %2474 = vmatprep.subr.mxu0 0.0
        %2475 = vmatpush1.msra.mxu0 0.0
        %2476 = vmatprep.subr.mxu0 0.0
        %2477 = vmatpush1.msra.mxu0 0.0
        %2478 = vmatprep.subr.mxu0 0.0
        %2479 = vmatpush1.msra.mxu0 0.0
        %2480 = vmatprep.subr.mxu0 0.0
        %2481 = vmatpush1.msra.mxu0 0.0
        %2482 = vmatprep.subr.mxu0 0.0
        %2483 = vmatpush1.msra.mxu0 0.0
        %2484 = vmatprep.subr.mxu0 0.0
        %2485 = vmatpush1.msra.mxu0 0.0
        %2486 = vmatprep.subr.mxu0 0.0
        %2487 = vmatpush1.msra.mxu0 0.0
        %2488 = vmatprep.subr.mxu0 0.0
        %2489 = vmatpush1.msra.mxu0 0.0
        %2490 = vmatprep.subr.mxu0 0.0
        %2491 = vmatpush1.msra.mxu0 0.0
        %2492 = vmatprep.subr.mxu0 0.0
        %2493 = vmatpush1.msra.mxu0 0.0
        %2494 = vmatprep.subr.mxu0 0.0
        %2495 = vmatpush1.msra.mxu0 0.0
        %2496 = vmatprep.subr.mxu0 0.0
        %2497 = vmatpush1.msra.mxu0 0.0
        %2498 = vmatprep.subr.mxu0 0.0
        %2499 = vmatpush1.msra.mxu0 0.0
        %2500 = vmatprep.subr.mxu0 0.0
        %2501 = vmatpush1.msra.mxu0 0.0
        %2502 = vmatprep.subr.mxu0 0.0
        %2503 = vmatpush1.msra.mxu0 0.0
        %2504 = vmatprep.subr.mxu0 0.0
        %2505 = vmatpush1.msra.mxu0 0.0
        %2506 = vmatprep.subr.mxu0 0.0
        %2507 = vmatpush1.msra.mxu0 0.0
        %2508 = vmatprep.subr.mxu0 0.0
        %2509 = vmatpush1.msra.mxu0 0.0
        %2510 = vmatprep.subr.mxu0 0.0
        %2511 = vmatpush1.msra.mxu0 0.0
        %2512 = vmatprep.subr.mxu0 0.0
        %2513 = vmatpush1.msra.mxu0 0.0
        %2514 = vmatprep.subr.mxu0 0.0
        %2515 = vmatpush1.msra.mxu0 0.0
        %2516 = vmatprep.subr.mxu0 0.0
        %2517 = vmatpush1.msra.mxu0 0.0
        %2518 = vmatprep.subr.mxu0 0.0
        %2519 = vmatpush1.msra.mxu0 0.0
        %2520 = vmatprep.subr.mxu0 0.0
        %2521 = vmatpush1.msra.mxu0 0.0
        %2522 = vmatprep.subr.mxu0 0.0
        %2523 = vmatpush1.msra.mxu0 0.0
        %2524 = vmatprep.mubr.f32.mxu0 0.0
        %2525 = vmatmul.mubr.f32.gmra.mrb[0].mxu0 %v2437
        %v2526 = vpop.f32.mrb[0].mxu0
        %v2527 = vadd.f32 %v2434, %v2526
        %v2528 = vpop.f32.mrb[0].mxu0
        %2529 = vmatprep.mubr.f32.mxu0 0.0
        %2530 = vmatmul.mubr.f32.gmra.mrb[0].mxu0 %v2440
        %v2531 = vpop.f32.mrb[0].mxu0
        %v2532 = vadd.f32 %v2434, %v2531
        %v2533 = vpop.f32.mrb[0].mxu0
        %2534 = vmatprep.mubr.f32.mxu0 0.0
        %2535 = vmatmul.mubr.f32.gmra.mrb[0].mxu0 %v2443
        %v2536 = vpop.f32.mrb[0].mxu0
        %v2537 = vadd.f32 %v2434, %v2536
        %v2538 = vpop.f32.mrb[0].mxu0
        %2539 = vmatprep.mubr.f32.mxu0 0.0
        %2540 = vmatmul.mubr.f32.gmra.mrb[0].mxu0 %v2446
        %v2541 = vpop.f32.mrb[0].mxu0
        %v2542 = vadd.f32 %v2434, %v2541
        %v2543 = vpop.f32.mrb[0].mxu0
        %2544 = vmatprep.mubr.f32.mxu0 0.0
        %2545 = vmatmul.mubr.f32.gmra.mrb[0].mxu0 %v2449
        %v2546 = vpop.f32.mrb[0].mxu0
        %v2547 = vadd.f32 %v2434, %v2546
        %v2548 = vpop.f32.mrb[0].mxu0
        %2549 = vmatprep.mubr.f32.mxu0 0.0
        %2550 = vmatmul.mubr.f32.gmra.mrb[0].mxu0 %v2452
        %v2551 = vpop.f32.mrb[0].mxu0
        %v2552 = vadd.f32 %v2434, %v2551
        %v2553 = vpop.f32.mrb[0].mxu0
        %2554 = vmatprep.mubr.f32.mxu0 0.0
        %2555 = vmatmul.mubr.f32.gmra.mrb[0].mxu0 %v2455
        %v2556 = vpop.f32.mrb[0].mxu0
        %v2557 = vadd.f32 %v2434, %v2556
        %v2558 = vpop.f32.mrb[0].mxu0
        %2559 = vmatprep.mubr.f32.mxu0 0.0
        %2560 = vmatmul.mubr.f32.gmra.mrb[0].mxu0 %v2458
        %v2561 = vpop.f32.mrb[0].mxu0
        %v2562 = vadd.f32 %v2434, %v2561
        %v2563 = vpop.f32.mrb[0].mxu0
        %2564 = vdwg.mxu0
        %2565 = vst [vmem:[%s379] sm:$0xff] %v2527
        %2566 = vst [vmem:[%s379 + $0x8] sm:$0xff] %v2532
        %2567 = vst [vmem:[%s379 + $0x10] sm:$0xff] %v2537
        %2568 = vst [vmem:[%s379 + $0x18] sm:$0xff] %v2542
        %2569 = vst [vmem:[%s379 + $0x20] sm:$0xff] %v2547
        %2570 = vst [vmem:[%s379 + $0x28] sm:$0xff] %v2552
        %2571 = vst [vmem:[%s379 + $0x30] sm:$0xff] %v2557
        %2572 = vst [vmem:[%s379 + $0x38] sm:$0xff] %v2562
        %s2573 = sand.u32 %s269, 1
        %s2574 = scalar_lea.sflag [#allocation3], %s2573
        %s2575 = sand.u32 %s269, 1
        %s2576 = smul.addr %s2575, 64
        %s2577 = scalar_lea.vmem [#allocation2], %s2576
        // Predicated region
        $region65: #{tpu_custom_call.1} parent=63 // pred_check
          %p2578 = pneg %p279
        $region66: #{tpu_custom_call.1} parent=63 // pred_check_branch
          %2580 = sbr.rel (%p2578) target = $region68
        $region67: #{tpu_custom_call.1} parent=63 // pred_region
          %s2582 = ssub.s32 1024, 1024
          %2583 = vsyncadd %s2574, %s2582
          %s2584 = smul.addr %s25, 8
          %s2585 = smul.addr %s2584, 128
          %s2586 = scalar_lea.hbm %s11, %s2585
          %s2587 = sshll.u32 %s2577, 4
          %s2588 = int_to_ptr.vmem [resolvable:$true] %s2587
          %2593 = dma.vmem_to_hbm [thread:$0]  %s2588, 1024, %s2586, %s2574, 128, 128, 8
        $region68: #{tpu_custom_call.1} parent=63 // pred_fallthru
          _
      $region64: #{tpu_custom_call.1} parent=5 // pred_fallthru
        _
      %p2594 = scmp.le.s32.totalorder 2, %s20
      // Predicated region
      $region69: #{tpu_custom_call.1} parent=5 // pred_check
        %p2595 = pneg %p2594
      $region70: #{tpu_custom_call.1} parent=5 // pred_check_branch
        %2597 = sbr.rel (%p2595) target = $region72
      $region71: #{tpu_custom_call.1} parent=5 // pred_region
        %s2598 = ssub.s32 %s20, 2
        // Predicated region
        $region73: #{tpu_custom_call.1} parent=71 // pred_check
          %p2599 = pneg %p285
        $region74: #{tpu_custom_call.1} parent=71 // pred_check_branch
          %2601 = sbr.rel (%p2599) target = $region76
        $region75: #{tpu_custom_call.1} parent=71 // pred_region
          %s2602 = sand.u32 %s270, 1
          %s2603 = scalar_lea.sflag [#allocation3], %s2602
          %s2604 = sand.u32 %s270, 1
          %s2605 = smul.addr %s2604, 64
          %s2606 = scalar_lea.vmem [#allocation2], %s2605
          %2607 = dma.done %s2603, 1024
        $region76: #{tpu_custom_call.1} parent=71 // pred_fallthru
          _
      $region72: #{tpu_custom_call.1} parent=5 // pred_fallthru
        _
    $region6: #{tpu_custom_call.1} parent=1 // loop_footer
      %s24 = sadd.s32 1, %s20
    $region7: #{tpu_custom_call.1} parent=1 // loop_footer_branch
      %19 = sbr.rel target = $region3
    $region8: #{tpu_custom_call.1} parent=1 // loop_exit
      _
    %2608 = vsyncpa [#allocation3], 1
    %s2609 = scalar_lea.sflag [#allocation3], 1
    %2610 = vsyncpa %s2609, 1

</llo_original>
